<compile_context>
chip_gen: v5e
topology: v5e:2x2
jax: 0.10.0
libtpu: 0.0.40
codegen_flags: <defaults>
</compile_context>

<pallas_src>
import jax
import jax.numpy as jnp
from jax import lax
from jax.experimental import pallas as pl
from jax.experimental.pallas import tpu as pltpu

FEA_SIZE = 768     # BERT hidden width (config.MOSI.downStream.text_fea_dim) -- 6 x 128 lanes
PROJ_DIM = 256     # config.MOSI.downStream.proj_fea_dim stand-in -- 2 x 128 lanes
LN_EPS = 1e-5      # torch.nn.LayerNorm default


def _round_up(x, m):
    return ((x + m - 1) // m) * m


def text_encoder_kernel(cls_ref, wp_ref, bp_ref, wj_ref, bj_ref, g_ref, bt_ref, out_ref):
    # ---- BERT pooler: tanh([CLS] @ W_pool + b_pool) ---------------------------------
    # bf16 MXU operands, f32 accumulation; tanh kept in f32 (no bf16 VPU/EUP on v5e).
    pooled = jnp.tanh(
        jnp.dot(cls_ref[...], wp_ref[...], preferred_element_type=jnp.float32)
        + bp_ref[...])                                                       # (TB, F) f32

    # ---- FeatureProjector: Linear -> Dropout(eval = identity) -> LayerNorm ----------
    # TODO(synk): training-mode dropout would need pltpu.prng_seed/prng_random_bits;
    #             this forward matches eval() semantics (identity).
    proj = (jnp.dot(pooled.astype(jnp.bfloat16), wj_ref[...],
                    preferred_element_type=jnp.float32)
            + bj_ref[...])                                                   # (TB, P) f32
    mean = jnp.mean(proj, axis=-1, keepdims=True)
    cen = proj - mean
    var = jnp.mean(cen * cen, axis=-1, keepdims=True)
    out_ref[...] = (cen * lax.rsqrt(var + LN_EPS)) * g_ref[...] + bt_ref[...]


def init_params(key, fea_size=FEA_SIZE, proj_dim=PROJ_DIM):
    k1, k2 = jax.random.split(key, 2)
    scale = 1.0 / jnp.sqrt(jnp.float32(fea_size))
    return {
        # BERT pooler dense (fea_size -> fea_size)
        "w_pool": jax.random.normal(k1, (fea_size, fea_size), jnp.float32) * scale,
        "b_pool": jnp.zeros((1, fea_size), jnp.float32),
        # FeatureProjector linear (fea_size -> proj_dim)
        "w_proj": jax.random.normal(k2, (fea_size, proj_dim), jnp.float32) * scale,
        "b_proj": jnp.zeros((1, proj_dim), jnp.float32),
        # FeatureProjector LayerNorm(proj_dim)
        "ln_gamma": jnp.ones((1, proj_dim), jnp.float32),
        "ln_beta": jnp.zeros((1, proj_dim), jnp.float32),
    }


def text_encoder_forward(hidden, params, *, block_b=128):
    """hidden: [B, S, FEA_SIZE] (BERT last_hidden_state stand-in) -> [B, PROJ_DIM] f32."""
    fea = params["w_pool"].shape[0]
    proj = params["w_proj"].shape[1]

    # Pooler only consumes token 0; slice it in XLA (single cheap strided B x F copy),
    # keeping the kernel's streamed tile a clean lane-dense (TB, F) block.  Pre-casting
    # the MXU operands to bf16 also halves activation + weight DMA bytes.
    cls = hidden[:, 0, :].astype(jnp.bfloat16)
    b = cls.shape[0]

    tb = min(_round_up(block_b, 8), _round_up(b, 8))     # MXU-row-friendly batch tile
    b_pad = _round_up(b, tb)
    if b_pad != b:
        cls = jnp.pad(cls, ((0, b_pad - b), (0, 0)))
    grid = (b_pad // tb,)

    w_pool = params["w_pool"].astype(jnp.bfloat16)
    w_proj = params["w_proj"].astype(jnp.bfloat16)

    # VMEM budget: double-buffered activation tiles + resident bf16 weights (+ slack).
    vmem_bytes = (2 * tb * fea * 2 + 2 * tb * proj * 4          # in / out tiles (x2 buffers)
                  + fea * fea * 2 + fea * proj * 2              # resident bf16 weights
                  + 4 * 8 * max(fea, proj) * 4)                 # bias / gamma / beta tiles
    vmem_limit = int(min(64 * 1024 * 1024, max(2 * vmem_bytes, 32 * 1024 * 1024)))

    out = pl.pallas_call(
        text_encoder_kernel,
        out_shape=jax.ShapeDtypeStruct((b_pad, proj), jnp.float32),
        grid_spec=pltpu.PrefetchScalarGridSpec(
            num_scalar_prefetch=0,
            grid=grid,
            in_specs=[
                pl.BlockSpec((tb, fea), lambda i: (i, 0)),       # CLS tile (streamed)
                pl.BlockSpec((fea, fea), lambda i: (0, 0)),      # W_pool (VMEM-resident)
                pl.BlockSpec((1, fea), lambda i: (0, 0)),        # b_pool
                pl.BlockSpec((fea, proj), lambda i: (0, 0)),     # W_proj (VMEM-resident)
                pl.BlockSpec((1, proj), lambda i: (0, 0)),       # b_proj
                pl.BlockSpec((1, proj), lambda i: (0, 0)),       # ln_gamma
                pl.BlockSpec((1, proj), lambda i: (0, 0)),       # ln_beta
            ],
            out_specs=pl.BlockSpec((tb, proj), lambda i: (i, 0)),
        ),
        compiler_params=pltpu.CompilerParams(
            dimension_semantics=("parallel",),                   # megacore-shardable batch
            vmem_limit_bytes=vmem_limit,
        ),
    )(cls, w_pool, params["b_pool"], w_proj, params["b_proj"],
      params["ln_gamma"], params["ln_beta"])

    return out[:b]


def _reference(hidden, params):
    # Matches the kernel's numerics: bf16 MXU operands, f32 accumulation, f32 tanh/LN.
    cls = hidden[:, 0, :].astype(jnp.bfloat16)
    pooled = jnp.tanh(
        jnp.dot(cls, params["w_pool"].astype(jnp.bfloat16),
                preferred_element_type=jnp.float32) + params["b_pool"])
    proj = (jnp.dot(pooled.astype(jnp.bfloat16), params["w_proj"].astype(jnp.bfloat16),
                    preferred_element_type=jnp.float32) + params["b_proj"])
    mean = jnp.mean(proj, axis=-1, keepdims=True)
    var = jnp.mean((proj - mean) ** 2, axis=-1, keepdims=True)
    return (proj - mean) * lax.rsqrt(var + LN_EPS) * params["ln_gamma"] + params["ln_beta"]


if __name__ == "__main__":
    key = jax.random.PRNGKey(0)
    k_hidden, k_params = jax.random.split(key)

    # B deliberately not a multiple of the batch tile -> exercises the padding path;
    # block_b=32 gives a 3-step pipelined grid even at this small demo size.
    B, S = 80, 8
    hidden = jax.random.normal(k_hidden, (B, S, FEA_SIZE), jnp.float32)
    params = init_params(k_params)

    out = text_encoder_forward(hidden, params, block_b=32)
    out = jax.block_until_ready(out)

    ref = _reference(hidden, params)
    assert out.shape == (B, PROJ_DIM), out.shape
    assert jnp.allclose(out, ref, atol=2e-2, rtol=2e-2), float(jnp.max(jnp.abs(out - ref)))

    print("KERNEL_OK")
</pallas_src>

<mosaic_0001>
module attributes {stable_mosaic.version = 11 : i64} {
  func.func @text_encoder_kernel(%arg0: i32, %arg1: memref<32x768xbf16, #tpu.memory_space<vmem>>, %arg2: memref<768x768xbf16, #tpu.memory_space<vmem>>, %arg3: memref<1x768xf32, #tpu.memory_space<vmem>>, %arg4: memref<768x256xbf16, #tpu.memory_space<vmem>>, %arg5: memref<1x256xf32, #tpu.memory_space<vmem>>, %arg6: memref<1x256xf32, #tpu.memory_space<vmem>>, %arg7: memref<1x256xf32, #tpu.memory_space<vmem>>, %arg8: memref<32x256xf32, #tpu.memory_space<vmem>>) attributes {dimension_semantics = [#tpu.dimension_semantics<parallel>], iteration_bounds = array<i64: 3>, scalar_prefetch = 0 : i64, scratch_operands = 0 : i64, tpu.core_type = #tpu.core_type<tc>, window_params = [{transform_indices = @transform_0, window_bounds = array<i64: 32, 768>}, {pipeline_mode = #tpu.pipeline_mode<synchronous>, transform_indices = @transform_1, window_bounds = array<i64: 768, 768>}, {pipeline_mode = #tpu.pipeline_mode<synchronous>, transform_indices = @transform_2, window_bounds = array<i64: 1, 768>}, {pipeline_mode = #tpu.pipeline_mode<synchronous>, transform_indices = @transform_3, window_bounds = array<i64: 768, 256>}, {pipeline_mode = #tpu.pipeline_mode<synchronous>, transform_indices = @transform_4, window_bounds = array<i64: 1, 256>}, {pipeline_mode = #tpu.pipeline_mode<synchronous>, transform_indices = @transform_5, window_bounds = array<i64: 1, 256>}, {pipeline_mode = #tpu.pipeline_mode<synchronous>, transform_indices = @transform_6, window_bounds = array<i64: 1, 256>}, {transform_indices = @transform_7, window_bounds = array<i64: 32, 256>}]} {
    %c0 = arith.constant 0 : index
    %c0_0 = arith.constant 0 : index
    %0 = vector.load %arg1[%c0, %c0_0] : memref<32x768xbf16, #tpu.memory_space<vmem>>, vector<32x768xbf16>
    %c0_1 = arith.constant 0 : index
    %c0_2 = arith.constant 0 : index
    %1 = vector.load %arg2[%c0_1, %c0_2] : memref<768x768xbf16, #tpu.memory_space<vmem>>, vector<768x768xbf16>
    %cst = arith.constant dense<0.000000e+00> : vector<32x768xf32>
    %2 = tpu.matmul %0, %1, %cst {dimension_numbers = #tpu.dot_dimension_numbers<[1], [0], [0], [1], [0, 0, 1, 1], [], []>} : vector<32x768xbf16>, vector<768x768xbf16>, vector<32x768xf32> -> vector<32x768xf32>
    %c0_3 = arith.constant 0 : index
    %c0_4 = arith.constant 0 : index
    %3 = vector.load %arg3[%c0_3, %c0_4] : memref<1x768xf32, #tpu.memory_space<vmem>>, vector<1x768xf32>
    %4 = vector.broadcast %3 : vector<1x768xf32> to vector<32x768xf32>
    %5 = arith.addf %2, %4 : vector<32x768xf32>
    %6 = math.tanh %5 : vector<32x768xf32>
    %7 = arith.truncf %6 : vector<32x768xf32> to vector<32x768xbf16>
    %c0_5 = arith.constant 0 : index
    %c0_6 = arith.constant 0 : index
    %8 = vector.load %arg4[%c0_5, %c0_6] : memref<768x256xbf16, #tpu.memory_space<vmem>>, vector<768x256xbf16>
    %cst_7 = arith.constant dense<0.000000e+00> : vector<32x256xf32>
    %9 = tpu.matmul %7, %8, %cst_7 {dimension_numbers = #tpu.dot_dimension_numbers<[1], [0], [0], [1], [0, 0, 1, 1], [], []>} : vector<32x768xbf16>, vector<768x256xbf16>, vector<32x256xf32> -> vector<32x256xf32>
    %c0_8 = arith.constant 0 : index
    %c0_9 = arith.constant 0 : index
    %10 = vector.load %arg5[%c0_8, %c0_9] : memref<1x256xf32, #tpu.memory_space<vmem>>, vector<1x256xf32>
    %11 = vector.broadcast %10 : vector<1x256xf32> to vector<32x256xf32>
    %12 = arith.addf %9, %11 : vector<32x256xf32>
    %cst_10 = arith.constant dense<0.000000e+00> : vector<32xf32>
    %13 = vector.multi_reduction <add>, %12, %cst_10 [1] : vector<32x256xf32> to vector<32xf32>
    %14 = vector.shape_cast %13 : vector<32xf32> to vector<32x1xf32>
    %cst_11 = arith.constant 2.560000e+02 : f32
    %15 = vector.broadcast %cst_11 : f32 to vector<32x1xf32>
    %16 = arith.divf %14, %15 : vector<32x1xf32>
    %17 = vector.broadcast %16 : vector<32x1xf32> to vector<32x256xf32>
    %18 = arith.subf %12, %17 : vector<32x256xf32>
    %19 = arith.mulf %18, %18 : vector<32x256xf32>
    %cst_12 = arith.constant dense<0.000000e+00> : vector<32xf32>
    %20 = vector.multi_reduction <add>, %19, %cst_12 [1] : vector<32x256xf32> to vector<32xf32>
    %21 = vector.shape_cast %20 : vector<32xf32> to vector<32x1xf32>
    %cst_13 = arith.constant 2.560000e+02 : f32
    %22 = vector.broadcast %cst_13 : f32 to vector<32x1xf32>
    %23 = arith.divf %21, %22 : vector<32x1xf32>
    %cst_14 = arith.constant 9.99999974E-6 : f32
    %24 = vector.broadcast %cst_14 : f32 to vector<32x1xf32>
    %25 = arith.addf %23, %24 : vector<32x1xf32>
    %26 = math.rsqrt %25 : vector<32x1xf32>
    %27 = vector.broadcast %26 : vector<32x1xf32> to vector<32x256xf32>
    %28 = arith.mulf %18, %27 : vector<32x256xf32>
    %c0_15 = arith.constant 0 : index
    %c0_16 = arith.constant 0 : index
    %29 = vector.load %arg6[%c0_15, %c0_16] : memref<1x256xf32, #tpu.memory_space<vmem>>, vector<1x256xf32>
    %30 = vector.broadcast %29 : vector<1x256xf32> to vector<32x256xf32>
    %31 = arith.mulf %28, %30 : vector<32x256xf32>
    %c0_17 = arith.constant 0 : index
    %c0_18 = arith.constant 0 : index
    %32 = vector.load %arg7[%c0_17, %c0_18] : memref<1x256xf32, #tpu.memory_space<vmem>>, vector<1x256xf32>
    %33 = vector.broadcast %32 : vector<1x256xf32> to vector<32x256xf32>
    %34 = arith.addf %31, %33 : vector<32x256xf32>
    %c0_19 = arith.constant 0 : index
    %c0_20 = arith.constant 0 : index
    %35 = vector.load %arg8[%c0_19, %c0_20] : memref<32x256xf32, #tpu.memory_space<vmem>>, vector<32x256xf32>
    tpu.vector_store %arg8[%c0_19, %c0_20], %34 {strides = array<i32>} : memref<32x256xf32, #tpu.memory_space<vmem>>, vector<32x256xf32>,
    return
  }
  func.func @transform_0(%arg0: i32) -> (i32, i32) {
    %c0_i32 = arith.constant 0 : i32
    %c0_i32_0 = arith.constant 0 : i32
    return %arg0, %c0_i32 : i32, i32
  }
  func.func @transform_1(%arg0: i32) -> (i32, i32) {
    %c0_i32 = arith.constant 0 : i32
    %c0_i32_0 = arith.constant 0 : i32
    %c0_i32_1 = arith.constant 0 : i32
    return %c0_i32, %c0_i32_0 : i32, i32
  }
  func.func @transform_2(%arg0: i32) -> (i32, i32) {
    %c0_i32 = arith.constant 0 : i32
    %c0_i32_0 = arith.constant 0 : i32
    %c0_i32_1 = arith.constant 0 : i32
    return %c0_i32, %c0_i32_0 : i32, i32
  }
  func.func @transform_3(%arg0: i32) -> (i32, i32) {
    %c0_i32 = arith.constant 0 : i32
    %c0_i32_0 = arith.constant 0 : i32
    %c0_i32_1 = arith.constant 0 : i32
    return %c0_i32, %c0_i32_0 : i32, i32
  }
  func.func @transform_4(%arg0: i32) -> (i32, i32) {
    %c0_i32 = arith.constant 0 : i32
    %c0_i32_0 = arith.constant 0 : i32
    %c0_i32_1 = arith.constant 0 : i32
    return %c0_i32, %c0_i32_0 : i32, i32
  }
  func.func @transform_5(%arg0: i32) -> (i32, i32) {
    %c0_i32 = arith.constant 0 : i32
    %c0_i32_0 = arith.constant 0 : i32
    %c0_i32_1 = arith.constant 0 : i32
    return %c0_i32, %c0_i32_0 : i32, i32
  }
  func.func @transform_6(%arg0: i32) -> (i32, i32) {
    %c0_i32 = arith.constant 0 : i32
    %c0_i32_0 = arith.constant 0 : i32
    %c0_i32_1 = arith.constant 0 : i32
    return %c0_i32, %c0_i32_0 : i32, i32
  }
  func.func @transform_7(%arg0: i32) -> (i32, i32) {
    %c0_i32 = arith.constant 0 : i32
    %c0_i32_0 = arith.constant 0 : i32
    return %arg0, %c0_i32 : i32, i32
  }
}

</mosaic_0001>

<llo_original>
// kernel: tpu_custom_call.1
$region0: #{tpu_custom_call.1}
  #allocation0 [shape = 'u32[]', space=smem, size = 0x4, offset = 0x4, fixed_abs, tag = 'smem constant byte address 0x4 - core index']
  #allocation1 [shape = 'u32[72,128]{1,0:T(1,128)}', space=vmem, size = 0x9000, scoped, tag = 'internal scratch']
  %s0 = inlined_call_operand.hbm [shape: bf16[96,768], index: 0, kind: input, shape index: {}]
  %s1 = inlined_call_operand.hbm [shape: bf16[768,768], index: 1, kind: input, shape index: {}]
  %s2 = inlined_call_operand.hbm [shape: f32[1,768], index: 2, kind: input, shape index: {}]
  %s3 = inlined_call_operand.hbm [shape: bf16[768,256], index: 3, kind: input, shape index: {}]
  %s4 = inlined_call_operand.hbm [shape: f32[1,256], index: 4, kind: input, shape index: {}]
  %s5 = inlined_call_operand.hbm [shape: f32[1,256], index: 5, kind: input, shape index: {}]
  %s6 = inlined_call_operand.hbm [shape: f32[1,256], index: 6, kind: input, shape index: {}]
  %s7 = inlined_call_operand.hbm [shape: f32[96,256], index: 7, kind: output, shape index: {}]
  %s8 = sld [smem:[#allocation0]]
  $region89: #{tpu_custom_call.1} parent=0
    _
  %s10 = ssub.s32 1, %s8
  %s11 = scalar_select 0, %s10, %s8
  $region1: #{tpu_custom_call.1} parent=0
    #allocation2 [shape = 'u8[98304]{0}', space=vmem, size = 0x18000, scoped, tag = 'input window, operand 0']
    #allocation3 [shape = 's32[2]{0}', space=sflag, size = 0x8, scoped, tag = 'scoped memory for tpu_custom_call.1']
    #allocation4 [shape = 's32[2]{0}', space=sflag, size = 0x8, scoped, tag = 'scoped memory for tpu_custom_call.1']
    #allocation5 [shape = 'u8[1179648]{0}', space=vmem, size = 0x120000, scoped, tag = 'input window, operand 1, single buffered']
    #allocation6 [shape = 's32[1]{0}', space=sflag, size = 0x4, scoped, tag = 'scoped memory for tpu_custom_call.1']
    #allocation7 [shape = 'u8[3072]{0}', space=vmem, size = 0xc00, scoped, tag = 'input window, operand 2, single buffered']
    #allocation8 [shape = 'u8[393216]{0}', space=vmem, size = 0x60000, scoped, tag = 'input window, operand 3, single buffered']
    #allocation9 [shape = 's32[1]{0}', space=sflag, size = 0x4, scoped, tag = 'scoped memory for tpu_custom_call.1']
    #allocation10 [shape = 'u8[1024]{0}', space=vmem, size = 0x400, scoped, tag = 'input window, operand 4, single buffered']
    #allocation11 [shape = 'u8[1024]{0}', space=vmem, size = 0x400, scoped, tag = 'input window, operand 5, single buffered']
    #allocation12 [shape = 's32[1]{0}', space=sflag, size = 0x4, scoped, tag = 'scoped memory for tpu_custom_call.1']
    #allocation13 [shape = 'u8[1024]{0}', space=vmem, size = 0x400, scoped, tag = 'input window, operand 6, single buffered']
    #allocation14 [shape = 'u8[65536]{0}', space=vmem, size = 0x10000, scoped, tag = 'output window, operand 0']
    %12 = vsyncpa [#allocation3], 0
    %s13 = scalar_lea.sflag [#allocation3], 1
    %14 = vsyncpa %s13, 0
    %15 = vsyncpa [#allocation6], 0
    %16 = vsyncpa [#allocation9], 0
    %17 = vsyncpa [#allocation12], 0
    %18 = vsyncpa [#allocation4], 0
    %s19 = scalar_lea.sflag [#allocation4], 1
    %20 = vsyncpa %s19, 0
    loop: start=0, step=1, limit=5
    $region2: #{tpu_custom_call.1} parent=1 // loop_pre_header
      _
    $region3: #{tpu_custom_call.1} parent=1 // loop_header
      %s22 = sphi 0, %s26
      %p23 = scmp.ge.s32.totalorder %s22, 5
      %s32 = sphi 0, %s34
      %s35 = sphi 0, %s32
      %s36 = sphi 0, %s35
      %s52 = sphi 0, %s36
      %s56 = sphi 0, %s56
      %s58 = sphi 0, %s56
      %s59 = sphi 0, %s58
      %s73 = sphi 0, %s59
      %s77 = sphi 0, %s77
      %s79 = sphi 0, %s77
      %s80 = sphi 0, %s79
      %s94 = sphi 0, %s80
      %s98 = sphi 0, %s98
      %s100 = sphi 0, %s98
      %s101 = sphi 0, %s100
      %s115 = sphi 0, %s101
      %s119 = sphi 0, %s119
      %s121 = sphi 0, %s119
      %s122 = sphi 0, %s121
      %s136 = sphi 0, %s122
      %s140 = sphi 0, %s140
      %s142 = sphi 0, %s140
      %s143 = sphi 0, %s142
      %s157 = sphi 0, %s143
      %s161 = sphi 0, %s161
      %s163 = sphi 0, %s161
      %s164 = sphi 0, %s163
      %s178 = sphi 0, %s164
      %s184 = sphi 0, %s186
      %s187 = sphi 0, %s184
      %s188 = sphi 0, %s187
      %s204 = sphi 0, %s188
    $region4: #{tpu_custom_call.1} parent=1 // loop_header_branch
      %25 = sbr.rel (%p23) target = $region8
    $region5: #{tpu_custom_call.1} parent=1 // loop_body
      %s27 = ssub.s32 %s22, 1
      %s28 = ssub.s32 %s22, 2
      %s29 = sadd.s32 %s22, 1
      %s30 = ssub.s32 %s22, %s29
      %p31 = scmp.eq.s32.totalorder %s30, 0
      %s33 = sadd.s32 %s32, 1
      %s34 = scalar_select %p31, %s32, %s33
      %p37 = pneg %p31
      %p38 = scmp.eq.s32.totalorder %s22, 2
      %p39 = por %p37, %p38
      %p40 = scmp.ne.s32.totalorder %s32, %s35
      %p41 = scmp.eq.s32.totalorder %s22, 0
      %p42 = por %p40, %p41
      %p43 = scmp.ne.s32.totalorder %s32, %s35
      %p44 = scmp.eq.s32.totalorder %s27, 2
      %p45 = por %p43, %p44
      %p46 = scmp.ne.s32.totalorder %s35, %s36
      %p47 = scmp.eq.s32.totalorder %s27, 0
      %p48 = por %p46, %p47
      %p49 = scmp.ne.s32.totalorder %s35, %s36
      %p50 = scmp.eq.s32.totalorder %s28, 2
      %p51 = por %p49, %p50
      %p53 = scmp.ne.s32.totalorder %s36, %s52
      %p54 = scmp.eq.s32.totalorder %s28, 0
      %p55 = por %p53, %p54
      %s57 = sadd.s32 %s56, 1
      %p60 = scmp.eq.s32.totalorder %s22, 2
      %p61 = scmp.ne.s32.totalorder %s56, %s58
      %p62 = scmp.eq.s32.totalorder %s22, 0
      %p63 = por %p61, %p62
      %p64 = scmp.ne.s32.totalorder %s56, %s58
      %p65 = scmp.eq.s32.totalorder %s27, 2
      %p66 = por %p64, %p65
      %p67 = scmp.ne.s32.totalorder %s58, %s59
      %p68 = scmp.eq.s32.totalorder %s27, 0
      %p69 = por %p67, %p68
      %p70 = scmp.ne.s32.totalorder %s58, %s59
      %p71 = scmp.eq.s32.totalorder %s28, 2
      %p72 = por %p70, %p71
      %p74 = scmp.ne.s32.totalorder %s59, %s73
      %p75 = scmp.eq.s32.totalorder %s28, 0
      %p76 = por %p74, %p75
      %s78 = sadd.s32 %s77, 1
      %p81 = scmp.eq.s32.totalorder %s22, 2
      %p82 = scmp.ne.s32.totalorder %s77, %s79
      %p83 = scmp.eq.s32.totalorder %s22, 0
      %p84 = por %p82, %p83
      %p85 = scmp.ne.s32.totalorder %s77, %s79
      %p86 = scmp.eq.s32.totalorder %s27, 2
      %p87 = por %p85, %p86
      %p88 = scmp.ne.s32.totalorder %s79, %s80
      %p89 = scmp.eq.s32.totalorder %s27, 0
      %p90 = por %p88, %p89
      %p91 = scmp.ne.s32.totalorder %s79, %s80
      %p92 = scmp.eq.s32.totalorder %s28, 2
      %p93 = por %p91, %p92
      %p95 = scmp.ne.s32.totalorder %s80, %s94
      %p96 = scmp.eq.s32.totalorder %s28, 0
      %p97 = por %p95, %p96
      %s99 = sadd.s32 %s98, 1
      %p102 = scmp.eq.s32.totalorder %s22, 2
      %p103 = scmp.ne.s32.totalorder %s98, %s100
      %p104 = scmp.eq.s32.totalorder %s22, 0
      %p105 = por %p103, %p104
      %p106 = scmp.ne.s32.totalorder %s98, %s100
      %p107 = scmp.eq.s32.totalorder %s27, 2
      %p108 = por %p106, %p107
      %p109 = scmp.ne.s32.totalorder %s100, %s101
      %p110 = scmp.eq.s32.totalorder %s27, 0
      %p111 = por %p109, %p110
      %p112 = scmp.ne.s32.totalorder %s100, %s101
      %p113 = scmp.eq.s32.totalorder %s28, 2
      %p114 = por %p112, %p113
      %p116 = scmp.ne.s32.totalorder %s101, %s115
      %p117 = scmp.eq.s32.totalorder %s28, 0
      %p118 = por %p116, %p117
      %s120 = sadd.s32 %s119, 1
      %p123 = scmp.eq.s32.totalorder %s22, 2
      %p124 = scmp.ne.s32.totalorder %s119, %s121
      %p125 = scmp.eq.s32.totalorder %s22, 0
      %p126 = por %p124, %p125
      %p127 = scmp.ne.s32.totalorder %s119, %s121
      %p128 = scmp.eq.s32.totalorder %s27, 2
      %p129 = por %p127, %p128
      %p130 = scmp.ne.s32.totalorder %s121, %s122
      %p131 = scmp.eq.s32.totalorder %s27, 0
      %p132 = por %p130, %p131
      %p133 = scmp.ne.s32.totalorder %s121, %s122
      %p134 = scmp.eq.s32.totalorder %s28, 2
      %p135 = por %p133, %p134
      %p137 = scmp.ne.s32.totalorder %s122, %s136
      %p138 = scmp.eq.s32.totalorder %s28, 0
      %p139 = por %p137, %p138
      %s141 = sadd.s32 %s140, 1
      %p144 = scmp.eq.s32.totalorder %s22, 2
      %p145 = scmp.ne.s32.totalorder %s140, %s142
      %p146 = scmp.eq.s32.totalorder %s22, 0
      %p147 = por %p145, %p146
      %p148 = scmp.ne.s32.totalorder %s140, %s142
      %p149 = scmp.eq.s32.totalorder %s27, 2
      %p150 = por %p148, %p149
      %p151 = scmp.ne.s32.totalorder %s142, %s143
      %p152 = scmp.eq.s32.totalorder %s27, 0
      %p153 = por %p151, %p152
      %p154 = scmp.ne.s32.totalorder %s142, %s143
      %p155 = scmp.eq.s32.totalorder %s28, 2
      %p156 = por %p154, %p155
      %p158 = scmp.ne.s32.totalorder %s143, %s157
      %p159 = scmp.eq.s32.totalorder %s28, 0
      %p160 = por %p158, %p159
      %s162 = sadd.s32 %s161, 1
      %p165 = scmp.eq.s32.totalorder %s22, 2
      %p166 = scmp.ne.s32.totalorder %s161, %s163
      %p167 = scmp.eq.s32.totalorder %s22, 0
      %p168 = por %p166, %p167
      %p169 = scmp.ne.s32.totalorder %s161, %s163
      %p170 = scmp.eq.s32.totalorder %s27, 2
      %p171 = por %p169, %p170
      %p172 = scmp.ne.s32.totalorder %s163, %s164
      %p173 = scmp.eq.s32.totalorder %s27, 0
      %p174 = por %p172, %p173
      %p175 = scmp.ne.s32.totalorder %s163, %s164
      %p176 = scmp.eq.s32.totalorder %s28, 2
      %p177 = por %p175, %p176
      %p179 = scmp.ne.s32.totalorder %s164, %s178
      %p180 = scmp.eq.s32.totalorder %s28, 0
      %p181 = por %p179, %p180
      %s182 = ssub.s32 %s22, %s29
      %p183 = scmp.eq.s32.totalorder %s182, 0
      %s185 = sadd.s32 %s184, 1
      %s186 = scalar_select %p183, %s184, %s185
      %p189 = pneg %p183
      %p190 = scmp.eq.s32.totalorder %s22, 2
      %p191 = por %p189, %p190
      %p192 = scmp.ne.s32.totalorder %s184, %s187
      %p193 = scmp.eq.s32.totalorder %s22, 0
      %p194 = por %p192, %p193
      %p195 = scmp.ne.s32.totalorder %s184, %s187
      %p196 = scmp.eq.s32.totalorder %s27, 2
      %p197 = por %p195, %p196
      %p198 = scmp.ne.s32.totalorder %s187, %s188
      %p199 = scmp.eq.s32.totalorder %s27, 0
      %p200 = por %p198, %p199
      %p201 = scmp.ne.s32.totalorder %s187, %s188
      %p202 = scmp.eq.s32.totalorder %s28, 2
      %p203 = por %p201, %p202
      %p205 = scmp.ne.s32.totalorder %s188, %s204
      %p206 = scmp.eq.s32.totalorder %s28, 0
      %p207 = por %p205, %p206
      %p208 = scmp.le.s32.totalorder 1, %s22
      %p209 = scmp.lt.s32.totalorder %s22, 4
      %p210 = pnand %p208, %p209
      %p211 = pneg %p210
      // Predicated region
      $region9: #{tpu_custom_call.1} parent=5 // pred_check
        _
      $region10: #{tpu_custom_call.1} parent=5 // pred_check_branch
        %213 = sbr.rel (%p210) target = $region12
      $region11: #{tpu_custom_call.1} parent=5 // pred_region
        %s214 = ssub.s32 %s22, 1
        // Predicated region
        $region13: #{tpu_custom_call.1} parent=11 // pred_check
          %p215 = pneg %p69
        $region14: #{tpu_custom_call.1} parent=11 // pred_check_branch
          %217 = sbr.rel (%p215) target = $region16
        $region15: #{tpu_custom_call.1} parent=11 // pred_region
          %219 = vsyncadd [#allocation6], 0
          %s220 = sshll.u32 %s1, 4
          %s221 = int_to_ptr.hbm [resolvable:$true] %s220
          %s222 = sshll.u32 [#allocation5], 4
          %s223 = int_to_ptr.vmem [resolvable:$true] %s222
          %228 = dma.hbm_to_vmem [thread:$0]  %s221, 36864, %s223, [#allocation6], 384, 384, 24
        $region16: #{tpu_custom_call.1} parent=11 // pred_fallthru
          _
        // Predicated region
        $region17: #{tpu_custom_call.1} parent=11 // pred_check
          %p229 = pneg %p90
        $region18: #{tpu_custom_call.1} parent=11 // pred_check_branch
          %231 = sbr.rel (%p229) target = $region20
        $region19: #{tpu_custom_call.1} parent=11 // pred_region
          %233 = vsyncadd [#allocation6], 0
          %s235 = sshll.u32 %s2, 4
          %s236 = int_to_ptr.hbm [resolvable:$true] %s235
          %s237 = sshll.u32 [#allocation7], 4
          %s238 = int_to_ptr.vmem [resolvable:$true] %s237
          %240 = dma.hbm_to_vmem [thread:$0]  %s236, 96, %s238, [#allocation6]
        $region20: #{tpu_custom_call.1} parent=11 // pred_fallthru
          _
        // Predicated region
        $region21: #{tpu_custom_call.1} parent=11 // pred_check
          %p241 = pneg %p111
        $region22: #{tpu_custom_call.1} parent=11 // pred_check_branch
          %243 = sbr.rel (%p241) target = $region24
        $region23: #{tpu_custom_call.1} parent=11 // pred_region
          %245 = vsyncadd [#allocation9], 0
          %s246 = sshll.u32 %s3, 4
          %s247 = int_to_ptr.hbm [resolvable:$true] %s246
          %s248 = sshll.u32 [#allocation8], 4
          %s249 = int_to_ptr.vmem [resolvable:$true] %s248
          %254 = dma.hbm_to_vmem [thread:$0]  %s247, 12288, %s249, [#allocation9], 128, 128, 8
        $region24: #{tpu_custom_call.1} parent=11 // pred_fallthru
          _
        // Predicated region
        $region25: #{tpu_custom_call.1} parent=11 // pred_check
          %p255 = pneg %p132
        $region26: #{tpu_custom_call.1} parent=11 // pred_check_branch
          %257 = sbr.rel (%p255) target = $region28
        $region27: #{tpu_custom_call.1} parent=11 // pred_region
          %259 = vsyncadd [#allocation9], 0
          %s261 = sshll.u32 %s4, 4
          %s262 = int_to_ptr.hbm [resolvable:$true] %s261
          %s263 = sshll.u32 [#allocation10], 4
          %s264 = int_to_ptr.vmem [resolvable:$true] %s263
          %266 = dma.hbm_to_vmem [thread:$0]  %s262, 32, %s264, [#allocation9]
        $region28: #{tpu_custom_call.1} parent=11 // pred_fallthru
          _
        // Predicated region
        $region29: #{tpu_custom_call.1} parent=11 // pred_check
          %p267 = pneg %p153
        $region30: #{tpu_custom_call.1} parent=11 // pred_check_branch
          %269 = sbr.rel (%p267) target = $region32
        $region31: #{tpu_custom_call.1} parent=11 // pred_region
          %271 = vsyncadd [#allocation12], 0
          %s273 = sshll.u32 %s5, 4
          %s274 = int_to_ptr.hbm [resolvable:$true] %s273
          %s275 = sshll.u32 [#allocation11], 4
          %s276 = int_to_ptr.vmem [resolvable:$true] %s275
          %278 = dma.hbm_to_vmem [thread:$0]  %s274, 32, %s276, [#allocation12]
        $region32: #{tpu_custom_call.1} parent=11 // pred_fallthru
          _
        // Predicated region
        $region33: #{tpu_custom_call.1} parent=11 // pred_check
          %p279 = pneg %p174
        $region34: #{tpu_custom_call.1} parent=11 // pred_check_branch
          %281 = sbr.rel (%p279) target = $region36
        $region35: #{tpu_custom_call.1} parent=11 // pred_region
          %283 = vsyncadd [#allocation12], 0
          %s285 = sshll.u32 %s6, 4
          %s286 = int_to_ptr.hbm [resolvable:$true] %s285
          %s287 = sshll.u32 [#allocation13], 4
          %s288 = int_to_ptr.vmem [resolvable:$true] %s287
          %290 = dma.hbm_to_vmem [thread:$0]  %s286, 32, %s288, [#allocation12]
        $region36: #{tpu_custom_call.1} parent=11 // pred_fallthru
          _
      $region12: #{tpu_custom_call.1} parent=5 // pred_fallthru
        _
      %p291 = scmp.lt.s32.totalorder %s22, 3
      // Predicated region
      $region37: #{tpu_custom_call.1} parent=5 // pred_check
        %p292 = pneg %p291
      $region38: #{tpu_custom_call.1} parent=5 // pred_check_branch
        %294 = sbr.rel (%p292) target = $region40
      $region39: #{tpu_custom_call.1} parent=5 // pred_region
        // Predicated region
        $region41: #{tpu_custom_call.1} parent=39 // pred_check
          %p295 = pneg %p42
        $region42: #{tpu_custom_call.1} parent=39 // pred_check_branch
          %297 = sbr.rel (%p295) target = $region44
        $region43: #{tpu_custom_call.1} parent=39 // pred_region
          %s298 = sand.u32 %s32, 1
          %s299 = scalar_lea.sflag [#allocation3], %s298
          %s300 = sand.u32 %s32, 1
          %s301 = smul.addr %s300, 96
          %s302 = scalar_lea.vmem [#allocation2], %s301
          %s303 = smul.u32 4, %s22
          %305 = vsyncadd %s299, 0
          %s306 = smul.addr %s303, 6
          %s307 = smul.addr %s306, 4
          %s308 = scalar_lea.hbm %s0, %s307
          %s309 = sshll.u32 %s308, 4
          %s310 = int_to_ptr.hbm [resolvable:$true] %s309
          %s311 = sshll.u32 %s302, 4
          %s312 = int_to_ptr.vmem [resolvable:$true] %s311
          %317 = dma.hbm_to_vmem [thread:$0]  %s310, 1536, %s312, %s299, 384, 384, 24
        $region44: #{tpu_custom_call.1} parent=39 // pred_fallthru
          _
      $region40: #{tpu_custom_call.1} parent=5 // pred_fallthru
        _
      %p318 = scmp.le.s32.totalorder 1, %s22
      %p319 = scmp.lt.s32.totalorder %s22, 4
      %p320 = pnand %p318, %p319
      %p321 = pneg %p320
      // Predicated region
      $region45: #{tpu_custom_call.1} parent=5 // pred_check
        _
      $region46: #{tpu_custom_call.1} parent=5 // pred_check_branch
        %323 = sbr.rel (%p320) target = $region48
      $region47: #{tpu_custom_call.1} parent=5 // pred_region
        %s324 = ssub.s32 %s22, 1
        %s325 = sand.u32 %s35, 1
        %s326 = scalar_lea.sflag [#allocation3], %s325
        %s327 = sand.u32 %s35, 1
        %s328 = smul.addr %s327, 96
        %s329 = scalar_lea.vmem [#allocation2], %s328
        // Predicated region
        $region49: #{tpu_custom_call.1} parent=47 // pred_check
          %p330 = pneg %p48
        $region50: #{tpu_custom_call.1} parent=47 // pred_check_branch
          %332 = sbr.rel (%p330) target = $region52
        $region51: #{tpu_custom_call.1} parent=47 // pred_region
          %334 = dma.done %s326, 1536
        $region52: #{tpu_custom_call.1} parent=47 // pred_fallthru
          _
        // Predicated region
        $region53: #{tpu_custom_call.1} parent=47 // pred_check
          %p335 = pneg %p69
        $region54: #{tpu_custom_call.1} parent=47 // pred_check_branch
          %337 = sbr.rel (%p335) target = $region56
        $region55: #{tpu_custom_call.1} parent=47 // pred_region
          %339 = dma.done [#allocation6], 36864
        $region56: #{tpu_custom_call.1} parent=47 // pred_fallthru
          _
        // Predicated region
        $region57: #{tpu_custom_call.1} parent=47 // pred_check
          %p340 = pneg %p90
        $region58: #{tpu_custom_call.1} parent=47 // pred_check_branch
          %342 = sbr.rel (%p340) target = $region60
        $region59: #{tpu_custom_call.1} parent=47 // pred_region
          %344 = dma.done [#allocation6], 96
        $region60: #{tpu_custom_call.1} parent=47 // pred_fallthru
          _
        // Predicated region
        $region61: #{tpu_custom_call.1} parent=47 // pred_check
          %p345 = pneg %p111
        $region62: #{tpu_custom_call.1} parent=47 // pred_check_branch
          %347 = sbr.rel (%p345) target = $region64
        $region63: #{tpu_custom_call.1} parent=47 // pred_region
          %349 = dma.done [#allocation9], 12288
        $region64: #{tpu_custom_call.1} parent=47 // pred_fallthru
          _
        // Predicated region
        $region65: #{tpu_custom_call.1} parent=47 // pred_check
          %p350 = pneg %p132
        $region66: #{tpu_custom_call.1} parent=47 // pred_check_branch
          %352 = sbr.rel (%p350) target = $region68
        $region67: #{tpu_custom_call.1} parent=47 // pred_region
          %354 = dma.done [#allocation9], 32
        $region68: #{tpu_custom_call.1} parent=47 // pred_fallthru
          _
        // Predicated region
        $region69: #{tpu_custom_call.1} parent=47 // pred_check
          %p355 = pneg %p153
        $region70: #{tpu_custom_call.1} parent=47 // pred_check_branch
          %357 = sbr.rel (%p355) target = $region72
        $region71: #{tpu_custom_call.1} parent=47 // pred_region
          %359 = dma.done [#allocation12], 32
        $region72: #{tpu_custom_call.1} parent=47 // pred_fallthru
          _
        // Predicated region
        $region73: #{tpu_custom_call.1} parent=47 // pred_check
          %p360 = pneg %p174
        $region74: #{tpu_custom_call.1} parent=47 // pred_check_branch
          %362 = sbr.rel (%p360) target = $region76
        $region75: #{tpu_custom_call.1} parent=47 // pred_region
          %364 = dma.done [#allocation12], 32
        $region76: #{tpu_custom_call.1} parent=47 // pred_fallthru
          _
        %s365 = sand.u32 %s35, 1
        %s366 = scalar_lea.sflag [#allocation3], %s365
        %s367 = sand.u32 %s35, 1
        %s368 = smul.addr %s367, 96
        %s369 = scalar_lea.vmem [#allocation2], %s368
        %p370 = pneg %p48
        %p371 = pneg %p45
        %p372 = pneg %p69
        %p373 = pneg %p66
        %p374 = pneg %p90
        %p375 = pneg %p87
        %p376 = pneg %p111
        %p377 = pneg %p108
        %p378 = pneg %p132
        %p379 = pneg %p129
        %p380 = pneg %p153
        %p381 = pneg %p150
        %p382 = pneg %p174
        %p383 = pneg %p171
        %p384 = pneg %p200
        %p385 = pneg %p197
        %s386 = sand.u32 %s187, 1
        %s387 = scalar_lea.sflag [#allocation4], %s386
        %s388 = sand.u32 %s187, 1
        %s389 = smul.addr %s388, 64
        %s390 = scalar_lea.vmem [#allocation14], %s389
        %s391 = smul.u32 4, %s27
        %s392 = smul.u32 4, %s27
        %v393 = vld [vmem:[%s329] sm:$0xff]
        %v394 = vld [vmem:[%s329 + $0x8] sm:$0xff]
        %v395 = vld [vmem:[%s329 + $0x10] sm:$0xff]
        %v396 = vld [vmem:[%s329 + $0x18] sm:$0xff]
        %v397 = vld [vmem:[%s329 + $0x20] sm:$0xff]
        %v398 = vld [vmem:[%s329 + $0x28] sm:$0xff]
        %v399 = vld [vmem:[%s329 + $0x30] sm:$0xff]
        %v400 = vld [vmem:[%s329 + $0x38] sm:$0xff]
        %v401 = vld [vmem:[%s329 + $0x40] sm:$0xff]
        %v402 = vld [vmem:[%s329 + $0x48] sm:$0xff]
        %v403 = vld [vmem:[%s329 + $0x50] sm:$0xff]
        %v404 = vld [vmem:[%s329 + $0x58] sm:$0xff]
        %v405 = vld [vmem:[#allocation5] sm:$0xff]
        %v406 = vld [vmem:[#allocation5 + $0x8] sm:$0xff]
        %v407 = vld [vmem:[#allocation5 + $0x10] sm:$0xff]
        %v408 = vld [vmem:[#allocation5 + $0x18] sm:$0xff]
        %v409 = vld [vmem:[#allocation5 + $0x20] sm:$0xff]
        %v410 = vld [vmem:[#allocation5 + $0x28] sm:$0xff]
        %v411 = vld [vmem:[#allocation5 + $0x30] sm:$0xff]
        %v412 = vld [vmem:[#allocation5 + $0x38] sm:$0xff]
        %v413 = vld [vmem:[#allocation5 + $0x40] sm:$0xff]
        %v414 = vld [vmem:[#allocation5 + $0x48] sm:$0xff]
        %v415 = vld [vmem:[#allocation5 + $0x50] sm:$0xff]
        %v416 = vld [vmem:[#allocation5 + $0x58] sm:$0xff]
        %v417 = vld [vmem:[#allocation5 + $0x60] sm:$0xff]
        %v418 = vld [vmem:[#allocation5 + $0x68] sm:$0xff]
        %v419 = vld [vmem:[#allocation5 + $0x70] sm:$0xff]
        %v420 = vld [vmem:[#allocation5 + $0x78] sm:$0xff]
        %v421 = vld [vmem:[#allocation5 + $0x80] sm:$0xff]
        %v422 = vld [vmem:[#allocation5 + $0x88] sm:$0xff]
        %v423 = vld [vmem:[#allocation5 + $0x90] sm:$0xff]
        %v424 = vld [vmem:[#allocation5 + $0x98] sm:$0xff]
        %v425 = vld [vmem:[#allocation5 + $0xa0] sm:$0xff]
        %v426 = vld [vmem:[#allocation5 + $0xa8] sm:$0xff]
        %v427 = vld [vmem:[#allocation5 + $0xb0] sm:$0xff]
        %v428 = vld [vmem:[#allocation5 + $0xb8] sm:$0xff]
        %v429 = vld [vmem:[#allocation5 + $0xc0] sm:$0xff]
        %v430 = vld [vmem:[#allocation5 + $0xc8] sm:$0xff]
        %v431 = vld [vmem:[#allocation5 + $0xd0] sm:$0xff]
        %v432 = vld [vmem:[#allocation5 + $0xd8] sm:$0xff]
        %v433 = vld [vmem:[#allocation5 + $0xe0] sm:$0xff]
        %v434 = vld [vmem:[#allocation5 + $0xe8] sm:$0xff]
        %v435 = vld [vmem:[#allocation5 + $0xf0] sm:$0xff]
        %v436 = vld [vmem:[#allocation5 + $0xf8] sm:$0xff]
        %v437 = vld [vmem:[#allocation5 + $0x100] sm:$0xff]
        %v438 = vld [vmem:[#allocation5 + $0x108] sm:$0xff]
        %v439 = vld [vmem:[#allocation5 + $0x110] sm:$0xff]
        %v440 = vld [vmem:[#allocation5 + $0x118] sm:$0xff]
        %v441 = vld [vmem:[#allocation5 + $0x120] sm:$0xff]
        %v442 = vld [vmem:[#allocation5 + $0x128] sm:$0xff]
        %v443 = vld [vmem:[#allocation5 + $0x130] sm:$0xff]
        %v444 = vld [vmem:[#allocation5 + $0x138] sm:$0xff]
        %v445 = vld [vmem:[#allocation5 + $0x140] sm:$0xff]
        %v446 = vld [vmem:[#allocation5 + $0x148] sm:$0xff]
        %v447 = vld [vmem:[#allocation5 + $0x150] sm:$0xff]
        %v448 = vld [vmem:[#allocation5 + $0x158] sm:$0xff]
        %v449 = vld [vmem:[#allocation5 + $0x160] sm:$0xff]
        %v450 = vld [vmem:[#allocation5 + $0x168] sm:$0xff]
        %v451 = vld [vmem:[#allocation5 + $0x170] sm:$0xff]
        %v452 = vld [vmem:[#allocation5 + $0x178] sm:$0xff]
        %v453 = vld [vmem:[#allocation5 + $0x180] sm:$0xff]
        %v454 = vld [vmem:[#allocation5 + $0x188] sm:$0xff]
        %v455 = vld [vmem:[#allocation5 + $0x190] sm:$0xff]
        %v456 = vld [vmem:[#allocation5 + $0x198] sm:$0xff]
        %v457 = vld [vmem:[#allocation5 + $0x1a0] sm:$0xff]
        %v458 = vld [vmem:[#allocation5 + $0x1a8] sm:$0xff]
        %v459 = vld [vmem:[#allocation5 + $0x1b0] sm:$0xff]
        %v460 = vld [vmem:[#allocation5 + $0x1b8] sm:$0xff]
        %v461 = vld [vmem:[#allocation5 + $0x1c0] sm:$0xff]
        %v462 = vld [vmem:[#allocation5 + $0x1c8] sm:$0xff]
        %v463 = vld [vmem:[#allocation5 + $0x1d0] sm:$0xff]
        %v464 = vld [vmem:[#allocation5 + $0x1d8] sm:$0xff]
        %v465 = vld [vmem:[#allocation5 + $0x1e0] sm:$0xff]
        %v466 = vld [vmem:[#allocation5 + $0x1e8] sm:$0xff]
        %v467 = vld [vmem:[#allocation5 + $0x1f0] sm:$0xff]
        %v468 = vld [vmem:[#allocation5 + $0x1f8] sm:$0xff]
        %v469 = vld [vmem:[#allocation5 + $0x200] sm:$0xff]
        %v470 = vld [vmem:[#allocation5 + $0x208] sm:$0xff]
        %v471 = vld [vmem:[#allocation5 + $0x210] sm:$0xff]
        %v472 = vld [vmem:[#allocation5 + $0x218] sm:$0xff]
        %v473 = vld [vmem:[#allocation5 + $0x220] sm:$0xff]
        %v474 = vld [vmem:[#allocation5 + $0x228] sm:$0xff]
        %v475 = vld [vmem:[#allocation5 + $0x230] sm:$0xff]
        %v476 = vld [vmem:[#allocation5 + $0x238] sm:$0xff]
        %v477 = vld [vmem:[#allocation5 + $0x240] sm:$0xff]
        %v478 = vld [vmem:[#allocation5 + $0x248] sm:$0xff]
        %v479 = vld [vmem:[#allocation5 + $0x250] sm:$0xff]
        %v480 = vld [vmem:[#allocation5 + $0x258] sm:$0xff]
        %v481 = vld [vmem:[#allocation5 + $0x260] sm:$0xff]
        %v482 = vld [vmem:[#allocation5 + $0x268] sm:$0xff]
        %v483 = vld [vmem:[#allocation5 + $0x270] sm:$0xff]
        %v484 = vld [vmem:[#allocation5 + $0x278] sm:$0xff]
        %v485 = vld [vmem:[#allocation5 + $0x280] sm:$0xff]
        %v486 = vld [vmem:[#allocation5 + $0x288] sm:$0xff]
        %v487 = vld [vmem:[#allocation5 + $0x290] sm:$0xff]
        %v488 = vld [vmem:[#allocation5 + $0x298] sm:$0xff]
        %v489 = vld [vmem:[#allocation5 + $0x2a0] sm:$0xff]
        %v490 = vld [vmem:[#allocation5 + $0x2a8] sm:$0xff]
        %v491 = vld [vmem:[#allocation5 + $0x2b0] sm:$0xff]
        %v492 = vld [vmem:[#allocation5 + $0x2b8] sm:$0xff]
        %v493 = vld [vmem:[#allocation5 + $0x2c0] sm:$0xff]
        %v494 = vld [vmem:[#allocation5 + $0x2c8] sm:$0xff]
        %v495 = vld [vmem:[#allocation5 + $0x2d0] sm:$0xff]
        %v496 = vld [vmem:[#allocation5 + $0x2d8] sm:$0xff]
        %v497 = vld [vmem:[#allocation5 + $0x2e0] sm:$0xff]
        %v498 = vld [vmem:[#allocation5 + $0x2e8] sm:$0xff]
        %v499 = vld [vmem:[#allocation5 + $0x2f0] sm:$0xff]
        %v500 = vld [vmem:[#allocation5 + $0x2f8] sm:$0xff]
        %v501 = vld [vmem:[#allocation5 + $0x300] sm:$0xff]
        %v502 = vld [vmem:[#allocation5 + $0x308] sm:$0xff]
        %v503 = vld [vmem:[#allocation5 + $0x310] sm:$0xff]
        %v504 = vld [vmem:[#allocation5 + $0x318] sm:$0xff]
        %v505 = vld [vmem:[#allocation5 + $0x320] sm:$0xff]
        %v506 = vld [vmem:[#allocation5 + $0x328] sm:$0xff]
        %v507 = vld [vmem:[#allocation5 + $0x330] sm:$0xff]
        %v508 = vld [vmem:[#allocation5 + $0x338] sm:$0xff]
        %v509 = vld [vmem:[#allocation5 + $0x340] sm:$0xff]
        %v510 = vld [vmem:[#allocation5 + $0x348] sm:$0xff]
        %v511 = vld [vmem:[#allocation5 + $0x350] sm:$0xff]
        %v512 = vld [vmem:[#allocation5 + $0x358] sm:$0xff]
        %v513 = vld [vmem:[#allocation5 + $0x360] sm:$0xff]
        %v514 = vld [vmem:[#allocation5 + $0x368] sm:$0xff]
        %v515 = vld [vmem:[#allocation5 + $0x370] sm:$0xff]
        %v516 = vld [vmem:[#allocation5 + $0x378] sm:$0xff]
        %v517 = vld [vmem:[#allocation5 + $0x380] sm:$0xff]
        %v518 = vld [vmem:[#allocation5 + $0x388] sm:$0xff]
        %v519 = vld [vmem:[#allocation5 + $0x390] sm:$0xff]
        %v520 = vld [vmem:[#allocation5 + $0x398] sm:$0xff]
        %v521 = vld [vmem:[#allocation5 + $0x3a0] sm:$0xff]
        %v522 = vld [vmem:[#allocation5 + $0x3a8] sm:$0xff]
        %v523 = vld [vmem:[#allocation5 + $0x3b0] sm:$0xff]
        %v524 = vld [vmem:[#allocation5 + $0x3b8] sm:$0xff]
        %v525 = vld [vmem:[#allocation5 + $0x3c0] sm:$0xff]
        %v526 = vld [vmem:[#allocation5 + $0x3c8] sm:$0xff]
        %v527 = vld [vmem:[#allocation5 + $0x3d0] sm:$0xff]
        %v528 = vld [vmem:[#allocation5 + $0x3d8] sm:$0xff]
        %v529 = vld [vmem:[#allocation5 + $0x3e0] sm:$0xff]
        %v530 = vld [vmem:[#allocation5 + $0x3e8] sm:$0xff]
        %v531 = vld [vmem:[#allocation5 + $0x3f0] sm:$0xff]
        %v532 = vld [vmem:[#allocation5 + $0x3f8] sm:$0xff]
        %v533 = vld [vmem:[#allocation5 + $0x400] sm:$0xff]
        %v534 = vld [vmem:[#allocation5 + $0x408] sm:$0xff]
        %v535 = vld [vmem:[#allocation5 + $0x410] sm:$0xff]
        %v536 = vld [vmem:[#allocation5 + $0x418] sm:$0xff]
        %v537 = vld [vmem:[#allocation5 + $0x420] sm:$0xff]
        %v538 = vld [vmem:[#allocation5 + $0x428] sm:$0xff]
        %v539 = vld [vmem:[#allocation5 + $0x430] sm:$0xff]
        %v540 = vld [vmem:[#allocation5 + $0x438] sm:$0xff]
        %v541 = vld [vmem:[#allocation5 + $0x440] sm:$0xff]
        %v542 = vld [vmem:[#allocation5 + $0x448] sm:$0xff]
        %v543 = vld [vmem:[#allocation5 + $0x450] sm:$0xff]
        %v544 = vld [vmem:[#allocation5 + $0x458] sm:$0xff]
        %v545 = vld [vmem:[#allocation5 + $0x460] sm:$0xff]
        %v546 = vld [vmem:[#allocation5 + $0x468] sm:$0xff]
        %v547 = vld [vmem:[#allocation5 + $0x470] sm:$0xff]
        %v548 = vld [vmem:[#allocation5 + $0x478] sm:$0xff]
        %v549 = vld [vmem:[#allocation5 + $0x480] sm:$0xff]
        %v550 = vld [vmem:[#allocation5 + $0x488] sm:$0xff]
        %v551 = vld [vmem:[#allocation5 + $0x490] sm:$0xff]
        %v552 = vld [vmem:[#allocation5 + $0x498] sm:$0xff]
        %v553 = vld [vmem:[#allocation5 + $0x4a0] sm:$0xff]
        %v554 = vld [vmem:[#allocation5 + $0x4a8] sm:$0xff]
        %v555 = vld [vmem:[#allocation5 + $0x4b0] sm:$0xff]
        %v556 = vld [vmem:[#allocation5 + $0x4b8] sm:$0xff]
        %v557 = vld [vmem:[#allocation5 + $0x4c0] sm:$0xff]
        %v558 = vld [vmem:[#allocation5 + $0x4c8] sm:$0xff]
        %v559 = vld [vmem:[#allocation5 + $0x4d0] sm:$0xff]
        %v560 = vld [vmem:[#allocation5 + $0x4d8] sm:$0xff]
        %v561 = vld [vmem:[#allocation5 + $0x4e0] sm:$0xff]
        %v562 = vld [vmem:[#allocation5 + $0x4e8] sm:$0xff]
        %v563 = vld [vmem:[#allocation5 + $0x4f0] sm:$0xff]
        %v564 = vld [vmem:[#allocation5 + $0x4f8] sm:$0xff]
        %v565 = vld [vmem:[#allocation5 + $0x500] sm:$0xff]
        %v566 = vld [vmem:[#allocation5 + $0x508] sm:$0xff]
        %v567 = vld [vmem:[#allocation5 + $0x510] sm:$0xff]
        %v568 = vld [vmem:[#allocation5 + $0x518] sm:$0xff]
        %v569 = vld [vmem:[#allocation5 + $0x520] sm:$0xff]
        %v570 = vld [vmem:[#allocation5 + $0x528] sm:$0xff]
        %v571 = vld [vmem:[#allocation5 + $0x530] sm:$0xff]
        %v572 = vld [vmem:[#allocation5 + $0x538] sm:$0xff]
        %v573 = vld [vmem:[#allocation5 + $0x540] sm:$0xff]
        %v574 = vld [vmem:[#allocation5 + $0x548] sm:$0xff]
        %v575 = vld [vmem:[#allocation5 + $0x550] sm:$0xff]
        %v576 = vld [vmem:[#allocation5 + $0x558] sm:$0xff]
        %v577 = vld [vmem:[#allocation5 + $0x560] sm:$0xff]
        %v578 = vld [vmem:[#allocation5 + $0x568] sm:$0xff]
        %v579 = vld [vmem:[#allocation5 + $0x570] sm:$0xff]
        %v580 = vld [vmem:[#allocation5 + $0x578] sm:$0xff]
        %v581 = vld [vmem:[#allocation5 + $0x580] sm:$0xff]
        %v582 = vld [vmem:[#allocation5 + $0x588] sm:$0xff]
        %v583 = vld [vmem:[#allocation5 + $0x590] sm:$0xff]
        %v584 = vld [vmem:[#allocation5 + $0x598] sm:$0xff]
        %v585 = vld [vmem:[#allocation5 + $0x5a0] sm:$0xff]
        %v586 = vld [vmem:[#allocation5 + $0x5a8] sm:$0xff]
        %v587 = vld [vmem:[#allocation5 + $0x5b0] sm:$0xff]
        %v588 = vld [vmem:[#allocation5 + $0x5b8] sm:$0xff]
        %v589 = vld [vmem:[#allocation5 + $0x5c0] sm:$0xff]
        %v590 = vld [vmem:[#allocation5 + $0x5c8] sm:$0xff]
        %v591 = vld [vmem:[#allocation5 + $0x5d0] sm:$0xff]
        %v592 = vld [vmem:[#allocation5 + $0x5d8] sm:$0xff]
        %v593 = vld [vmem:[#allocation5 + $0x5e0] sm:$0xff]
        %v594 = vld [vmem:[#allocation5 + $0x5e8] sm:$0xff]
        %v595 = vld [vmem:[#allocation5 + $0x5f0] sm:$0xff]
        %v596 = vld [vmem:[#allocation5 + $0x5f8] sm:$0xff]
        %v597 = vld [vmem:[#allocation5 + $0x600] sm:$0xff]
        %v598 = vld [vmem:[#allocation5 + $0x608] sm:$0xff]
        %v599 = vld [vmem:[#allocation5 + $0x610] sm:$0xff]
        %v600 = vld [vmem:[#allocation5 + $0x618] sm:$0xff]
        %v601 = vld [vmem:[#allocation5 + $0x620] sm:$0xff]
        %v602 = vld [vmem:[#allocation5 + $0x628] sm:$0xff]
        %v603 = vld [vmem:[#allocation5 + $0x630] sm:$0xff]
        %v604 = vld [vmem:[#allocation5 + $0x638] sm:$0xff]
        %v605 = vld [vmem:[#allocation5 + $0x640] sm:$0xff]
        %v606 = vld [vmem:[#allocation5 + $0x648] sm:$0xff]
        %v607 = vld [vmem:[#allocation5 + $0x650] sm:$0xff]
        %v608 = vld [vmem:[#allocation5 + $0x658] sm:$0xff]
        %v609 = vld [vmem:[#allocation5 + $0x660] sm:$0xff]
        %v610 = vld [vmem:[#allocation5 + $0x668] sm:$0xff]
        %v611 = vld [vmem:[#allocation5 + $0x670] sm:$0xff]
        %v612 = vld [vmem:[#allocation5 + $0x678] sm:$0xff]
        %v613 = vld [vmem:[#allocation5 + $0x680] sm:$0xff]
        %v614 = vld [vmem:[#allocation5 + $0x688] sm:$0xff]
        %v615 = vld [vmem:[#allocation5 + $0x690] sm:$0xff]
        %v616 = vld [vmem:[#allocation5 + $0x698] sm:$0xff]
        %v617 = vld [vmem:[#allocation5 + $0x6a0] sm:$0xff]
        %v618 = vld [vmem:[#allocation5 + $0x6a8] sm:$0xff]
        %v619 = vld [vmem:[#allocation5 + $0x6b0] sm:$0xff]
        %v620 = vld [vmem:[#allocation5 + $0x6b8] sm:$0xff]
        %v621 = vld [vmem:[#allocation5 + $0x6c0] sm:$0xff]
        %v622 = vld [vmem:[#allocation5 + $0x6c8] sm:$0xff]
        %v623 = vld [vmem:[#allocation5 + $0x6d0] sm:$0xff]
        %v624 = vld [vmem:[#allocation5 + $0x6d8] sm:$0xff]
        %v625 = vld [vmem:[#allocation5 + $0x6e0] sm:$0xff]
        %v626 = vld [vmem:[#allocation5 + $0x6e8] sm:$0xff]
        %v627 = vld [vmem:[#allocation5 + $0x6f0] sm:$0xff]
        %v628 = vld [vmem:[#allocation5 + $0x6f8] sm:$0xff]
        %v629 = vld [vmem:[#allocation5 + $0x700] sm:$0xff]
        %v630 = vld [vmem:[#allocation5 + $0x708] sm:$0xff]
        %v631 = vld [vmem:[#allocation5 + $0x710] sm:$0xff]
        %v632 = vld [vmem:[#allocation5 + $0x718] sm:$0xff]
        %v633 = vld [vmem:[#allocation5 + $0x720] sm:$0xff]
        %v634 = vld [vmem:[#allocation5 + $0x728] sm:$0xff]
        %v635 = vld [vmem:[#allocation5 + $0x730] sm:$0xff]
        %v636 = vld [vmem:[#allocation5 + $0x738] sm:$0xff]
        %v637 = vld [vmem:[#allocation5 + $0x740] sm:$0xff]
        %v638 = vld [vmem:[#allocation5 + $0x748] sm:$0xff]
        %v639 = vld [vmem:[#allocation5 + $0x750] sm:$0xff]
        %v640 = vld [vmem:[#allocation5 + $0x758] sm:$0xff]
        %v641 = vld [vmem:[#allocation5 + $0x760] sm:$0xff]
        %v642 = vld [vmem:[#allocation5 + $0x768] sm:$0xff]
        %v643 = vld [vmem:[#allocation5 + $0x770] sm:$0xff]
        %v644 = vld [vmem:[#allocation5 + $0x778] sm:$0xff]
        %v645 = vld [vmem:[#allocation5 + $0x780] sm:$0xff]
        %v646 = vld [vmem:[#allocation5 + $0x788] sm:$0xff]
        %v647 = vld [vmem:[#allocation5 + $0x790] sm:$0xff]
        %v648 = vld [vmem:[#allocation5 + $0x798] sm:$0xff]
        %v649 = vld [vmem:[#allocation5 + $0x7a0] sm:$0xff]
        %v650 = vld [vmem:[#allocation5 + $0x7a8] sm:$0xff]
        %v651 = vld [vmem:[#allocation5 + $0x7b0] sm:$0xff]
        %v652 = vld [vmem:[#allocation5 + $0x7b8] sm:$0xff]
        %v653 = vld [vmem:[#allocation5 + $0x7c0] sm:$0xff]
        %v654 = vld [vmem:[#allocation5 + $0x7c8] sm:$0xff]
        %v655 = vld [vmem:[#allocation5 + $0x7d0] sm:$0xff]
        %v656 = vld [vmem:[#allocation5 + $0x7d8] sm:$0xff]
        %v657 = vld [vmem:[#allocation5 + $0x7e0] sm:$0xff]
        %v658 = vld [vmem:[#allocation5 + $0x7e8] sm:$0xff]
        %v659 = vld [vmem:[#allocation5 + $0x7f0] sm:$0xff]
        %v660 = vld [vmem:[#allocation5 + $0x7f8] sm:$0xff]
        %v661 = vld [vmem:[#allocation5 + $0x800] sm:$0xff]
        %v662 = vld [vmem:[#allocation5 + $0x808] sm:$0xff]
        %v663 = vld [vmem:[#allocation5 + $0x810] sm:$0xff]
        %v664 = vld [vmem:[#allocation5 + $0x818] sm:$0xff]
        %v665 = vld [vmem:[#allocation5 + $0x820] sm:$0xff]
        %v666 = vld [vmem:[#allocation5 + $0x828] sm:$0xff]
        %v667 = vld [vmem:[#allocation5 + $0x830] sm:$0xff]
        %v668 = vld [vmem:[#allocation5 + $0x838] sm:$0xff]
        %v669 = vld [vmem:[#allocation5 + $0x840] sm:$0xff]
        %v670 = vld [vmem:[#allocation5 + $0x848] sm:$0xff]
        %v671 = vld [vmem:[#allocation5 + $0x850] sm:$0xff]
        %v672 = vld [vmem:[#allocation5 + $0x858] sm:$0xff]
        %v673 = vld [vmem:[#allocation5 + $0x860] sm:$0xff]
        %v674 = vld [vmem:[#allocation5 + $0x868] sm:$0xff]
        %v675 = vld [vmem:[#allocation5 + $0x870] sm:$0xff]
        %v676 = vld [vmem:[#allocation5 + $0x878] sm:$0xff]
        %v677 = vld [vmem:[#allocation5 + $0x880] sm:$0xff]
        %v678 = vld [vmem:[#allocation5 + $0x888] sm:$0xff]
        %v679 = vld [vmem:[#allocation5 + $0x890] sm:$0xff]
        %v680 = vld [vmem:[#allocation5 + $0x898] sm:$0xff]
        %v681 = vld [vmem:[#allocation5 + $0x8a0] sm:$0xff]
        %v682 = vld [vmem:[#allocation5 + $0x8a8] sm:$0xff]
        %v683 = vld [vmem:[#allocation5 + $0x8b0] sm:$0xff]
        %v684 = vld [vmem:[#allocation5 + $0x8b8] sm:$0xff]
        %v685 = vld [vmem:[#allocation5 + $0x8c0] sm:$0xff]
        %v686 = vld [vmem:[#allocation5 + $0x8c8] sm:$0xff]
        %v687 = vld [vmem:[#allocation5 + $0x8d0] sm:$0xff]
        %v688 = vld [vmem:[#allocation5 + $0x8d8] sm:$0xff]
        %v689 = vld [vmem:[#allocation5 + $0x8e0] sm:$0xff]
        %v690 = vld [vmem:[#allocation5 + $0x8e8] sm:$0xff]
        %v691 = vld [vmem:[#allocation5 + $0x8f0] sm:$0xff]
        %v692 = vld [vmem:[#allocation5 + $0x8f8] sm:$0xff]
        %v693 = vld [vmem:[#allocation7] sm:$0x3f]
        %v695 = vperm.slane %v693, 0
        %v696 = vperm.slane %v693, 1
        %v697 = vperm.slane %v693, 2
        %v698 = vperm.slane %v693, 3
        %v699 = vperm.slane %v693, 4
        %v700 = vperm.slane %v693, 5
        %v719 = vunpack.c.l.b16 %v393
        %v720 = vunpack.c.h.b16 %v393
        %v721 = vunpack.c.l.b16 %v394
        %v722 = vunpack.c.h.b16 %v394
        %v723 = vunpack.c.l.b16 %v395
        %v724 = vunpack.c.h.b16 %v395
        %v725 = vunpack.c.l.b16 %v396
        %v726 = vunpack.c.h.b16 %v396
        %v727 = vunpack.c.l.b16 %v397
        %v728 = vunpack.c.h.b16 %v397
        %v729 = vunpack.c.l.b16 %v398
        %v730 = vunpack.c.h.b16 %v398
        %v731 = vunpack.c.l.b16 %v399
        %v732 = vunpack.c.h.b16 %v399
        %v733 = vunpack.c.l.b16 %v400
        %v734 = vunpack.c.h.b16 %v400
        %v735 = vunpack.c.l.b16 %v401
        %v736 = vunpack.c.h.b16 %v401
        %v737 = vunpack.c.l.b16 %v402
        %v738 = vunpack.c.h.b16 %v402
        %v739 = vunpack.c.l.b16 %v403
        %v740 = vunpack.c.h.b16 %v403
        %v741 = vunpack.c.l.b16 %v404
        %v742 = vunpack.c.h.b16 %v404
        %v743 = vpack.c.b16 %v725, %v719
        %v744 = vpack.c.b16 %v726, %v720
        %v745 = vpack.c.b16 %v727, %v721
        %v746 = vpack.c.b16 %v728, %v722
        %v747 = vpack.c.b16 %v729, %v723
        %v748 = vpack.c.b16 %v730, %v724
        %v749 = vpack.c.b16 %v737, %v731
        %v750 = vpack.c.b16 %v738, %v732
        %v751 = vpack.c.b16 %v739, %v733
        %v752 = vpack.c.b16 %v740, %v734
        %v753 = vpack.c.b16 %v741, %v735
        %v754 = vpack.c.b16 %v742, %v736
        %v1055 = vunpack.c.l.b16 %v405
        %v1056 = vunpack.c.h.b16 %v405
        %v1057 = vunpack.c.l.b16 %v406
        %v1058 = vunpack.c.h.b16 %v406
        %v1059 = vunpack.c.l.b16 %v407
        %v1060 = vunpack.c.h.b16 %v407
        %v1061 = vunpack.c.l.b16 %v408
        %v1062 = vunpack.c.h.b16 %v408
        %v1063 = vunpack.c.l.b16 %v409
        %v1064 = vunpack.c.h.b16 %v409
        %v1065 = vunpack.c.l.b16 %v410
        %v1066 = vunpack.c.h.b16 %v410
        %v1067 = vunpack.c.l.b16 %v411
        %v1068 = vunpack.c.h.b16 %v411
        %v1069 = vunpack.c.l.b16 %v412
        %v1070 = vunpack.c.h.b16 %v412
        %v1071 = vunpack.c.l.b16 %v413
        %v1072 = vunpack.c.h.b16 %v413
        %v1073 = vunpack.c.l.b16 %v414
        %v1074 = vunpack.c.h.b16 %v414
        %v1075 = vunpack.c.l.b16 %v415
        %v1076 = vunpack.c.h.b16 %v415
        %v1077 = vunpack.c.l.b16 %v416
        %v1078 = vunpack.c.h.b16 %v416
        %v1079 = vunpack.c.l.b16 %v417
        %v1080 = vunpack.c.h.b16 %v417
        %v1081 = vunpack.c.l.b16 %v418
        %v1082 = vunpack.c.h.b16 %v418
        %v1083 = vunpack.c.l.b16 %v419
        %v1084 = vunpack.c.h.b16 %v419
        %v1085 = vunpack.c.l.b16 %v420
        %v1086 = vunpack.c.h.b16 %v420
        %v1087 = vunpack.c.l.b16 %v421
        %v1088 = vunpack.c.h.b16 %v421
        %v1089 = vunpack.c.l.b16 %v422
        %v1090 = vunpack.c.h.b16 %v422
        %v1091 = vunpack.c.l.b16 %v423
        %v1092 = vunpack.c.h.b16 %v423
        %v1093 = vunpack.c.l.b16 %v424
        %v1094 = vunpack.c.h.b16 %v424
        %v1095 = vunpack.c.l.b16 %v425
        %v1096 = vunpack.c.h.b16 %v425
        %v1097 = vunpack.c.l.b16 %v426
        %v1098 = vunpack.c.h.b16 %v426
        %v1099 = vunpack.c.l.b16 %v427
        %v1100 = vunpack.c.h.b16 %v427
        %v1101 = vunpack.c.l.b16 %v428
        %v1102 = vunpack.c.h.b16 %v428
        %v1103 = vunpack.c.l.b16 %v429
        %v1104 = vunpack.c.h.b16 %v429
        %v1105 = vunpack.c.l.b16 %v430
        %v1106 = vunpack.c.h.b16 %v430
        %v1107 = vunpack.c.l.b16 %v431
        %v1108 = vunpack.c.h.b16 %v431
        %v1109 = vunpack.c.l.b16 %v432
        %v1110 = vunpack.c.h.b16 %v432
        %v1111 = vunpack.c.l.b16 %v433
        %v1112 = vunpack.c.h.b16 %v433
        %v1113 = vunpack.c.l.b16 %v434
        %v1114 = vunpack.c.h.b16 %v434
        %v1115 = vunpack.c.l.b16 %v435
        %v1116 = vunpack.c.h.b16 %v435
        %v1117 = vunpack.c.l.b16 %v436
        %v1118 = vunpack.c.h.b16 %v436
        %v1119 = vunpack.c.l.b16 %v437
        %v1120 = vunpack.c.h.b16 %v437
        %v1121 = vunpack.c.l.b16 %v438
        %v1122 = vunpack.c.h.b16 %v438
        %v1123 = vunpack.c.l.b16 %v439
        %v1124 = vunpack.c.h.b16 %v439
        %v1125 = vunpack.c.l.b16 %v440
        %v1126 = vunpack.c.h.b16 %v440
        %v1127 = vunpack.c.l.b16 %v441
        %v1128 = vunpack.c.h.b16 %v441
        %v1129 = vunpack.c.l.b16 %v442
        %v1130 = vunpack.c.h.b16 %v442
        %v1131 = vunpack.c.l.b16 %v443
        %v1132 = vunpack.c.h.b16 %v443
        %v1133 = vunpack.c.l.b16 %v444
        %v1134 = vunpack.c.h.b16 %v444
        %v1135 = vunpack.c.l.b16 %v445
        %v1136 = vunpack.c.h.b16 %v445
        %v1137 = vunpack.c.l.b16 %v446
        %v1138 = vunpack.c.h.b16 %v446
        %v1139 = vunpack.c.l.b16 %v447
        %v1140 = vunpack.c.h.b16 %v447
        %v1141 = vunpack.c.l.b16 %v448
        %v1142 = vunpack.c.h.b16 %v448
        %v1143 = vunpack.c.l.b16 %v449
        %v1144 = vunpack.c.h.b16 %v449
        %v1145 = vunpack.c.l.b16 %v450
        %v1146 = vunpack.c.h.b16 %v450
        %v1147 = vunpack.c.l.b16 %v451
        %v1148 = vunpack.c.h.b16 %v451
        %v1149 = vunpack.c.l.b16 %v452
        %v1150 = vunpack.c.h.b16 %v452
        %v1151 = vunpack.c.l.b16 %v453
        %v1152 = vunpack.c.h.b16 %v453
        %v1153 = vunpack.c.l.b16 %v454
        %v1154 = vunpack.c.h.b16 %v454
        %v1155 = vunpack.c.l.b16 %v455
        %v1156 = vunpack.c.h.b16 %v455
        %v1157 = vunpack.c.l.b16 %v456
        %v1158 = vunpack.c.h.b16 %v456
        %v1159 = vunpack.c.l.b16 %v457
        %v1160 = vunpack.c.h.b16 %v457
        %v1161 = vunpack.c.l.b16 %v458
        %v1162 = vunpack.c.h.b16 %v458
        %v1163 = vunpack.c.l.b16 %v459
        %v1164 = vunpack.c.h.b16 %v459
        %v1165 = vunpack.c.l.b16 %v460
        %v1166 = vunpack.c.h.b16 %v460
        %v1167 = vunpack.c.l.b16 %v461
        %v1168 = vunpack.c.h.b16 %v461
        %v1169 = vunpack.c.l.b16 %v462
        %v1170 = vunpack.c.h.b16 %v462
        %v1171 = vunpack.c.l.b16 %v463
        %v1172 = vunpack.c.h.b16 %v463
        %v1173 = vunpack.c.l.b16 %v464
        %v1174 = vunpack.c.h.b16 %v464
        %v1175 = vunpack.c.l.b16 %v465
        %v1176 = vunpack.c.h.b16 %v465
        %v1177 = vunpack.c.l.b16 %v466
        %v1178 = vunpack.c.h.b16 %v466
        %v1179 = vunpack.c.l.b16 %v467
        %v1180 = vunpack.c.h.b16 %v467
        %v1181 = vunpack.c.l.b16 %v468
        %v1182 = vunpack.c.h.b16 %v468
        %v1183 = vunpack.c.l.b16 %v469
        %v1184 = vunpack.c.h.b16 %v469
        %v1185 = vunpack.c.l.b16 %v470
        %v1186 = vunpack.c.h.b16 %v470
        %v1187 = vunpack.c.l.b16 %v471
        %v1188 = vunpack.c.h.b16 %v471
        %v1189 = vunpack.c.l.b16 %v472
        %v1190 = vunpack.c.h.b16 %v472
        %v1191 = vunpack.c.l.b16 %v473
        %v1192 = vunpack.c.h.b16 %v473
        %v1193 = vunpack.c.l.b16 %v474
        %v1194 = vunpack.c.h.b16 %v474
        %v1195 = vunpack.c.l.b16 %v475
        %v1196 = vunpack.c.h.b16 %v475
        %v1197 = vunpack.c.l.b16 %v476
        %v1198 = vunpack.c.h.b16 %v476
        %v1199 = vunpack.c.l.b16 %v477
        %v1200 = vunpack.c.h.b16 %v477
        %v1201 = vunpack.c.l.b16 %v478
        %v1202 = vunpack.c.h.b16 %v478
        %v1203 = vunpack.c.l.b16 %v479
        %v1204 = vunpack.c.h.b16 %v479
        %v1205 = vunpack.c.l.b16 %v480
        %v1206 = vunpack.c.h.b16 %v480
        %v1207 = vunpack.c.l.b16 %v481
        %v1208 = vunpack.c.h.b16 %v481
        %v1209 = vunpack.c.l.b16 %v482
        %v1210 = vunpack.c.h.b16 %v482
        %v1211 = vunpack.c.l.b16 %v483
        %v1212 = vunpack.c.h.b16 %v483
        %v1213 = vunpack.c.l.b16 %v484
        %v1214 = vunpack.c.h.b16 %v484
        %v1215 = vunpack.c.l.b16 %v485
        %v1216 = vunpack.c.h.b16 %v485
        %v1217 = vunpack.c.l.b16 %v486
        %v1218 = vunpack.c.h.b16 %v486
        %v1219 = vunpack.c.l.b16 %v487
        %v1220 = vunpack.c.h.b16 %v487
        %v1221 = vunpack.c.l.b16 %v488
        %v1222 = vunpack.c.h.b16 %v488
        %v1223 = vunpack.c.l.b16 %v489
        %v1224 = vunpack.c.h.b16 %v489
        %v1225 = vunpack.c.l.b16 %v490
        %v1226 = vunpack.c.h.b16 %v490
        %v1227 = vunpack.c.l.b16 %v491
        %v1228 = vunpack.c.h.b16 %v491
        %v1229 = vunpack.c.l.b16 %v492
        %v1230 = vunpack.c.h.b16 %v492
        %v1231 = vunpack.c.l.b16 %v493
        %v1232 = vunpack.c.h.b16 %v493
        %v1233 = vunpack.c.l.b16 %v494
        %v1234 = vunpack.c.h.b16 %v494
        %v1235 = vunpack.c.l.b16 %v495
        %v1236 = vunpack.c.h.b16 %v495
        %v1237 = vunpack.c.l.b16 %v496
        %v1238 = vunpack.c.h.b16 %v496
        %v1239 = vunpack.c.l.b16 %v497
        %v1240 = vunpack.c.h.b16 %v497
        %v1241 = vunpack.c.l.b16 %v498
        %v1242 = vunpack.c.h.b16 %v498
        %v1243 = vunpack.c.l.b16 %v499
        %v1244 = vunpack.c.h.b16 %v499
        %v1245 = vunpack.c.l.b16 %v500
        %v1246 = vunpack.c.h.b16 %v500
        %v1247 = vunpack.c.l.b16 %v501
        %v1248 = vunpack.c.h.b16 %v501
        %v1249 = vunpack.c.l.b16 %v502
        %v1250 = vunpack.c.h.b16 %v502
        %v1251 = vunpack.c.l.b16 %v503
        %v1252 = vunpack.c.h.b16 %v503
        %v1253 = vunpack.c.l.b16 %v504
        %v1254 = vunpack.c.h.b16 %v504
        %v1255 = vunpack.c.l.b16 %v505
        %v1256 = vunpack.c.h.b16 %v505
        %v1257 = vunpack.c.l.b16 %v506
        %v1258 = vunpack.c.h.b16 %v506
        %v1259 = vunpack.c.l.b16 %v507
        %v1260 = vunpack.c.h.b16 %v507
        %v1261 = vunpack.c.l.b16 %v508
        %v1262 = vunpack.c.h.b16 %v508
        %v1263 = vunpack.c.l.b16 %v509
        %v1264 = vunpack.c.h.b16 %v509
        %v1265 = vunpack.c.l.b16 %v510
        %v1266 = vunpack.c.h.b16 %v510
        %v1267 = vunpack.c.l.b16 %v511
        %v1268 = vunpack.c.h.b16 %v511
        %v1269 = vunpack.c.l.b16 %v512
        %v1270 = vunpack.c.h.b16 %v512
        %v1271 = vunpack.c.l.b16 %v513
        %v1272 = vunpack.c.h.b16 %v513
        %v1273 = vunpack.c.l.b16 %v514
        %v1274 = vunpack.c.h.b16 %v514
        %v1275 = vunpack.c.l.b16 %v515
        %v1276 = vunpack.c.h.b16 %v515
        %v1277 = vunpack.c.l.b16 %v516
        %v1278 = vunpack.c.h.b16 %v516
        %v1279 = vunpack.c.l.b16 %v517
        %v1280 = vunpack.c.h.b16 %v517
        %v1281 = vunpack.c.l.b16 %v518
        %v1282 = vunpack.c.h.b16 %v518
        %v1283 = vunpack.c.l.b16 %v519
        %v1284 = vunpack.c.h.b16 %v519
        %v1285 = vunpack.c.l.b16 %v520
        %v1286 = vunpack.c.h.b16 %v520
        %v1287 = vunpack.c.l.b16 %v521
        %v1288 = vunpack.c.h.b16 %v521
        %v1289 = vunpack.c.l.b16 %v522
        %v1290 = vunpack.c.h.b16 %v522
        %v1291 = vunpack.c.l.b16 %v523
        %v1292 = vunpack.c.h.b16 %v523
        %v1293 = vunpack.c.l.b16 %v524
        %v1294 = vunpack.c.h.b16 %v524
        %v1295 = vunpack.c.l.b16 %v525
        %v1296 = vunpack.c.h.b16 %v525
        %v1297 = vunpack.c.l.b16 %v526
        %v1298 = vunpack.c.h.b16 %v526
        %v1299 = vunpack.c.l.b16 %v527
        %v1300 = vunpack.c.h.b16 %v527
        %v1301 = vunpack.c.l.b16 %v528
        %v1302 = vunpack.c.h.b16 %v528
        %v1303 = vunpack.c.l.b16 %v529
        %v1304 = vunpack.c.h.b16 %v529
        %v1305 = vunpack.c.l.b16 %v530
        %v1306 = vunpack.c.h.b16 %v530
        %v1307 = vunpack.c.l.b16 %v531
        %v1308 = vunpack.c.h.b16 %v531
        %v1309 = vunpack.c.l.b16 %v532
        %v1310 = vunpack.c.h.b16 %v532
        %v1311 = vunpack.c.l.b16 %v533
        %v1312 = vunpack.c.h.b16 %v533
        %v1313 = vunpack.c.l.b16 %v534
        %v1314 = vunpack.c.h.b16 %v534
        %v1315 = vunpack.c.l.b16 %v535
        %v1316 = vunpack.c.h.b16 %v535
        %v1317 = vunpack.c.l.b16 %v536
        %v1318 = vunpack.c.h.b16 %v536
        %v1319 = vunpack.c.l.b16 %v537
        %v1320 = vunpack.c.h.b16 %v537
        %v1321 = vunpack.c.l.b16 %v538
        %v1322 = vunpack.c.h.b16 %v538
        %v1323 = vunpack.c.l.b16 %v539
        %v1324 = vunpack.c.h.b16 %v539
        %v1325 = vunpack.c.l.b16 %v540
        %v1326 = vunpack.c.h.b16 %v540
        %v1327 = vunpack.c.l.b16 %v541
        %v1328 = vunpack.c.h.b16 %v541
        %v1329 = vunpack.c.l.b16 %v542
        %v1330 = vunpack.c.h.b16 %v542
        %v1331 = vunpack.c.l.b16 %v543
        %v1332 = vunpack.c.h.b16 %v543
        %v1333 = vunpack.c.l.b16 %v544
        %v1334 = vunpack.c.h.b16 %v544
        %v1335 = vunpack.c.l.b16 %v545
        %v1336 = vunpack.c.h.b16 %v545
        %v1337 = vunpack.c.l.b16 %v546
        %v1338 = vunpack.c.h.b16 %v546
        %v1339 = vunpack.c.l.b16 %v547
        %v1340 = vunpack.c.h.b16 %v547
        %v1341 = vunpack.c.l.b16 %v548
        %v1342 = vunpack.c.h.b16 %v548
        %v1343 = vunpack.c.l.b16 %v549
        %v1344 = vunpack.c.h.b16 %v549
        %v1345 = vunpack.c.l.b16 %v550
        %v1346 = vunpack.c.h.b16 %v550
        %v1347 = vunpack.c.l.b16 %v551
        %v1348 = vunpack.c.h.b16 %v551
        %v1349 = vunpack.c.l.b16 %v552
        %v1350 = vunpack.c.h.b16 %v552
        %v1351 = vunpack.c.l.b16 %v553
        %v1352 = vunpack.c.h.b16 %v553
        %v1353 = vunpack.c.l.b16 %v554
        %v1354 = vunpack.c.h.b16 %v554
        %v1355 = vunpack.c.l.b16 %v555
        %v1356 = vunpack.c.h.b16 %v555
        %v1357 = vunpack.c.l.b16 %v556
        %v1358 = vunpack.c.h.b16 %v556
        %v1359 = vunpack.c.l.b16 %v557
        %v1360 = vunpack.c.h.b16 %v557
        %v1361 = vunpack.c.l.b16 %v558
        %v1362 = vunpack.c.h.b16 %v558
        %v1363 = vunpack.c.l.b16 %v559
        %v1364 = vunpack.c.h.b16 %v559
        %v1365 = vunpack.c.l.b16 %v560
        %v1366 = vunpack.c.h.b16 %v560
        %v1367 = vunpack.c.l.b16 %v561
        %v1368 = vunpack.c.h.b16 %v561
        %v1369 = vunpack.c.l.b16 %v562
        %v1370 = vunpack.c.h.b16 %v562
        %v1371 = vunpack.c.l.b16 %v563
        %v1372 = vunpack.c.h.b16 %v563
        %v1373 = vunpack.c.l.b16 %v564
        %v1374 = vunpack.c.h.b16 %v564
        %v1375 = vunpack.c.l.b16 %v565
        %v1376 = vunpack.c.h.b16 %v565
        %v1377 = vunpack.c.l.b16 %v566
        %v1378 = vunpack.c.h.b16 %v566
        %v1379 = vunpack.c.l.b16 %v567
        %v1380 = vunpack.c.h.b16 %v567
        %v1381 = vunpack.c.l.b16 %v568
        %v1382 = vunpack.c.h.b16 %v568
        %v1383 = vunpack.c.l.b16 %v569
        %v1384 = vunpack.c.h.b16 %v569
        %v1385 = vunpack.c.l.b16 %v570
        %v1386 = vunpack.c.h.b16 %v570
        %v1387 = vunpack.c.l.b16 %v571
        %v1388 = vunpack.c.h.b16 %v571
        %v1389 = vunpack.c.l.b16 %v572
        %v1390 = vunpack.c.h.b16 %v572
        %v1391 = vunpack.c.l.b16 %v573
        %v1392 = vunpack.c.h.b16 %v573
        %v1393 = vunpack.c.l.b16 %v574
        %v1394 = vunpack.c.h.b16 %v574
        %v1395 = vunpack.c.l.b16 %v575
        %v1396 = vunpack.c.h.b16 %v575
        %v1397 = vunpack.c.l.b16 %v576
        %v1398 = vunpack.c.h.b16 %v576
        %v1399 = vunpack.c.l.b16 %v577
        %v1400 = vunpack.c.h.b16 %v577
        %v1401 = vunpack.c.l.b16 %v578
        %v1402 = vunpack.c.h.b16 %v578
        %v1403 = vunpack.c.l.b16 %v579
        %v1404 = vunpack.c.h.b16 %v579
        %v1405 = vunpack.c.l.b16 %v580
        %v1406 = vunpack.c.h.b16 %v580
        %v1407 = vunpack.c.l.b16 %v581
        %v1408 = vunpack.c.h.b16 %v581
        %v1409 = vunpack.c.l.b16 %v582
        %v1410 = vunpack.c.h.b16 %v582
        %v1411 = vunpack.c.l.b16 %v583
        %v1412 = vunpack.c.h.b16 %v583
        %v1413 = vunpack.c.l.b16 %v584
        %v1414 = vunpack.c.h.b16 %v584
        %v1415 = vunpack.c.l.b16 %v585
        %v1416 = vunpack.c.h.b16 %v585
        %v1417 = vunpack.c.l.b16 %v586
        %v1418 = vunpack.c.h.b16 %v586
        %v1419 = vunpack.c.l.b16 %v587
        %v1420 = vunpack.c.h.b16 %v587
        %v1421 = vunpack.c.l.b16 %v588
        %v1422 = vunpack.c.h.b16 %v588
        %v1423 = vunpack.c.l.b16 %v589
        %v1424 = vunpack.c.h.b16 %v589
        %v1425 = vunpack.c.l.b16 %v590
        %v1426 = vunpack.c.h.b16 %v590
        %v1427 = vunpack.c.l.b16 %v591
        %v1428 = vunpack.c.h.b16 %v591
        %v1429 = vunpack.c.l.b16 %v592
        %v1430 = vunpack.c.h.b16 %v592
        %v1431 = vunpack.c.l.b16 %v593
        %v1432 = vunpack.c.h.b16 %v593
        %v1433 = vunpack.c.l.b16 %v594
        %v1434 = vunpack.c.h.b16 %v594
        %v1435 = vunpack.c.l.b16 %v595
        %v1436 = vunpack.c.h.b16 %v595
        %v1437 = vunpack.c.l.b16 %v596
        %v1438 = vunpack.c.h.b16 %v596
        %v1439 = vunpack.c.l.b16 %v597
        %v1440 = vunpack.c.h.b16 %v597
        %v1441 = vunpack.c.l.b16 %v598
        %v1442 = vunpack.c.h.b16 %v598
        %v1443 = vunpack.c.l.b16 %v599
        %v1444 = vunpack.c.h.b16 %v599
        %v1445 = vunpack.c.l.b16 %v600
        %v1446 = vunpack.c.h.b16 %v600
        %v1447 = vunpack.c.l.b16 %v601
        %v1448 = vunpack.c.h.b16 %v601
        %v1449 = vunpack.c.l.b16 %v602
        %v1450 = vunpack.c.h.b16 %v602
        %v1451 = vunpack.c.l.b16 %v603
        %v1452 = vunpack.c.h.b16 %v603
        %v1453 = vunpack.c.l.b16 %v604
        %v1454 = vunpack.c.h.b16 %v604
        %v1455 = vunpack.c.l.b16 %v605
        %v1456 = vunpack.c.h.b16 %v605
        %v1457 = vunpack.c.l.b16 %v606
        %v1458 = vunpack.c.h.b16 %v606
        %v1459 = vunpack.c.l.b16 %v607
        %v1460 = vunpack.c.h.b16 %v607
        %v1461 = vunpack.c.l.b16 %v608
        %v1462 = vunpack.c.h.b16 %v608
        %v1463 = vunpack.c.l.b16 %v609
        %v1464 = vunpack.c.h.b16 %v609
        %v1465 = vunpack.c.l.b16 %v610
        %v1466 = vunpack.c.h.b16 %v610
        %v1467 = vunpack.c.l.b16 %v611
        %v1468 = vunpack.c.h.b16 %v611
        %v1469 = vunpack.c.l.b16 %v612
        %v1470 = vunpack.c.h.b16 %v612
        %v1471 = vunpack.c.l.b16 %v613
        %v1472 = vunpack.c.h.b16 %v613
        %v1473 = vunpack.c.l.b16 %v614
        %v1474 = vunpack.c.h.b16 %v614
        %v1475 = vunpack.c.l.b16 %v615
        %v1476 = vunpack.c.h.b16 %v615
        %v1477 = vunpack.c.l.b16 %v616
        %v1478 = vunpack.c.h.b16 %v616
        %v1479 = vunpack.c.l.b16 %v617
        %v1480 = vunpack.c.h.b16 %v617
        %v1481 = vunpack.c.l.b16 %v618
        %v1482 = vunpack.c.h.b16 %v618
        %v1483 = vunpack.c.l.b16 %v619
        %v1484 = vunpack.c.h.b16 %v619
        %v1485 = vunpack.c.l.b16 %v620
        %v1486 = vunpack.c.h.b16 %v620
        %v1487 = vunpack.c.l.b16 %v621
        %v1488 = vunpack.c.h.b16 %v621
        %v1489 = vunpack.c.l.b16 %v622
        %v1490 = vunpack.c.h.b16 %v622
        %v1491 = vunpack.c.l.b16 %v623
        %v1492 = vunpack.c.h.b16 %v623
        %v1493 = vunpack.c.l.b16 %v624
        %v1494 = vunpack.c.h.b16 %v624
        %v1495 = vunpack.c.l.b16 %v625
        %v1496 = vunpack.c.h.b16 %v625
        %v1497 = vunpack.c.l.b16 %v626
        %v1498 = vunpack.c.h.b16 %v626
        %v1499 = vunpack.c.l.b16 %v627
        %v1500 = vunpack.c.h.b16 %v627
        %v1501 = vunpack.c.l.b16 %v628
        %v1502 = vunpack.c.h.b16 %v628
        %v1503 = vunpack.c.l.b16 %v629
        %v1504 = vunpack.c.h.b16 %v629
        %v1505 = vunpack.c.l.b16 %v630
        %v1506 = vunpack.c.h.b16 %v630
        %v1507 = vunpack.c.l.b16 %v631
        %v1508 = vunpack.c.h.b16 %v631
        %v1509 = vunpack.c.l.b16 %v632
        %v1510 = vunpack.c.h.b16 %v632
        %v1511 = vunpack.c.l.b16 %v633
        %v1512 = vunpack.c.h.b16 %v633
        %v1513 = vunpack.c.l.b16 %v634
        %v1514 = vunpack.c.h.b16 %v634
        %v1515 = vunpack.c.l.b16 %v635
        %v1516 = vunpack.c.h.b16 %v635
        %v1517 = vunpack.c.l.b16 %v636
        %v1518 = vunpack.c.h.b16 %v636
        %v1519 = vunpack.c.l.b16 %v637
        %v1520 = vunpack.c.h.b16 %v637
        %v1521 = vunpack.c.l.b16 %v638
        %v1522 = vunpack.c.h.b16 %v638
        %v1523 = vunpack.c.l.b16 %v639
        %v1524 = vunpack.c.h.b16 %v639
        %v1525 = vunpack.c.l.b16 %v640
        %v1526 = vunpack.c.h.b16 %v640
        %v1527 = vunpack.c.l.b16 %v641
        %v1528 = vunpack.c.h.b16 %v641
        %v1529 = vunpack.c.l.b16 %v642
        %v1530 = vunpack.c.h.b16 %v642
        %v1531 = vunpack.c.l.b16 %v643
        %v1532 = vunpack.c.h.b16 %v643
        %v1533 = vunpack.c.l.b16 %v644
        %v1534 = vunpack.c.h.b16 %v644
        %v1535 = vunpack.c.l.b16 %v645
        %v1536 = vunpack.c.h.b16 %v645
        %v1537 = vunpack.c.l.b16 %v646
        %v1538 = vunpack.c.h.b16 %v646
        %v1539 = vunpack.c.l.b16 %v647
        %v1540 = vunpack.c.h.b16 %v647
        %v1541 = vunpack.c.l.b16 %v648
        %v1542 = vunpack.c.h.b16 %v648
        %v1543 = vunpack.c.l.b16 %v649
        %v1544 = vunpack.c.h.b16 %v649
        %v1545 = vunpack.c.l.b16 %v650
        %v1546 = vunpack.c.h.b16 %v650
        %v1547 = vunpack.c.l.b16 %v651
        %v1548 = vunpack.c.h.b16 %v651
        %v1549 = vunpack.c.l.b16 %v652
        %v1550 = vunpack.c.h.b16 %v652
        %v1551 = vunpack.c.l.b16 %v653
        %v1552 = vunpack.c.h.b16 %v653
        %v1553 = vunpack.c.l.b16 %v654
        %v1554 = vunpack.c.h.b16 %v654
        %v1555 = vunpack.c.l.b16 %v655
        %v1556 = vunpack.c.h.b16 %v655
        %v1557 = vunpack.c.l.b16 %v656
        %v1558 = vunpack.c.h.b16 %v656
        %v1559 = vunpack.c.l.b16 %v657
        %v1560 = vunpack.c.h.b16 %v657
        %v1561 = vunpack.c.l.b16 %v658
        %v1562 = vunpack.c.h.b16 %v658
        %v1563 = vunpack.c.l.b16 %v659
        %v1564 = vunpack.c.h.b16 %v659
        %v1565 = vunpack.c.l.b16 %v660
        %v1566 = vunpack.c.h.b16 %v660
        %v1567 = vunpack.c.l.b16 %v661
        %v1568 = vunpack.c.h.b16 %v661
        %v1569 = vunpack.c.l.b16 %v662
        %v1570 = vunpack.c.h.b16 %v662
        %v1571 = vunpack.c.l.b16 %v663
        %v1572 = vunpack.c.h.b16 %v663
        %v1573 = vunpack.c.l.b16 %v664
        %v1574 = vunpack.c.h.b16 %v664
        %v1575 = vunpack.c.l.b16 %v665
        %v1576 = vunpack.c.h.b16 %v665
        %v1577 = vunpack.c.l.b16 %v666
        %v1578 = vunpack.c.h.b16 %v666
        %v1579 = vunpack.c.l.b16 %v667
        %v1580 = vunpack.c.h.b16 %v667
        %v1581 = vunpack.c.l.b16 %v668
        %v1582 = vunpack.c.h.b16 %v668
        %v1583 = vunpack.c.l.b16 %v669
        %v1584 = vunpack.c.h.b16 %v669
        %v1585 = vunpack.c.l.b16 %v670
        %v1586 = vunpack.c.h.b16 %v670
        %v1587 = vunpack.c.l.b16 %v671
        %v1588 = vunpack.c.h.b16 %v671
        %v1589 = vunpack.c.l.b16 %v672
        %v1590 = vunpack.c.h.b16 %v672
        %v1591 = vunpack.c.l.b16 %v673
        %v1592 = vunpack.c.h.b16 %v673
        %v1593 = vunpack.c.l.b16 %v674
        %v1594 = vunpack.c.h.b16 %v674
        %v1595 = vunpack.c.l.b16 %v675
        %v1596 = vunpack.c.h.b16 %v675
        %v1597 = vunpack.c.l.b16 %v676
        %v1598 = vunpack.c.h.b16 %v676
        %v1599 = vunpack.c.l.b16 %v677
        %v1600 = vunpack.c.h.b16 %v677
        %v1601 = vunpack.c.l.b16 %v678
        %v1602 = vunpack.c.h.b16 %v678
        %v1603 = vunpack.c.l.b16 %v679
        %v1604 = vunpack.c.h.b16 %v679
        %v1605 = vunpack.c.l.b16 %v680
        %v1606 = vunpack.c.h.b16 %v680
        %v1607 = vunpack.c.l.b16 %v681
        %v1608 = vunpack.c.h.b16 %v681
        %v1609 = vunpack.c.l.b16 %v682
        %v1610 = vunpack.c.h.b16 %v682
        %v1611 = vunpack.c.l.b16 %v683
        %v1612 = vunpack.c.h.b16 %v683
        %v1613 = vunpack.c.l.b16 %v684
        %v1614 = vunpack.c.h.b16 %v684
        %v1615 = vunpack.c.l.b16 %v685
        %v1616 = vunpack.c.h.b16 %v685
        %v1617 = vunpack.c.l.b16 %v686
        %v1618 = vunpack.c.h.b16 %v686
        %v1619 = vunpack.c.l.b16 %v687
        %v1620 = vunpack.c.h.b16 %v687
        %v1621 = vunpack.c.l.b16 %v688
        %v1622 = vunpack.c.h.b16 %v688
        %v1623 = vunpack.c.l.b16 %v689
        %v1624 = vunpack.c.h.b16 %v689
        %v1625 = vunpack.c.l.b16 %v690
        %v1626 = vunpack.c.h.b16 %v690
        %v1627 = vunpack.c.l.b16 %v691
        %v1628 = vunpack.c.h.b16 %v691
        %v1629 = vunpack.c.l.b16 %v692
        %v1630 = vunpack.c.h.b16 %v692
        %v1631 = vpack.c.b16 %v1061, %v1055
        %v1632 = vpack.c.b16 %v1062, %v1056
        %v1633 = vpack.c.b16 %v1063, %v1057
        %v1634 = vpack.c.b16 %v1064, %v1058
        %v1635 = vpack.c.b16 %v1065, %v1059
        %v1636 = vpack.c.b16 %v1066, %v1060
        %v1637 = vpack.c.b16 %v1073, %v1067
        %v1638 = vpack.c.b16 %v1074, %v1068
        %v1639 = vpack.c.b16 %v1075, %v1069
        %v1640 = vpack.c.b16 %v1076, %v1070
        %v1641 = vpack.c.b16 %v1077, %v1071
        %v1642 = vpack.c.b16 %v1078, %v1072
        %v1643 = vpack.c.b16 %v1085, %v1079
        %v1644 = vpack.c.b16 %v1086, %v1080
        %v1645 = vpack.c.b16 %v1087, %v1081
        %v1646 = vpack.c.b16 %v1088, %v1082
        %v1647 = vpack.c.b16 %v1089, %v1083
        %v1648 = vpack.c.b16 %v1090, %v1084
        %v1649 = vpack.c.b16 %v1097, %v1091
        %v1650 = vpack.c.b16 %v1098, %v1092
        %v1651 = vpack.c.b16 %v1099, %v1093
        %v1652 = vpack.c.b16 %v1100, %v1094
        %v1653 = vpack.c.b16 %v1101, %v1095
        %v1654 = vpack.c.b16 %v1102, %v1096
        %v1655 = vpack.c.b16 %v1109, %v1103
        %v1656 = vpack.c.b16 %v1110, %v1104
        %v1657 = vpack.c.b16 %v1111, %v1105
        %v1658 = vpack.c.b16 %v1112, %v1106
        %v1659 = vpack.c.b16 %v1113, %v1107
        %v1660 = vpack.c.b16 %v1114, %v1108
        %v1661 = vpack.c.b16 %v1121, %v1115
        %v1662 = vpack.c.b16 %v1122, %v1116
        %v1663 = vpack.c.b16 %v1123, %v1117
        %v1664 = vpack.c.b16 %v1124, %v1118
        %v1665 = vpack.c.b16 %v1125, %v1119
        %v1666 = vpack.c.b16 %v1126, %v1120
        %v1667 = vpack.c.b16 %v1133, %v1127
        %v1668 = vpack.c.b16 %v1134, %v1128
        %v1669 = vpack.c.b16 %v1135, %v1129
        %v1670 = vpack.c.b16 %v1136, %v1130
        %v1671 = vpack.c.b16 %v1137, %v1131
        %v1672 = vpack.c.b16 %v1138, %v1132
        %v1673 = vpack.c.b16 %v1145, %v1139
        %v1674 = vpack.c.b16 %v1146, %v1140
        %v1675 = vpack.c.b16 %v1147, %v1141
        %v1676 = vpack.c.b16 %v1148, %v1142
        %v1677 = vpack.c.b16 %v1149, %v1143
        %v1678 = vpack.c.b16 %v1150, %v1144
        %v1679 = vpack.c.b16 %v1157, %v1151
        %v1680 = vpack.c.b16 %v1158, %v1152
        %v1681 = vpack.c.b16 %v1159, %v1153
        %v1682 = vpack.c.b16 %v1160, %v1154
        %v1683 = vpack.c.b16 %v1161, %v1155
        %v1684 = vpack.c.b16 %v1162, %v1156
        %v1685 = vpack.c.b16 %v1169, %v1163
        %v1686 = vpack.c.b16 %v1170, %v1164
        %v1687 = vpack.c.b16 %v1171, %v1165
        %v1688 = vpack.c.b16 %v1172, %v1166
        %v1689 = vpack.c.b16 %v1173, %v1167
        %v1690 = vpack.c.b16 %v1174, %v1168
        %v1691 = vpack.c.b16 %v1181, %v1175
        %v1692 = vpack.c.b16 %v1182, %v1176
        %v1693 = vpack.c.b16 %v1183, %v1177
        %v1694 = vpack.c.b16 %v1184, %v1178
        %v1695 = vpack.c.b16 %v1185, %v1179
        %v1696 = vpack.c.b16 %v1186, %v1180
        %v1697 = vpack.c.b16 %v1193, %v1187
        %v1698 = vpack.c.b16 %v1194, %v1188
        %v1699 = vpack.c.b16 %v1195, %v1189
        %v1700 = vpack.c.b16 %v1196, %v1190
        %v1701 = vpack.c.b16 %v1197, %v1191
        %v1702 = vpack.c.b16 %v1198, %v1192
        %v1703 = vpack.c.b16 %v1205, %v1199
        %v1704 = vpack.c.b16 %v1206, %v1200
        %v1705 = vpack.c.b16 %v1207, %v1201
        %v1706 = vpack.c.b16 %v1208, %v1202
        %v1707 = vpack.c.b16 %v1209, %v1203
        %v1708 = vpack.c.b16 %v1210, %v1204
        %v1709 = vpack.c.b16 %v1217, %v1211
        %v1710 = vpack.c.b16 %v1218, %v1212
        %v1711 = vpack.c.b16 %v1219, %v1213
        %v1712 = vpack.c.b16 %v1220, %v1214
        %v1713 = vpack.c.b16 %v1221, %v1215
        %v1714 = vpack.c.b16 %v1222, %v1216
        %v1715 = vpack.c.b16 %v1229, %v1223
        %v1716 = vpack.c.b16 %v1230, %v1224
        %v1717 = vpack.c.b16 %v1231, %v1225
        %v1718 = vpack.c.b16 %v1232, %v1226
        %v1719 = vpack.c.b16 %v1233, %v1227
        %v1720 = vpack.c.b16 %v1234, %v1228
        %v1721 = vpack.c.b16 %v1241, %v1235
        %v1722 = vpack.c.b16 %v1242, %v1236
        %v1723 = vpack.c.b16 %v1243, %v1237
        %v1724 = vpack.c.b16 %v1244, %v1238
        %v1725 = vpack.c.b16 %v1245, %v1239
        %v1726 = vpack.c.b16 %v1246, %v1240
        %v1727 = vpack.c.b16 %v1253, %v1247
        %v1728 = vpack.c.b16 %v1254, %v1248
        %v1729 = vpack.c.b16 %v1255, %v1249
        %v1730 = vpack.c.b16 %v1256, %v1250
        %v1731 = vpack.c.b16 %v1257, %v1251
        %v1732 = vpack.c.b16 %v1258, %v1252
        %v1733 = vpack.c.b16 %v1265, %v1259
        %v1734 = vpack.c.b16 %v1266, %v1260
        %v1735 = vpack.c.b16 %v1267, %v1261
        %v1736 = vpack.c.b16 %v1268, %v1262
        %v1737 = vpack.c.b16 %v1269, %v1263
        %v1738 = vpack.c.b16 %v1270, %v1264
        %v1739 = vpack.c.b16 %v1277, %v1271
        %v1740 = vpack.c.b16 %v1278, %v1272
        %v1741 = vpack.c.b16 %v1279, %v1273
        %v1742 = vpack.c.b16 %v1280, %v1274
        %v1743 = vpack.c.b16 %v1281, %v1275
        %v1744 = vpack.c.b16 %v1282, %v1276
        %v1745 = vpack.c.b16 %v1289, %v1283
        %v1746 = vpack.c.b16 %v1290, %v1284
        %v1747 = vpack.c.b16 %v1291, %v1285
        %v1748 = vpack.c.b16 %v1292, %v1286
        %v1749 = vpack.c.b16 %v1293, %v1287
        %v1750 = vpack.c.b16 %v1294, %v1288
        %v1751 = vpack.c.b16 %v1301, %v1295
        %v1752 = vpack.c.b16 %v1302, %v1296
        %v1753 = vpack.c.b16 %v1303, %v1297
        %v1754 = vpack.c.b16 %v1304, %v1298
        %v1755 = vpack.c.b16 %v1305, %v1299
        %v1756 = vpack.c.b16 %v1306, %v1300
        %v1757 = vpack.c.b16 %v1313, %v1307
        %v1758 = vpack.c.b16 %v1314, %v1308
        %v1759 = vpack.c.b16 %v1315, %v1309
        %v1760 = vpack.c.b16 %v1316, %v1310
        %v1761 = vpack.c.b16 %v1317, %v1311
        %v1762 = vpack.c.b16 %v1318, %v1312
        %v1763 = vpack.c.b16 %v1325, %v1319
        %v1764 = vpack.c.b16 %v1326, %v1320
        %v1765 = vpack.c.b16 %v1327, %v1321
        %v1766 = vpack.c.b16 %v1328, %v1322
        %v1767 = vpack.c.b16 %v1329, %v1323
        %v1768 = vpack.c.b16 %v1330, %v1324
        %v1769 = vpack.c.b16 %v1337, %v1331
        %v1770 = vpack.c.b16 %v1338, %v1332
        %v1771 = vpack.c.b16 %v1339, %v1333
        %v1772 = vpack.c.b16 %v1340, %v1334
        %v1773 = vpack.c.b16 %v1341, %v1335
        %v1774 = vpack.c.b16 %v1342, %v1336
        %v1775 = vpack.c.b16 %v1349, %v1343
        %v1776 = vpack.c.b16 %v1350, %v1344
        %v1777 = vpack.c.b16 %v1351, %v1345
        %v1778 = vpack.c.b16 %v1352, %v1346
        %v1779 = vpack.c.b16 %v1353, %v1347
        %v1780 = vpack.c.b16 %v1354, %v1348
        %v1781 = vpack.c.b16 %v1361, %v1355
        %v1782 = vpack.c.b16 %v1362, %v1356
        %v1783 = vpack.c.b16 %v1363, %v1357
        %v1784 = vpack.c.b16 %v1364, %v1358
        %v1785 = vpack.c.b16 %v1365, %v1359
        %v1786 = vpack.c.b16 %v1366, %v1360
        %v1787 = vpack.c.b16 %v1373, %v1367
        %v1788 = vpack.c.b16 %v1374, %v1368
        %v1789 = vpack.c.b16 %v1375, %v1369
        %v1790 = vpack.c.b16 %v1376, %v1370
        %v1791 = vpack.c.b16 %v1377, %v1371
        %v1792 = vpack.c.b16 %v1378, %v1372
        %v1793 = vpack.c.b16 %v1385, %v1379
        %v1794 = vpack.c.b16 %v1386, %v1380
        %v1795 = vpack.c.b16 %v1387, %v1381
        %v1796 = vpack.c.b16 %v1388, %v1382
        %v1797 = vpack.c.b16 %v1389, %v1383
        %v1798 = vpack.c.b16 %v1390, %v1384
        %v1799 = vpack.c.b16 %v1397, %v1391
        %v1800 = vpack.c.b16 %v1398, %v1392
        %v1801 = vpack.c.b16 %v1399, %v1393
        %v1802 = vpack.c.b16 %v1400, %v1394
        %v1803 = vpack.c.b16 %v1401, %v1395
        %v1804 = vpack.c.b16 %v1402, %v1396
        %v1805 = vpack.c.b16 %v1409, %v1403
        %v1806 = vpack.c.b16 %v1410, %v1404
        %v1807 = vpack.c.b16 %v1411, %v1405
        %v1808 = vpack.c.b16 %v1412, %v1406
        %v1809 = vpack.c.b16 %v1413, %v1407
        %v1810 = vpack.c.b16 %v1414, %v1408
        %v1811 = vpack.c.b16 %v1421, %v1415
        %v1812 = vpack.c.b16 %v1422, %v1416
        %v1813 = vpack.c.b16 %v1423, %v1417
        %v1814 = vpack.c.b16 %v1424, %v1418
        %v1815 = vpack.c.b16 %v1425, %v1419
        %v1816 = vpack.c.b16 %v1426, %v1420
        %v1817 = vpack.c.b16 %v1433, %v1427
        %v1818 = vpack.c.b16 %v1434, %v1428
        %v1819 = vpack.c.b16 %v1435, %v1429
        %v1820 = vpack.c.b16 %v1436, %v1430
        %v1821 = vpack.c.b16 %v1437, %v1431
        %v1822 = vpack.c.b16 %v1438, %v1432
        %v1823 = vpack.c.b16 %v1445, %v1439
        %v1824 = vpack.c.b16 %v1446, %v1440
        %v1825 = vpack.c.b16 %v1447, %v1441
        %v1826 = vpack.c.b16 %v1448, %v1442
        %v1827 = vpack.c.b16 %v1449, %v1443
        %v1828 = vpack.c.b16 %v1450, %v1444
        %v1829 = vpack.c.b16 %v1457, %v1451
        %v1830 = vpack.c.b16 %v1458, %v1452
        %v1831 = vpack.c.b16 %v1459, %v1453
        %v1832 = vpack.c.b16 %v1460, %v1454
        %v1833 = vpack.c.b16 %v1461, %v1455
        %v1834 = vpack.c.b16 %v1462, %v1456
        %v1835 = vpack.c.b16 %v1469, %v1463
        %v1836 = vpack.c.b16 %v1470, %v1464
        %v1837 = vpack.c.b16 %v1471, %v1465
        %v1838 = vpack.c.b16 %v1472, %v1466
        %v1839 = vpack.c.b16 %v1473, %v1467
        %v1840 = vpack.c.b16 %v1474, %v1468
        %v1841 = vpack.c.b16 %v1481, %v1475
        %v1842 = vpack.c.b16 %v1482, %v1476
        %v1843 = vpack.c.b16 %v1483, %v1477
        %v1844 = vpack.c.b16 %v1484, %v1478
        %v1845 = vpack.c.b16 %v1485, %v1479
        %v1846 = vpack.c.b16 %v1486, %v1480
        %v1847 = vpack.c.b16 %v1493, %v1487
        %v1848 = vpack.c.b16 %v1494, %v1488
        %v1849 = vpack.c.b16 %v1495, %v1489
        %v1850 = vpack.c.b16 %v1496, %v1490
        %v1851 = vpack.c.b16 %v1497, %v1491
        %v1852 = vpack.c.b16 %v1498, %v1492
        %v1853 = vpack.c.b16 %v1505, %v1499
        %v1854 = vpack.c.b16 %v1506, %v1500
        %v1855 = vpack.c.b16 %v1507, %v1501
        %v1856 = vpack.c.b16 %v1508, %v1502
        %v1857 = vpack.c.b16 %v1509, %v1503
        %v1858 = vpack.c.b16 %v1510, %v1504
        %v1859 = vpack.c.b16 %v1517, %v1511
        %v1860 = vpack.c.b16 %v1518, %v1512
        %v1861 = vpack.c.b16 %v1519, %v1513
        %v1862 = vpack.c.b16 %v1520, %v1514
        %v1863 = vpack.c.b16 %v1521, %v1515
        %v1864 = vpack.c.b16 %v1522, %v1516
        %v1865 = vpack.c.b16 %v1529, %v1523
        %v1866 = vpack.c.b16 %v1530, %v1524
        %v1867 = vpack.c.b16 %v1531, %v1525
        %v1868 = vpack.c.b16 %v1532, %v1526
        %v1869 = vpack.c.b16 %v1533, %v1527
        %v1870 = vpack.c.b16 %v1534, %v1528
        %v1871 = vpack.c.b16 %v1541, %v1535
        %v1872 = vpack.c.b16 %v1542, %v1536
        %v1873 = vpack.c.b16 %v1543, %v1537
        %v1874 = vpack.c.b16 %v1544, %v1538
        %v1875 = vpack.c.b16 %v1545, %v1539
        %v1876 = vpack.c.b16 %v1546, %v1540
        %v1877 = vpack.c.b16 %v1553, %v1547
        %v1878 = vpack.c.b16 %v1554, %v1548
        %v1879 = vpack.c.b16 %v1555, %v1549
        %v1880 = vpack.c.b16 %v1556, %v1550
        %v1881 = vpack.c.b16 %v1557, %v1551
        %v1882 = vpack.c.b16 %v1558, %v1552
        %v1883 = vpack.c.b16 %v1565, %v1559
        %v1884 = vpack.c.b16 %v1566, %v1560
        %v1885 = vpack.c.b16 %v1567, %v1561
        %v1886 = vpack.c.b16 %v1568, %v1562
        %v1887 = vpack.c.b16 %v1569, %v1563
        %v1888 = vpack.c.b16 %v1570, %v1564
        %v1889 = vpack.c.b16 %v1577, %v1571
        %v1890 = vpack.c.b16 %v1578, %v1572
        %v1891 = vpack.c.b16 %v1579, %v1573
        %v1892 = vpack.c.b16 %v1580, %v1574
        %v1893 = vpack.c.b16 %v1581, %v1575
        %v1894 = vpack.c.b16 %v1582, %v1576
        %v1895 = vpack.c.b16 %v1589, %v1583
        %v1896 = vpack.c.b16 %v1590, %v1584
        %v1897 = vpack.c.b16 %v1591, %v1585
        %v1898 = vpack.c.b16 %v1592, %v1586
        %v1899 = vpack.c.b16 %v1593, %v1587
        %v1900 = vpack.c.b16 %v1594, %v1588
        %v1901 = vpack.c.b16 %v1601, %v1595
        %v1902 = vpack.c.b16 %v1602, %v1596
        %v1903 = vpack.c.b16 %v1603, %v1597
        %v1904 = vpack.c.b16 %v1604, %v1598
        %v1905 = vpack.c.b16 %v1605, %v1599
        %v1906 = vpack.c.b16 %v1606, %v1600
        %v1907 = vpack.c.b16 %v1613, %v1607
        %v1908 = vpack.c.b16 %v1614, %v1608
        %v1909 = vpack.c.b16 %v1615, %v1609
        %v1910 = vpack.c.b16 %v1616, %v1610
        %v1911 = vpack.c.b16 %v1617, %v1611
        %v1912 = vpack.c.b16 %v1618, %v1612
        %v1913 = vpack.c.b16 %v1625, %v1619
        %v1914 = vpack.c.b16 %v1626, %v1620
        %v1915 = vpack.c.b16 %v1627, %v1621
        %v1916 = vpack.c.b16 %v1628, %v1622
        %v1917 = vpack.c.b16 %v1629, %v1623
        %v1918 = vpack.c.b16 %v1630, %v1624
        %2207 = vmatpush.bf16.msra.mxu0 %v1673
        %2208 = vmatpush.bf16.msra.mxu0 %v1667
        %2209 = vmatpush.bf16.msra.mxu0 %v1661
        %2210 = vmatpush.bf16.msra.mxu0 %v1655
        %2211 = vmatpush.bf16.msra.mxu0 %v1649
        %2212 = vmatpush.bf16.msra.mxu0 %v1643
        %2213 = vmatpush.bf16.msra.mxu0 %v1637
        %2214 = vmatpush.bf16.msra.mxu0 %v1631
        %2215 = vmatmul.bf16.gmra.mxu0 %v743
        %v2216 = vpop.f32.mrf.mxu0
        %v2217 = vadd.f32 %v695, %v2216
        %v2218 = vpop.f32.mrf.mxu0
        %v2219 = vadd.f32 %v695, %v2218
        %2220 = vmatmul.bf16.gmra.mxu0 %v749
        %v2221 = vpop.f32.mrf.mxu0
        %v2222 = vadd.f32 %v695, %v2221
        %v2223 = vpop.f32.mrf.mxu0
        %v2224 = vadd.f32 %v695, %v2223
        %2225 = vdwg.mxu0
        %2226 = vmatpush.bf16.msra.mxu0 %v1721
        %2227 = vmatpush.bf16.msra.mxu0 %v1715
        %2228 = vmatpush.bf16.msra.mxu0 %v1709
        %2229 = vmatpush.bf16.msra.mxu0 %v1703
        %2230 = vmatpush.bf16.msra.mxu0 %v1697
        %2231 = vmatpush.bf16.msra.mxu0 %v1691
        %2232 = vmatpush.bf16.msra.mxu0 %v1685
        %2233 = vmatpush.bf16.msra.mxu0 %v1679
        %2234 = vmatmul.bf16.gmra.mxu0 %v744
        %v2235 = vpop.f32.mrf.mxu0
        %v2236 = vadd.f32 %v2217, %v2235
        %v2237 = vpop.f32.mrf.mxu0
        %v2238 = vadd.f32 %v2219, %v2237
        %2239 = vmatmul.bf16.gmra.mxu0 %v750
        %v2240 = vpop.f32.mrf.mxu0
        %v2241 = vadd.f32 %v2222, %v2240
        %v2242 = vpop.f32.mrf.mxu0
        %v2243 = vadd.f32 %v2224, %v2242
        %2244 = vdwg.mxu0
        %2245 = vmatpush.bf16.msra.mxu0 %v1769
        %2246 = vmatpush.bf16.msra.mxu0 %v1763
        %2247 = vmatpush.bf16.msra.mxu0 %v1757
        %2248 = vmatpush.bf16.msra.mxu0 %v1751
        %2249 = vmatpush.bf16.msra.mxu0 %v1745
        %2250 = vmatpush.bf16.msra.mxu0 %v1739
        %2251 = vmatpush.bf16.msra.mxu0 %v1733
        %2252 = vmatpush.bf16.msra.mxu0 %v1727
        %2253 = vmatmul.bf16.gmra.mxu0 %v745
        %v2254 = vpop.f32.mrf.mxu0
        %v2255 = vadd.f32 %v2236, %v2254
        %v2256 = vpop.f32.mrf.mxu0
        %v2257 = vadd.f32 %v2238, %v2256
        %2258 = vmatmul.bf16.gmra.mxu0 %v751
        %v2259 = vpop.f32.mrf.mxu0
        %v2260 = vadd.f32 %v2241, %v2259
        %v2261 = vpop.f32.mrf.mxu0
        %v2262 = vadd.f32 %v2243, %v2261
        %2263 = vdwg.mxu0
        %2264 = vmatpush.bf16.msra.mxu0 %v1817
        %2265 = vmatpush.bf16.msra.mxu0 %v1811
        %2266 = vmatpush.bf16.msra.mxu0 %v1805
        %2267 = vmatpush.bf16.msra.mxu0 %v1799
        %2268 = vmatpush.bf16.msra.mxu0 %v1793
        %2269 = vmatpush.bf16.msra.mxu0 %v1787
        %2270 = vmatpush.bf16.msra.mxu0 %v1781
        %2271 = vmatpush.bf16.msra.mxu0 %v1775
        %2272 = vmatmul.bf16.gmra.mxu0 %v746
        %v2273 = vpop.f32.mrf.mxu0
        %v2274 = vadd.f32 %v2255, %v2273
        %v2275 = vpop.f32.mrf.mxu0
        %v2276 = vadd.f32 %v2257, %v2275
        %2277 = vmatmul.bf16.gmra.mxu0 %v752
        %v2278 = vpop.f32.mrf.mxu0
        %v2279 = vadd.f32 %v2260, %v2278
        %v2280 = vpop.f32.mrf.mxu0
        %v2281 = vadd.f32 %v2262, %v2280
        %2282 = vdwg.mxu0
        %2283 = vmatpush.bf16.msra.mxu0 %v1865
        %2284 = vmatpush.bf16.msra.mxu0 %v1859
        %2285 = vmatpush.bf16.msra.mxu0 %v1853
        %2286 = vmatpush.bf16.msra.mxu0 %v1847
        %2287 = vmatpush.bf16.msra.mxu0 %v1841
        %2288 = vmatpush.bf16.msra.mxu0 %v1835
        %2289 = vmatpush.bf16.msra.mxu0 %v1829
        %2290 = vmatpush.bf16.msra.mxu0 %v1823
        %2291 = vmatmul.bf16.gmra.mxu0 %v747
        %v2292 = vpop.f32.mrf.mxu0
        %v2293 = vadd.f32 %v2274, %v2292
        %v2294 = vpop.f32.mrf.mxu0
        %v2295 = vadd.f32 %v2276, %v2294
        %2296 = vmatmul.bf16.gmra.mxu0 %v753
        %v2297 = vpop.f32.mrf.mxu0
        %v2298 = vadd.f32 %v2279, %v2297
        %v2299 = vpop.f32.mrf.mxu0
        %v2300 = vadd.f32 %v2281, %v2299
        %2301 = vdwg.mxu0
        %2302 = vmatpush.bf16.msra.mxu0 %v1913
        %2303 = vmatpush.bf16.msra.mxu0 %v1907
        %2304 = vmatpush.bf16.msra.mxu0 %v1901
        %2305 = vmatpush.bf16.msra.mxu0 %v1895
        %2306 = vmatpush.bf16.msra.mxu0 %v1889
        %2307 = vmatpush.bf16.msra.mxu0 %v1883
        %2308 = vmatpush.bf16.msra.mxu0 %v1877
        %2309 = vmatpush.bf16.msra.mxu0 %v1871
        %2310 = vmatmul.bf16.gmra.mxu0 %v748
        %v2311 = vpop.f32.mrf.mxu0
        %v2312 = vadd.f32 %v2293, %v2311
        %v2313 = vpop.f32.mrf.mxu0
        %v2314 = vadd.f32 %v2295, %v2313
        %2315 = vmatmul.bf16.gmra.mxu0 %v754
        %v2316 = vpop.f32.mrf.mxu0
        %v2317 = vadd.f32 %v2298, %v2316
        %v2318 = vpop.f32.mrf.mxu0
        %v2319 = vadd.f32 %v2300, %v2318
        %2320 = vdwg.mxu0
        %2321 = vmatpush.bf16.msra.mxu0 %v1674
        %2322 = vmatpush.bf16.msra.mxu0 %v1668
        %2323 = vmatpush.bf16.msra.mxu0 %v1662
        %2324 = vmatpush.bf16.msra.mxu0 %v1656
        %2325 = vmatpush.bf16.msra.mxu0 %v1650
        %2326 = vmatpush.bf16.msra.mxu0 %v1644
        %2327 = vmatpush.bf16.msra.mxu0 %v1638
        %2328 = vmatpush.bf16.msra.mxu0 %v1632
        %2329 = vmatmul.bf16.gmra.mxu0 %v743
        %v2330 = vpop.f32.mrf.mxu0
        %v2331 = vadd.f32 %v696, %v2330
        %v2332 = vpop.f32.mrf.mxu0
        %v2333 = vadd.f32 %v696, %v2332
        %2334 = vmatmul.bf16.gmra.mxu0 %v749
        %v2335 = vpop.f32.mrf.mxu0
        %v2336 = vadd.f32 %v696, %v2335
        %v2337 = vpop.f32.mrf.mxu0
        %v2338 = vadd.f32 %v696, %v2337
        %2339 = vdwg.mxu0
        %2340 = vmatpush.bf16.msra.mxu0 %v1722
        %2341 = vmatpush.bf16.msra.mxu0 %v1716
        %2342 = vmatpush.bf16.msra.mxu0 %v1710
        %2343 = vmatpush.bf16.msra.mxu0 %v1704
        %2344 = vmatpush.bf16.msra.mxu0 %v1698
        %2345 = vmatpush.bf16.msra.mxu0 %v1692
        %2346 = vmatpush.bf16.msra.mxu0 %v1686
        %2347 = vmatpush.bf16.msra.mxu0 %v1680
        %2348 = vmatmul.bf16.gmra.mxu0 %v744
        %v2349 = vpop.f32.mrf.mxu0
        %v2350 = vadd.f32 %v2331, %v2349
        %v2351 = vpop.f32.mrf.mxu0
        %v2352 = vadd.f32 %v2333, %v2351
        %2353 = vmatmul.bf16.gmra.mxu0 %v750
        %v2354 = vpop.f32.mrf.mxu0
        %v2355 = vadd.f32 %v2336, %v2354
        %v2356 = vpop.f32.mrf.mxu0
        %v2357 = vadd.f32 %v2338, %v2356
        %2358 = vdwg.mxu0
        %2359 = vmatpush.bf16.msra.mxu0 %v1770
        %2360 = vmatpush.bf16.msra.mxu0 %v1764
        %2361 = vmatpush.bf16.msra.mxu0 %v1758
        %2362 = vmatpush.bf16.msra.mxu0 %v1752
        %2363 = vmatpush.bf16.msra.mxu0 %v1746
        %2364 = vmatpush.bf16.msra.mxu0 %v1740
        %2365 = vmatpush.bf16.msra.mxu0 %v1734
        %2366 = vmatpush.bf16.msra.mxu0 %v1728
        %2367 = vmatmul.bf16.gmra.mxu0 %v745
        %v2368 = vpop.f32.mrf.mxu0
        %v2369 = vadd.f32 %v2350, %v2368
        %v2370 = vpop.f32.mrf.mxu0
        %v2371 = vadd.f32 %v2352, %v2370
        %2372 = vmatmul.bf16.gmra.mxu0 %v751
        %v2373 = vpop.f32.mrf.mxu0
        %v2374 = vadd.f32 %v2355, %v2373
        %v2375 = vpop.f32.mrf.mxu0
        %v2376 = vadd.f32 %v2357, %v2375
        %2377 = vdwg.mxu0
        %2378 = vmatpush.bf16.msra.mxu0 %v1818
        %2379 = vmatpush.bf16.msra.mxu0 %v1812
        %2380 = vmatpush.bf16.msra.mxu0 %v1806
        %2381 = vmatpush.bf16.msra.mxu0 %v1800
        %2382 = vmatpush.bf16.msra.mxu0 %v1794
        %2383 = vmatpush.bf16.msra.mxu0 %v1788
        %2384 = vmatpush.bf16.msra.mxu0 %v1782
        %2385 = vmatpush.bf16.msra.mxu0 %v1776
        %2386 = vmatmul.bf16.gmra.mxu0 %v746
        %v2387 = vpop.f32.mrf.mxu0
        %v2388 = vadd.f32 %v2369, %v2387
        %v2389 = vpop.f32.mrf.mxu0
        %v2390 = vadd.f32 %v2371, %v2389
        %2391 = vmatmul.bf16.gmra.mxu0 %v752
        %v2392 = vpop.f32.mrf.mxu0
        %v2393 = vadd.f32 %v2374, %v2392
        %v2394 = vpop.f32.mrf.mxu0
        %v2395 = vadd.f32 %v2376, %v2394
        %2396 = vdwg.mxu0
        %2397 = vmatpush.bf16.msra.mxu0 %v1866
        %2398 = vmatpush.bf16.msra.mxu0 %v1860
        %2399 = vmatpush.bf16.msra.mxu0 %v1854
        %2400 = vmatpush.bf16.msra.mxu0 %v1848
        %2401 = vmatpush.bf16.msra.mxu0 %v1842
        %2402 = vmatpush.bf16.msra.mxu0 %v1836
        %2403 = vmatpush.bf16.msra.mxu0 %v1830
        %2404 = vmatpush.bf16.msra.mxu0 %v1824
        %2405 = vmatmul.bf16.gmra.mxu0 %v747
        %v2406 = vpop.f32.mrf.mxu0
        %v2407 = vadd.f32 %v2388, %v2406
        %v2408 = vpop.f32.mrf.mxu0
        %v2409 = vadd.f32 %v2390, %v2408
        %2410 = vmatmul.bf16.gmra.mxu0 %v753
        %v2411 = vpop.f32.mrf.mxu0
        %v2412 = vadd.f32 %v2393, %v2411
        %v2413 = vpop.f32.mrf.mxu0
        %v2414 = vadd.f32 %v2395, %v2413
        %2415 = vdwg.mxu0
        %2416 = vmatpush.bf16.msra.mxu0 %v1914
        %2417 = vmatpush.bf16.msra.mxu0 %v1908
        %2418 = vmatpush.bf16.msra.mxu0 %v1902
        %2419 = vmatpush.bf16.msra.mxu0 %v1896
        %2420 = vmatpush.bf16.msra.mxu0 %v1890
        %2421 = vmatpush.bf16.msra.mxu0 %v1884
        %2422 = vmatpush.bf16.msra.mxu0 %v1878
        %2423 = vmatpush.bf16.msra.mxu0 %v1872
        %2424 = vmatmul.bf16.gmra.mxu0 %v748
        %v2425 = vpop.f32.mrf.mxu0
        %v2426 = vadd.f32 %v2407, %v2425
        %v2427 = vpop.f32.mrf.mxu0
        %v2428 = vadd.f32 %v2409, %v2427
        %2429 = vmatmul.bf16.gmra.mxu0 %v754
        %v2430 = vpop.f32.mrf.mxu0
        %v2431 = vadd.f32 %v2412, %v2430
        %v2432 = vpop.f32.mrf.mxu0
        %v2433 = vadd.f32 %v2414, %v2432
        %2434 = vdwg.mxu0
        %2435 = vmatpush.bf16.msra.mxu0 %v1675
        %2436 = vmatpush.bf16.msra.mxu0 %v1669
        %2437 = vmatpush.bf16.msra.mxu0 %v1663
        %2438 = vmatpush.bf16.msra.mxu0 %v1657
        %2439 = vmatpush.bf16.msra.mxu0 %v1651
        %2440 = vmatpush.bf16.msra.mxu0 %v1645
        %2441 = vmatpush.bf16.msra.mxu0 %v1639
        %2442 = vmatpush.bf16.msra.mxu0 %v1633
        %2443 = vmatmul.bf16.gmra.mxu0 %v743
        %v2444 = vpop.f32.mrf.mxu0
        %v2445 = vadd.f32 %v697, %v2444
        %v2446 = vpop.f32.mrf.mxu0
        %v2447 = vadd.f32 %v697, %v2446
        %2448 = vmatmul.bf16.gmra.mxu0 %v749
        %v2449 = vpop.f32.mrf.mxu0
        %v2450 = vadd.f32 %v697, %v2449
        %v2451 = vpop.f32.mrf.mxu0
        %v2452 = vadd.f32 %v697, %v2451
        %2453 = vdwg.mxu0
        %2454 = vmatpush.bf16.msra.mxu0 %v1723
        %2455 = vmatpush.bf16.msra.mxu0 %v1717
        %2456 = vmatpush.bf16.msra.mxu0 %v1711
        %2457 = vmatpush.bf16.msra.mxu0 %v1705
        %2458 = vmatpush.bf16.msra.mxu0 %v1699
        %2459 = vmatpush.bf16.msra.mxu0 %v1693
        %2460 = vmatpush.bf16.msra.mxu0 %v1687
        %2461 = vmatpush.bf16.msra.mxu0 %v1681
        %2462 = vmatmul.bf16.gmra.mxu0 %v744
        %v2463 = vpop.f32.mrf.mxu0
        %v2464 = vadd.f32 %v2445, %v2463
        %v2465 = vpop.f32.mrf.mxu0
        %v2466 = vadd.f32 %v2447, %v2465
        %2467 = vmatmul.bf16.gmra.mxu0 %v750
        %v2468 = vpop.f32.mrf.mxu0
        %v2469 = vadd.f32 %v2450, %v2468
        %v2470 = vpop.f32.mrf.mxu0
        %v2471 = vadd.f32 %v2452, %v2470
        %2472 = vdwg.mxu0
        %2473 = vmatpush.bf16.msra.mxu0 %v1771
        %2474 = vmatpush.bf16.msra.mxu0 %v1765
        %2475 = vmatpush.bf16.msra.mxu0 %v1759
        %2476 = vmatpush.bf16.msra.mxu0 %v1753
        %2477 = vmatpush.bf16.msra.mxu0 %v1747
        %2478 = vmatpush.bf16.msra.mxu0 %v1741
        %2479 = vmatpush.bf16.msra.mxu0 %v1735
        %2480 = vmatpush.bf16.msra.mxu0 %v1729
        %2481 = vmatmul.bf16.gmra.mxu0 %v745
        %v2482 = vpop.f32.mrf.mxu0
        %v2483 = vadd.f32 %v2464, %v2482
        %v2484 = vpop.f32.mrf.mxu0
        %v2485 = vadd.f32 %v2466, %v2484
        %2486 = vmatmul.bf16.gmra.mxu0 %v751
        %v2487 = vpop.f32.mrf.mxu0
        %v2488 = vadd.f32 %v2469, %v2487
        %v2489 = vpop.f32.mrf.mxu0
        %v2490 = vadd.f32 %v2471, %v2489
        %2491 = vdwg.mxu0
        %2492 = vmatpush.bf16.msra.mxu0 %v1819
        %2493 = vmatpush.bf16.msra.mxu0 %v1813
        %2494 = vmatpush.bf16.msra.mxu0 %v1807
        %2495 = vmatpush.bf16.msra.mxu0 %v1801
        %2496 = vmatpush.bf16.msra.mxu0 %v1795
        %2497 = vmatpush.bf16.msra.mxu0 %v1789
        %2498 = vmatpush.bf16.msra.mxu0 %v1783
        %2499 = vmatpush.bf16.msra.mxu0 %v1777
        %2500 = vmatmul.bf16.gmra.mxu0 %v746
        %v2501 = vpop.f32.mrf.mxu0
        %v2502 = vadd.f32 %v2483, %v2501
        %v2503 = vpop.f32.mrf.mxu0
        %v2504 = vadd.f32 %v2485, %v2503
        %2505 = vmatmul.bf16.gmra.mxu0 %v752
        %v2506 = vpop.f32.mrf.mxu0
        %v2507 = vadd.f32 %v2488, %v2506
        %v2508 = vpop.f32.mrf.mxu0
        %v2509 = vadd.f32 %v2490, %v2508
        %2510 = vdwg.mxu0
        %2511 = vmatpush.bf16.msra.mxu0 %v1867
        %2512 = vmatpush.bf16.msra.mxu0 %v1861
        %2513 = vmatpush.bf16.msra.mxu0 %v1855
        %2514 = vmatpush.bf16.msra.mxu0 %v1849
        %2515 = vmatpush.bf16.msra.mxu0 %v1843
        %2516 = vmatpush.bf16.msra.mxu0 %v1837
        %2517 = vmatpush.bf16.msra.mxu0 %v1831
        %2518 = vmatpush.bf16.msra.mxu0 %v1825
        %2519 = vmatmul.bf16.gmra.mxu0 %v747
        %v2520 = vpop.f32.mrf.mxu0
        %v2521 = vadd.f32 %v2502, %v2520
        %v2522 = vpop.f32.mrf.mxu0
        %v2523 = vadd.f32 %v2504, %v2522
        %2524 = vmatmul.bf16.gmra.mxu0 %v753
        %v2525 = vpop.f32.mrf.mxu0
        %v2526 = vadd.f32 %v2507, %v2525
        %v2527 = vpop.f32.mrf.mxu0
        %v2528 = vadd.f32 %v2509, %v2527
        %2529 = vdwg.mxu0
        %2530 = vmatpush.bf16.msra.mxu0 %v1915
        %2531 = vmatpush.bf16.msra.mxu0 %v1909
        %2532 = vmatpush.bf16.msra.mxu0 %v1903
        %2533 = vmatpush.bf16.msra.mxu0 %v1897
        %2534 = vmatpush.bf16.msra.mxu0 %v1891
        %2535 = vmatpush.bf16.msra.mxu0 %v1885
        %2536 = vmatpush.bf16.msra.mxu0 %v1879
        %2537 = vmatpush.bf16.msra.mxu0 %v1873
        %2538 = vmatmul.bf16.gmra.mxu0 %v748
        %v2539 = vpop.f32.mrf.mxu0
        %v2540 = vadd.f32 %v2521, %v2539
        %v2541 = vpop.f32.mrf.mxu0
        %v2542 = vadd.f32 %v2523, %v2541
        %2543 = vmatmul.bf16.gmra.mxu0 %v754
        %v2544 = vpop.f32.mrf.mxu0
        %v2545 = vadd.f32 %v2526, %v2544
        %v2546 = vpop.f32.mrf.mxu0
        %v2547 = vadd.f32 %v2528, %v2546
        %2548 = vdwg.mxu0
        %2549 = vmatpush.bf16.msra.mxu0 %v1676
        %2550 = vmatpush.bf16.msra.mxu0 %v1670
        %2551 = vmatpush.bf16.msra.mxu0 %v1664
        %2552 = vmatpush.bf16.msra.mxu0 %v1658
        %2553 = vmatpush.bf16.msra.mxu0 %v1652
        %2554 = vmatpush.bf16.msra.mxu0 %v1646
        %2555 = vmatpush.bf16.msra.mxu0 %v1640
        %2556 = vmatpush.bf16.msra.mxu0 %v1634
        %2557 = vmatmul.bf16.gmra.mxu0 %v743
        %v2558 = vpop.f32.mrf.mxu0
        %v2559 = vadd.f32 %v698, %v2558
        %v2560 = vpop.f32.mrf.mxu0
        %v2561 = vadd.f32 %v698, %v2560
        %2562 = vmatmul.bf16.gmra.mxu0 %v749
        %v2563 = vpop.f32.mrf.mxu0
        %v2564 = vadd.f32 %v698, %v2563
        %v2565 = vpop.f32.mrf.mxu0
        %v2566 = vadd.f32 %v698, %v2565
        %2567 = vdwg.mxu0
        %2568 = vmatpush.bf16.msra.mxu0 %v1724
        %2569 = vmatpush.bf16.msra.mxu0 %v1718
        %2570 = vmatpush.bf16.msra.mxu0 %v1712
        %2571 = vmatpush.bf16.msra.mxu0 %v1706
        %2572 = vmatpush.bf16.msra.mxu0 %v1700
        %2573 = vmatpush.bf16.msra.mxu0 %v1694
        %2574 = vmatpush.bf16.msra.mxu0 %v1688
        %2575 = vmatpush.bf16.msra.mxu0 %v1682
        %2576 = vmatmul.bf16.gmra.mxu0 %v744
        %v2577 = vpop.f32.mrf.mxu0
        %v2578 = vadd.f32 %v2559, %v2577
        %v2579 = vpop.f32.mrf.mxu0
        %v2580 = vadd.f32 %v2561, %v2579
        %2581 = vmatmul.bf16.gmra.mxu0 %v750
        %v2582 = vpop.f32.mrf.mxu0
        %v2583 = vadd.f32 %v2564, %v2582
        %v2584 = vpop.f32.mrf.mxu0
        %v2585 = vadd.f32 %v2566, %v2584
        %2586 = vdwg.mxu0
        %2587 = vmatpush.bf16.msra.mxu0 %v1772
        %2588 = vmatpush.bf16.msra.mxu0 %v1766
        %2589 = vmatpush.bf16.msra.mxu0 %v1760
        %2590 = vmatpush.bf16.msra.mxu0 %v1754
        %2591 = vmatpush.bf16.msra.mxu0 %v1748
        %2592 = vmatpush.bf16.msra.mxu0 %v1742
        %2593 = vmatpush.bf16.msra.mxu0 %v1736
        %2594 = vmatpush.bf16.msra.mxu0 %v1730
        %2595 = vmatmul.bf16.gmra.mxu0 %v745
        %v2596 = vpop.f32.mrf.mxu0
        %v2597 = vadd.f32 %v2578, %v2596
        %v2598 = vpop.f32.mrf.mxu0
        %v2599 = vadd.f32 %v2580, %v2598
        %2600 = vmatmul.bf16.gmra.mxu0 %v751
        %v2601 = vpop.f32.mrf.mxu0
        %v2602 = vadd.f32 %v2583, %v2601
        %v2603 = vpop.f32.mrf.mxu0
        %v2604 = vadd.f32 %v2585, %v2603
        %2605 = vdwg.mxu0
        %2606 = vmatpush.bf16.msra.mxu0 %v1820
        %2607 = vmatpush.bf16.msra.mxu0 %v1814
        %2608 = vmatpush.bf16.msra.mxu0 %v1808
        %2609 = vmatpush.bf16.msra.mxu0 %v1802
        %2610 = vmatpush.bf16.msra.mxu0 %v1796
        %2611 = vmatpush.bf16.msra.mxu0 %v1790
        %2612 = vmatpush.bf16.msra.mxu0 %v1784
        %2613 = vmatpush.bf16.msra.mxu0 %v1778
        %2614 = vmatmul.bf16.gmra.mxu0 %v746
        %v2615 = vpop.f32.mrf.mxu0
        %v2616 = vadd.f32 %v2597, %v2615
        %v2617 = vpop.f32.mrf.mxu0
        %v2618 = vadd.f32 %v2599, %v2617
        %2619 = vmatmul.bf16.gmra.mxu0 %v752
        %v2620 = vpop.f32.mrf.mxu0
        %v2621 = vadd.f32 %v2602, %v2620
        %v2622 = vpop.f32.mrf.mxu0
        %v2623 = vadd.f32 %v2604, %v2622
        %2624 = vdwg.mxu0
        %2625 = vmatpush.bf16.msra.mxu0 %v1868
        %2626 = vmatpush.bf16.msra.mxu0 %v1862
        %2627 = vmatpush.bf16.msra.mxu0 %v1856
        %2628 = vmatpush.bf16.msra.mxu0 %v1850
        %2629 = vmatpush.bf16.msra.mxu0 %v1844
        %2630 = vmatpush.bf16.msra.mxu0 %v1838
        %2631 = vmatpush.bf16.msra.mxu0 %v1832
        %2632 = vmatpush.bf16.msra.mxu0 %v1826
        %2633 = vmatmul.bf16.gmra.mxu0 %v747
        %v2634 = vpop.f32.mrf.mxu0
        %v2635 = vadd.f32 %v2616, %v2634
        %v2636 = vpop.f32.mrf.mxu0
        %v2637 = vadd.f32 %v2618, %v2636
        %2638 = vmatmul.bf16.gmra.mxu0 %v753
        %v2639 = vpop.f32.mrf.mxu0
        %v2640 = vadd.f32 %v2621, %v2639
        %v2641 = vpop.f32.mrf.mxu0
        %v2642 = vadd.f32 %v2623, %v2641
        %2643 = vdwg.mxu0
        %2644 = vmatpush.bf16.msra.mxu0 %v1916
        %2645 = vmatpush.bf16.msra.mxu0 %v1910
        %2646 = vmatpush.bf16.msra.mxu0 %v1904
        %2647 = vmatpush.bf16.msra.mxu0 %v1898
        %2648 = vmatpush.bf16.msra.mxu0 %v1892
        %2649 = vmatpush.bf16.msra.mxu0 %v1886
        %2650 = vmatpush.bf16.msra.mxu0 %v1880
        %2651 = vmatpush.bf16.msra.mxu0 %v1874
        %2652 = vmatmul.bf16.gmra.mxu0 %v748
        %v2653 = vpop.f32.mrf.mxu0
        %v2654 = vadd.f32 %v2635, %v2653
        %v2655 = vpop.f32.mrf.mxu0
        %v2656 = vadd.f32 %v2637, %v2655
        %2657 = vmatmul.bf16.gmra.mxu0 %v754
        %v2658 = vpop.f32.mrf.mxu0
        %v2659 = vadd.f32 %v2640, %v2658
        %v2660 = vpop.f32.mrf.mxu0
        %v2661 = vadd.f32 %v2642, %v2660
        %2662 = vdwg.mxu0
        %2663 = vmatpush.bf16.msra.mxu0 %v1677
        %2664 = vmatpush.bf16.msra.mxu0 %v1671
        %2665 = vmatpush.bf16.msra.mxu0 %v1665
        %2666 = vmatpush.bf16.msra.mxu0 %v1659
        %2667 = vmatpush.bf16.msra.mxu0 %v1653
        %2668 = vmatpush.bf16.msra.mxu0 %v1647
        %2669 = vmatpush.bf16.msra.mxu0 %v1641
        %2670 = vmatpush.bf16.msra.mxu0 %v1635
        %2671 = vmatmul.bf16.gmra.mxu0 %v743
        %v2672 = vpop.f32.mrf.mxu0
        %v2673 = vadd.f32 %v699, %v2672
        %v2674 = vpop.f32.mrf.mxu0
        %v2675 = vadd.f32 %v699, %v2674
        %2676 = vmatmul.bf16.gmra.mxu0 %v749
        %v2677 = vpop.f32.mrf.mxu0
        %v2678 = vadd.f32 %v699, %v2677
        %v2679 = vpop.f32.mrf.mxu0
        %v2680 = vadd.f32 %v699, %v2679
        %2681 = vdwg.mxu0
        %2682 = vmatpush.bf16.msra.mxu0 %v1725
        %2683 = vmatpush.bf16.msra.mxu0 %v1719
        %2684 = vmatpush.bf16.msra.mxu0 %v1713
        %2685 = vmatpush.bf16.msra.mxu0 %v1707
        %2686 = vmatpush.bf16.msra.mxu0 %v1701
        %2687 = vmatpush.bf16.msra.mxu0 %v1695
        %2688 = vmatpush.bf16.msra.mxu0 %v1689
        %2689 = vmatpush.bf16.msra.mxu0 %v1683
        %2690 = vmatmul.bf16.gmra.mxu0 %v744
        %v2691 = vpop.f32.mrf.mxu0
        %v2692 = vadd.f32 %v2673, %v2691
        %v2693 = vpop.f32.mrf.mxu0
        %v2694 = vadd.f32 %v2675, %v2693
        %2695 = vmatmul.bf16.gmra.mxu0 %v750
        %v2696 = vpop.f32.mrf.mxu0
        %v2697 = vadd.f32 %v2678, %v2696
        %v2698 = vpop.f32.mrf.mxu0
        %v2699 = vadd.f32 %v2680, %v2698
        %2700 = vdwg.mxu0
        %2701 = vmatpush.bf16.msra.mxu0 %v1773
        %2702 = vmatpush.bf16.msra.mxu0 %v1767
        %2703 = vmatpush.bf16.msra.mxu0 %v1761
        %2704 = vmatpush.bf16.msra.mxu0 %v1755
        %2705 = vmatpush.bf16.msra.mxu0 %v1749
        %2706 = vmatpush.bf16.msra.mxu0 %v1743
        %2707 = vmatpush.bf16.msra.mxu0 %v1737
        %2708 = vmatpush.bf16.msra.mxu0 %v1731
        %2709 = vmatmul.bf16.gmra.mxu0 %v745
        %v2710 = vpop.f32.mrf.mxu0
        %v2711 = vadd.f32 %v2692, %v2710
        %v2712 = vpop.f32.mrf.mxu0
        %v2713 = vadd.f32 %v2694, %v2712
        %2714 = vmatmul.bf16.gmra.mxu0 %v751
        %v2715 = vpop.f32.mrf.mxu0
        %v2716 = vadd.f32 %v2697, %v2715
        %v2717 = vpop.f32.mrf.mxu0
        %v2718 = vadd.f32 %v2699, %v2717
        %2719 = vdwg.mxu0
        %2720 = vmatpush.bf16.msra.mxu0 %v1821
        %2721 = vmatpush.bf16.msra.mxu0 %v1815
        %2722 = vmatpush.bf16.msra.mxu0 %v1809
        %2723 = vmatpush.bf16.msra.mxu0 %v1803
        %2724 = vmatpush.bf16.msra.mxu0 %v1797
        %2725 = vmatpush.bf16.msra.mxu0 %v1791
        %2726 = vmatpush.bf16.msra.mxu0 %v1785
        %2727 = vmatpush.bf16.msra.mxu0 %v1779
        %2728 = vmatmul.bf16.gmra.mxu0 %v746
        %v2729 = vpop.f32.mrf.mxu0
        %v2730 = vadd.f32 %v2711, %v2729
        %v2731 = vpop.f32.mrf.mxu0
        %v2732 = vadd.f32 %v2713, %v2731
        %2733 = vmatmul.bf16.gmra.mxu0 %v752
        %v2734 = vpop.f32.mrf.mxu0
        %v2735 = vadd.f32 %v2716, %v2734
        %v2736 = vpop.f32.mrf.mxu0
        %v2737 = vadd.f32 %v2718, %v2736
        %2738 = vdwg.mxu0
        %2739 = vmatpush.bf16.msra.mxu0 %v1869
        %2740 = vmatpush.bf16.msra.mxu0 %v1863
        %2741 = vmatpush.bf16.msra.mxu0 %v1857
        %2742 = vmatpush.bf16.msra.mxu0 %v1851
        %2743 = vmatpush.bf16.msra.mxu0 %v1845
        %2744 = vmatpush.bf16.msra.mxu0 %v1839
        %2745 = vmatpush.bf16.msra.mxu0 %v1833
        %2746 = vmatpush.bf16.msra.mxu0 %v1827
        %2747 = vmatmul.bf16.gmra.mxu0 %v747
        %v2748 = vpop.f32.mrf.mxu0
        %v2749 = vadd.f32 %v2730, %v2748
        %v2750 = vpop.f32.mrf.mxu0
        %v2751 = vadd.f32 %v2732, %v2750
        %2752 = vmatmul.bf16.gmra.mxu0 %v753
        %v2753 = vpop.f32.mrf.mxu0
        %v2754 = vadd.f32 %v2735, %v2753
        %v2755 = vpop.f32.mrf.mxu0
        %v2756 = vadd.f32 %v2737, %v2755
        %2757 = vdwg.mxu0
        %2758 = vmatpush.bf16.msra.mxu0 %v1917
        %2759 = vmatpush.bf16.msra.mxu0 %v1911
        %2760 = vmatpush.bf16.msra.mxu0 %v1905
        %2761 = vmatpush.bf16.msra.mxu0 %v1899
        %2762 = vmatpush.bf16.msra.mxu0 %v1893
        %2763 = vmatpush.bf16.msra.mxu0 %v1887
        %2764 = vmatpush.bf16.msra.mxu0 %v1881
        %2765 = vmatpush.bf16.msra.mxu0 %v1875
        %2766 = vmatmul.bf16.gmra.mxu0 %v748
        %v2767 = vpop.f32.mrf.mxu0
        %v2768 = vadd.f32 %v2749, %v2767
        %v2769 = vpop.f32.mrf.mxu0
        %v2770 = vadd.f32 %v2751, %v2769
        %2771 = vmatmul.bf16.gmra.mxu0 %v754
        %v2772 = vpop.f32.mrf.mxu0
        %v2773 = vadd.f32 %v2754, %v2772
        %v2774 = vpop.f32.mrf.mxu0
        %v2775 = vadd.f32 %v2756, %v2774
        %2776 = vdwg.mxu0
        %2777 = vmatpush.bf16.msra.mxu0 %v1678
        %2778 = vmatpush.bf16.msra.mxu0 %v1672
        %2779 = vmatpush.bf16.msra.mxu0 %v1666
        %2780 = vmatpush.bf16.msra.mxu0 %v1660
        %2781 = vmatpush.bf16.msra.mxu0 %v1654
        %2782 = vmatpush.bf16.msra.mxu0 %v1648
        %2783 = vmatpush.bf16.msra.mxu0 %v1642
        %2784 = vmatpush.bf16.msra.mxu0 %v1636
        %2785 = vmatmul.bf16.gmra.mxu0 %v743
        %v2786 = vpop.f32.mrf.mxu0
        %v2787 = vadd.f32 %v700, %v2786
        %v2788 = vpop.f32.mrf.mxu0
        %v2789 = vadd.f32 %v700, %v2788
        %2790 = vmatmul.bf16.gmra.mxu0 %v749
        %v2791 = vpop.f32.mrf.mxu0
        %v2792 = vadd.f32 %v700, %v2791
        %v2793 = vpop.f32.mrf.mxu0
        %v2794 = vadd.f32 %v700, %v2793
        %2795 = vdwg.mxu0
        %2796 = vmatpush.bf16.msra.mxu0 %v1726
        %2797 = vmatpush.bf16.msra.mxu0 %v1720
        %2798 = vmatpush.bf16.msra.mxu0 %v1714
        %2799 = vmatpush.bf16.msra.mxu0 %v1708
        %2800 = vmatpush.bf16.msra.mxu0 %v1702
        %2801 = vmatpush.bf16.msra.mxu0 %v1696
        %2802 = vmatpush.bf16.msra.mxu0 %v1690
        %2803 = vmatpush.bf16.msra.mxu0 %v1684
        %2804 = vmatmul.bf16.gmra.mxu0 %v744
        %v2805 = vpop.f32.mrf.mxu0
        %v2806 = vadd.f32 %v2787, %v2805
        %v2807 = vpop.f32.mrf.mxu0
        %v2808 = vadd.f32 %v2789, %v2807
        %2809 = vmatmul.bf16.gmra.mxu0 %v750
        %v2810 = vpop.f32.mrf.mxu0
        %v2811 = vadd.f32 %v2792, %v2810
        %v2812 = vpop.f32.mrf.mxu0
        %v2813 = vadd.f32 %v2794, %v2812
        %2814 = vdwg.mxu0
        %2815 = vmatpush.bf16.msra.mxu0 %v1774
        %2816 = vmatpush.bf16.msra.mxu0 %v1768
        %2817 = vmatpush.bf16.msra.mxu0 %v1762
        %2818 = vmatpush.bf16.msra.mxu0 %v1756
        %2819 = vmatpush.bf16.msra.mxu0 %v1750
        %2820 = vmatpush.bf16.msra.mxu0 %v1744
        %2821 = vmatpush.bf16.msra.mxu0 %v1738
        %2822 = vmatpush.bf16.msra.mxu0 %v1732
        %2823 = vmatmul.bf16.gmra.mxu0 %v745
        %v2824 = vpop.f32.mrf.mxu0
        %v2825 = vadd.f32 %v2806, %v2824
        %v2826 = vpop.f32.mrf.mxu0
        %v2827 = vadd.f32 %v2808, %v2826
        %2828 = vmatmul.bf16.gmra.mxu0 %v751
        %v2829 = vpop.f32.mrf.mxu0
        %v2830 = vadd.f32 %v2811, %v2829
        %v2831 = vpop.f32.mrf.mxu0
        %v2832 = vadd.f32 %v2813, %v2831
        %2833 = vdwg.mxu0
        %2834 = vmatpush.bf16.msra.mxu0 %v1822
        %2835 = vmatpush.bf16.msra.mxu0 %v1816
        %2836 = vmatpush.bf16.msra.mxu0 %v1810
        %2837 = vmatpush.bf16.msra.mxu0 %v1804
        %2838 = vmatpush.bf16.msra.mxu0 %v1798
        %2839 = vmatpush.bf16.msra.mxu0 %v1792
        %2840 = vmatpush.bf16.msra.mxu0 %v1786
        %2841 = vmatpush.bf16.msra.mxu0 %v1780
        %2842 = vmatmul.bf16.gmra.mxu0 %v746
        %v2843 = vpop.f32.mrf.mxu0
        %v2844 = vadd.f32 %v2825, %v2843
        %v2845 = vpop.f32.mrf.mxu0
        %v2846 = vadd.f32 %v2827, %v2845
        %2847 = vmatmul.bf16.gmra.mxu0 %v752
        %v2848 = vpop.f32.mrf.mxu0
        %v2849 = vadd.f32 %v2830, %v2848
        %v2850 = vpop.f32.mrf.mxu0
        %v2851 = vadd.f32 %v2832, %v2850
        %2852 = vdwg.mxu0
        %2853 = vmatpush.bf16.msra.mxu0 %v1870
        %2854 = vmatpush.bf16.msra.mxu0 %v1864
        %2855 = vmatpush.bf16.msra.mxu0 %v1858
        %2856 = vmatpush.bf16.msra.mxu0 %v1852
        %2857 = vmatpush.bf16.msra.mxu0 %v1846
        %2858 = vmatpush.bf16.msra.mxu0 %v1840
        %2859 = vmatpush.bf16.msra.mxu0 %v1834
        %2860 = vmatpush.bf16.msra.mxu0 %v1828
        %2861 = vmatmul.bf16.gmra.mxu0 %v747
        %v2862 = vpop.f32.mrf.mxu0
        %v2863 = vadd.f32 %v2844, %v2862
        %v2864 = vpop.f32.mrf.mxu0
        %v2865 = vadd.f32 %v2846, %v2864
        %2866 = vmatmul.bf16.gmra.mxu0 %v753
        %v2867 = vpop.f32.mrf.mxu0
        %v2868 = vadd.f32 %v2849, %v2867
        %v2869 = vpop.f32.mrf.mxu0
        %v2870 = vadd.f32 %v2851, %v2869
        %2871 = vdwg.mxu0
        %2872 = vmatpush.bf16.msra.mxu0 %v1918
        %2873 = vmatpush.bf16.msra.mxu0 %v1912
        %2874 = vmatpush.bf16.msra.mxu0 %v1906
        %2875 = vmatpush.bf16.msra.mxu0 %v1900
        %2876 = vmatpush.bf16.msra.mxu0 %v1894
        %2877 = vmatpush.bf16.msra.mxu0 %v1888
        %2878 = vmatpush.bf16.msra.mxu0 %v1882
        %2879 = vmatpush.bf16.msra.mxu0 %v1876
        %2880 = vmatmul.bf16.gmra.mxu0 %v748
        %v2881 = vpop.f32.mrf.mxu0
        %v2882 = vadd.f32 %v2863, %v2881
        %v2883 = vpop.f32.mrf.mxu0
        %v2884 = vadd.f32 %v2865, %v2883
        %2885 = vmatmul.bf16.gmra.mxu0 %v754
        %v2886 = vpop.f32.mrf.mxu0
        %v2887 = vadd.f32 %v2868, %v2886
        %v2888 = vpop.f32.mrf.mxu0
        %v2889 = vadd.f32 %v2870, %v2888
        %2890 = vdwg.mxu0
        %v2891 = vtanh.pop %v2312
        %v2892 = vtanh.pop %v2426
        %v2893 = vtanh.pop %v2540
        %v2894 = vtanh.pop %v2654
        %v2895 = vtanh.pop %v2768
        %v2896 = vtanh.pop %v2882
        %v2897 = vtanh.pop %v2314
        %v2898 = vtanh.pop %v2428
        %v2899 = vtanh.pop %v2542
        %v2900 = vtanh.pop %v2656
        %v2901 = vtanh.pop %v2770
        %v2902 = vtanh.pop %v2884
        %v2903 = vtanh.pop %v2317
        %v2904 = vtanh.pop %v2431
        %v2905 = vtanh.pop %v2545
        %v2906 = vtanh.pop %v2659
        %v2907 = vtanh.pop %v2773
        %v2908 = vtanh.pop %v2887
        %v2909 = vtanh.pop %v2319
        %v2910 = vtanh.pop %v2433
        %v2911 = vtanh.pop %v2547
        %v2912 = vtanh.pop %v2661
        %v2913 = vtanh.pop %v2775
        %v2914 = vtanh.pop %v2889
        %v2915 = vpack.c.bf16 %v2897, %v2891
        %v2916 = vpack.c.bf16 %v2898, %v2892
        %v2917 = vpack.c.bf16 %v2899, %v2893
        %v2918 = vpack.c.bf16 %v2900, %v2894
        %v2919 = vpack.c.bf16 %v2901, %v2895
        %v2920 = vpack.c.bf16 %v2902, %v2896
        %v2921 = vpack.c.bf16 %v2909, %v2903
        %v2922 = vpack.c.bf16 %v2910, %v2904
        %v2923 = vpack.c.bf16 %v2911, %v2905
        %v2924 = vpack.c.bf16 %v2912, %v2906
        %v2925 = vpack.c.bf16 %v2913, %v2907
        %v2926 = vpack.c.bf16 %v2914, %v2908
        %v2927 = vld [vmem:[#allocation8] sm:$0xff]
        %v2928 = vld [vmem:[#allocation8 + $0x8] sm:$0xff]
        %v2929 = vld [vmem:[#allocation8 + $0x10] sm:$0xff]
        %v2930 = vld [vmem:[#allocation8 + $0x18] sm:$0xff]
        %v2931 = vld [vmem:[#allocation8 + $0x20] sm:$0xff]
        %v2932 = vld [vmem:[#allocation8 + $0x28] sm:$0xff]
        %v2933 = vld [vmem:[#allocation8 + $0x30] sm:$0xff]
        %v2934 = vld [vmem:[#allocation8 + $0x38] sm:$0xff]
        %v2935 = vld [vmem:[#allocation8 + $0x40] sm:$0xff]
        %v2936 = vld [vmem:[#allocation8 + $0x48] sm:$0xff]
        %v2937 = vld [vmem:[#allocation8 + $0x50] sm:$0xff]
        %v2938 = vld [vmem:[#allocation8 + $0x58] sm:$0xff]
        %v2939 = vld [vmem:[#allocation8 + $0x60] sm:$0xff]
        %v2940 = vld [vmem:[#allocation8 + $0x68] sm:$0xff]
        %v2941 = vld [vmem:[#allocation8 + $0x70] sm:$0xff]
        %v2942 = vld [vmem:[#allocation8 + $0x78] sm:$0xff]
        %v2943 = vld [vmem:[#allocation8 + $0x80] sm:$0xff]
        %v2944 = vld [vmem:[#allocation8 + $0x88] sm:$0xff]
        %v2945 = vld [vmem:[#allocation8 + $0x90] sm:$0xff]
        %v2946 = vld [vmem:[#allocation8 + $0x98] sm:$0xff]
        %v2947 = vld [vmem:[#allocation8 + $0xa0] sm:$0xff]
        %v2948 = vld [vmem:[#allocation8 + $0xa8] sm:$0xff]
        %v2949 = vld [vmem:[#allocation8 + $0xb0] sm:$0xff]
        %v2950 = vld [vmem:[#allocation8 + $0xb8] sm:$0xff]
        %v2951 = vld [vmem:[#allocation8 + $0xc0] sm:$0xff]
        %v2952 = vld [vmem:[#allocation8 + $0xc8] sm:$0xff]
        %v2953 = vld [vmem:[#allocation8 + $0xd0] sm:$0xff]
        %v2954 = vld [vmem:[#allocation8 + $0xd8] sm:$0xff]
        %v2955 = vld [vmem:[#allocation8 + $0xe0] sm:$0xff]
        %v2956 = vld [vmem:[#allocation8 + $0xe8] sm:$0xff]
        %v2957 = vld [vmem:[#allocation8 + $0xf0] sm:$0xff]
        %v2958 = vld [vmem:[#allocation8 + $0xf8] sm:$0xff]
        %v2959 = vld [vmem:[#allocation8 + $0x100] sm:$0xff]
        %v2960 = vld [vmem:[#allocation8 + $0x108] sm:$0xff]
        %v2961 = vld [vmem:[#allocation8 + $0x110] sm:$0xff]
        %v2962 = vld [vmem:[#allocation8 + $0x118] sm:$0xff]
        %v2963 = vld [vmem:[#allocation8 + $0x120] sm:$0xff]
        %v2964 = vld [vmem:[#allocation8 + $0x128] sm:$0xff]
        %v2965 = vld [vmem:[#allocation8 + $0x130] sm:$0xff]
        %v2966 = vld [vmem:[#allocation8 + $0x138] sm:$0xff]
        %v2967 = vld [vmem:[#allocation8 + $0x140] sm:$0xff]
        %v2968 = vld [vmem:[#allocation8 + $0x148] sm:$0xff]
        %v2969 = vld [vmem:[#allocation8 + $0x150] sm:$0xff]
        %v2970 = vld [vmem:[#allocation8 + $0x158] sm:$0xff]
        %v2971 = vld [vmem:[#allocation8 + $0x160] sm:$0xff]
        %v2972 = vld [vmem:[#allocation8 + $0x168] sm:$0xff]
        %v2973 = vld [vmem:[#allocation8 + $0x170] sm:$0xff]
        %v2974 = vld [vmem:[#allocation8 + $0x178] sm:$0xff]
        %v2975 = vld [vmem:[#allocation8 + $0x180] sm:$0xff]
        %v2976 = vld [vmem:[#allocation8 + $0x188] sm:$0xff]
        %v2977 = vld [vmem:[#allocation8 + $0x190] sm:$0xff]
        %v2978 = vld [vmem:[#allocation8 + $0x198] sm:$0xff]
        %v2979 = vld [vmem:[#allocation8 + $0x1a0] sm:$0xff]
        %v2980 = vld [vmem:[#allocation8 + $0x1a8] sm:$0xff]
        %v2981 = vld [vmem:[#allocation8 + $0x1b0] sm:$0xff]
        %v2982 = vld [vmem:[#allocation8 + $0x1b8] sm:$0xff]
        %v2983 = vld [vmem:[#allocation8 + $0x1c0] sm:$0xff]
        %v2984 = vld [vmem:[#allocation8 + $0x1c8] sm:$0xff]
        %v2985 = vld [vmem:[#allocation8 + $0x1d0] sm:$0xff]
        %v2986 = vld [vmem:[#allocation8 + $0x1d8] sm:$0xff]
        %v2987 = vld [vmem:[#allocation8 + $0x1e0] sm:$0xff]
        %v2988 = vld [vmem:[#allocation8 + $0x1e8] sm:$0xff]
        %v2989 = vld [vmem:[#allocation8 + $0x1f0] sm:$0xff]
        %v2990 = vld [vmem:[#allocation8 + $0x1f8] sm:$0xff]
        %v2991 = vld [vmem:[#allocation8 + $0x200] sm:$0xff]
        %v2992 = vld [vmem:[#allocation8 + $0x208] sm:$0xff]
        %v2993 = vld [vmem:[#allocation8 + $0x210] sm:$0xff]
        %v2994 = vld [vmem:[#allocation8 + $0x218] sm:$0xff]
        %v2995 = vld [vmem:[#allocation8 + $0x220] sm:$0xff]
        %v2996 = vld [vmem:[#allocation8 + $0x228] sm:$0xff]
        %v2997 = vld [vmem:[#allocation8 + $0x230] sm:$0xff]
        %v2998 = vld [vmem:[#allocation8 + $0x238] sm:$0xff]
        %v2999 = vld [vmem:[#allocation8 + $0x240] sm:$0xff]
        %v3000 = vld [vmem:[#allocation8 + $0x248] sm:$0xff]
        %v3001 = vld [vmem:[#allocation8 + $0x250] sm:$0xff]
        %v3002 = vld [vmem:[#allocation8 + $0x258] sm:$0xff]
        %v3003 = vld [vmem:[#allocation8 + $0x260] sm:$0xff]
        %v3004 = vld [vmem:[#allocation8 + $0x268] sm:$0xff]
        %v3005 = vld [vmem:[#allocation8 + $0x270] sm:$0xff]
        %v3006 = vld [vmem:[#allocation8 + $0x278] sm:$0xff]
        %v3007 = vld [vmem:[#allocation8 + $0x280] sm:$0xff]
        %v3008 = vld [vmem:[#allocation8 + $0x288] sm:$0xff]
        %v3009 = vld [vmem:[#allocation8 + $0x290] sm:$0xff]
        %v3010 = vld [vmem:[#allocation8 + $0x298] sm:$0xff]
        %v3011 = vld [vmem:[#allocation8 + $0x2a0] sm:$0xff]
        %v3012 = vld [vmem:[#allocation8 + $0x2a8] sm:$0xff]
        %v3013 = vld [vmem:[#allocation8 + $0x2b0] sm:$0xff]
        %v3014 = vld [vmem:[#allocation8 + $0x2b8] sm:$0xff]
        %v3015 = vld [vmem:[#allocation8 + $0x2c0] sm:$0xff]
        %v3016 = vld [vmem:[#allocation8 + $0x2c8] sm:$0xff]
        %v3017 = vld [vmem:[#allocation8 + $0x2d0] sm:$0xff]
        %v3018 = vld [vmem:[#allocation8 + $0x2d8] sm:$0xff]
        %v3019 = vld [vmem:[#allocation8 + $0x2e0] sm:$0xff]
        %v3020 = vld [vmem:[#allocation8 + $0x2e8] sm:$0xff]
        %v3021 = vld [vmem:[#allocation8 + $0x2f0] sm:$0xff]
        %v3022 = vld [vmem:[#allocation8 + $0x2f8] sm:$0xff]
        %v3023 = vld [vmem:[#allocation10] sm:$0x3]
        %v3025 = vperm.slane %v3023, 0
        %v3026 = vperm.slane %v3023, 1
        %v3125 = vunpack.c.l.b16 %v2927
        %v3126 = vunpack.c.h.b16 %v2927
        %v3127 = vunpack.c.l.b16 %v2928
        %v3128 = vunpack.c.h.b16 %v2928
        %v3129 = vunpack.c.l.b16 %v2929
        %v3130 = vunpack.c.h.b16 %v2929
        %v3131 = vunpack.c.l.b16 %v2930
        %v3132 = vunpack.c.h.b16 %v2930
        %v3133 = vunpack.c.l.b16 %v2931
        %v3134 = vunpack.c.h.b16 %v2931
        %v3135 = vunpack.c.l.b16 %v2932
        %v3136 = vunpack.c.h.b16 %v2932
        %v3137 = vunpack.c.l.b16 %v2933
        %v3138 = vunpack.c.h.b16 %v2933
        %v3139 = vunpack.c.l.b16 %v2934
        %v3140 = vunpack.c.h.b16 %v2934
        %v3141 = vunpack.c.l.b16 %v2935
        %v3142 = vunpack.c.h.b16 %v2935
        %v3143 = vunpack.c.l.b16 %v2936
        %v3144 = vunpack.c.h.b16 %v2936
        %v3145 = vunpack.c.l.b16 %v2937
        %v3146 = vunpack.c.h.b16 %v2937
        %v3147 = vunpack.c.l.b16 %v2938
        %v3148 = vunpack.c.h.b16 %v2938
        %v3149 = vunpack.c.l.b16 %v2939
        %v3150 = vunpack.c.h.b16 %v2939
        %v3151 = vunpack.c.l.b16 %v2940
        %v3152 = vunpack.c.h.b16 %v2940
        %v3153 = vunpack.c.l.b16 %v2941
        %v3154 = vunpack.c.h.b16 %v2941
        %v3155 = vunpack.c.l.b16 %v2942
        %v3156 = vunpack.c.h.b16 %v2942
        %v3157 = vunpack.c.l.b16 %v2943
        %v3158 = vunpack.c.h.b16 %v2943
        %v3159 = vunpack.c.l.b16 %v2944
        %v3160 = vunpack.c.h.b16 %v2944
        %v3161 = vunpack.c.l.b16 %v2945
        %v3162 = vunpack.c.h.b16 %v2945
        %v3163 = vunpack.c.l.b16 %v2946
        %v3164 = vunpack.c.h.b16 %v2946
        %v3165 = vunpack.c.l.b16 %v2947
        %v3166 = vunpack.c.h.b16 %v2947
        %v3167 = vunpack.c.l.b16 %v2948
        %v3168 = vunpack.c.h.b16 %v2948
        %v3169 = vunpack.c.l.b16 %v2949
        %v3170 = vunpack.c.h.b16 %v2949
        %v3171 = vunpack.c.l.b16 %v2950
        %v3172 = vunpack.c.h.b16 %v2950
        %v3173 = vunpack.c.l.b16 %v2951
        %v3174 = vunpack.c.h.b16 %v2951
        %v3175 = vunpack.c.l.b16 %v2952
        %v3176 = vunpack.c.h.b16 %v2952
        %v3177 = vunpack.c.l.b16 %v2953
        %v3178 = vunpack.c.h.b16 %v2953
        %v3179 = vunpack.c.l.b16 %v2954
        %v3180 = vunpack.c.h.b16 %v2954
        %v3181 = vunpack.c.l.b16 %v2955
        %v3182 = vunpack.c.h.b16 %v2955
        %v3183 = vunpack.c.l.b16 %v2956
        %v3184 = vunpack.c.h.b16 %v2956
        %v3185 = vunpack.c.l.b16 %v2957
        %v3186 = vunpack.c.h.b16 %v2957
        %v3187 = vunpack.c.l.b16 %v2958
        %v3188 = vunpack.c.h.b16 %v2958
        %v3189 = vunpack.c.l.b16 %v2959
        %v3190 = vunpack.c.h.b16 %v2959
        %v3191 = vunpack.c.l.b16 %v2960
        %v3192 = vunpack.c.h.b16 %v2960
        %v3193 = vunpack.c.l.b16 %v2961
        %v3194 = vunpack.c.h.b16 %v2961
        %v3195 = vunpack.c.l.b16 %v2962
        %v3196 = vunpack.c.h.b16 %v2962
        %v3197 = vunpack.c.l.b16 %v2963
        %v3198 = vunpack.c.h.b16 %v2963
        %v3199 = vunpack.c.l.b16 %v2964
        %v3200 = vunpack.c.h.b16 %v2964
        %v3201 = vunpack.c.l.b16 %v2965
        %v3202 = vunpack.c.h.b16 %v2965
        %v3203 = vunpack.c.l.b16 %v2966
        %v3204 = vunpack.c.h.b16 %v2966
        %v3205 = vunpack.c.l.b16 %v2967
        %v3206 = vunpack.c.h.b16 %v2967
        %v3207 = vunpack.c.l.b16 %v2968
        %v3208 = vunpack.c.h.b16 %v2968
        %v3209 = vunpack.c.l.b16 %v2969
        %v3210 = vunpack.c.h.b16 %v2969
        %v3211 = vunpack.c.l.b16 %v2970
        %v3212 = vunpack.c.h.b16 %v2970
        %v3213 = vunpack.c.l.b16 %v2971
        %v3214 = vunpack.c.h.b16 %v2971
        %v3215 = vunpack.c.l.b16 %v2972
        %v3216 = vunpack.c.h.b16 %v2972
        %v3217 = vunpack.c.l.b16 %v2973
        %v3218 = vunpack.c.h.b16 %v2973
        %v3219 = vunpack.c.l.b16 %v2974
        %v3220 = vunpack.c.h.b16 %v2974
        %v3221 = vunpack.c.l.b16 %v2975
        %v3222 = vunpack.c.h.b16 %v2975
        %v3223 = vunpack.c.l.b16 %v2976
        %v3224 = vunpack.c.h.b16 %v2976
        %v3225 = vunpack.c.l.b16 %v2977
        %v3226 = vunpack.c.h.b16 %v2977
        %v3227 = vunpack.c.l.b16 %v2978
        %v3228 = vunpack.c.h.b16 %v2978
        %v3229 = vunpack.c.l.b16 %v2979
        %v3230 = vunpack.c.h.b16 %v2979
        %v3231 = vunpack.c.l.b16 %v2980
        %v3232 = vunpack.c.h.b16 %v2980
        %v3233 = vunpack.c.l.b16 %v2981
        %v3234 = vunpack.c.h.b16 %v2981
        %v3235 = vunpack.c.l.b16 %v2982
        %v3236 = vunpack.c.h.b16 %v2982
        %v3237 = vunpack.c.l.b16 %v2983
        %v3238 = vunpack.c.h.b16 %v2983
        %v3239 = vunpack.c.l.b16 %v2984
        %v3240 = vunpack.c.h.b16 %v2984
        %v3241 = vunpack.c.l.b16 %v2985
        %v3242 = vunpack.c.h.b16 %v2985
        %v3243 = vunpack.c.l.b16 %v2986
        %v3244 = vunpack.c.h.b16 %v2986
        %v3245 = vunpack.c.l.b16 %v2987
        %v3246 = vunpack.c.h.b16 %v2987
        %v3247 = vunpack.c.l.b16 %v2988
        %v3248 = vunpack.c.h.b16 %v2988
        %v3249 = vunpack.c.l.b16 %v2989
        %v3250 = vunpack.c.h.b16 %v2989
        %v3251 = vunpack.c.l.b16 %v2990
        %v3252 = vunpack.c.h.b16 %v2990
        %v3253 = vunpack.c.l.b16 %v2991
        %v3254 = vunpack.c.h.b16 %v2991
        %v3255 = vunpack.c.l.b16 %v2992
        %v3256 = vunpack.c.h.b16 %v2992
        %v3257 = vunpack.c.l.b16 %v2993
        %v3258 = vunpack.c.h.b16 %v2993
        %v3259 = vunpack.c.l.b16 %v2994
        %v3260 = vunpack.c.h.b16 %v2994
        %v3261 = vunpack.c.l.b16 %v2995
        %v3262 = vunpack.c.h.b16 %v2995
        %v3263 = vunpack.c.l.b16 %v2996
        %v3264 = vunpack.c.h.b16 %v2996
        %v3265 = vunpack.c.l.b16 %v2997
        %v3266 = vunpack.c.h.b16 %v2997
        %v3267 = vunpack.c.l.b16 %v2998
        %v3268 = vunpack.c.h.b16 %v2998
        %v3269 = vunpack.c.l.b16 %v2999
        %v3270 = vunpack.c.h.b16 %v2999
        %v3271 = vunpack.c.l.b16 %v3000
        %v3272 = vunpack.c.h.b16 %v3000
        %v3273 = vunpack.c.l.b16 %v3001
        %v3274 = vunpack.c.h.b16 %v3001
        %v3275 = vunpack.c.l.b16 %v3002
        %v3276 = vunpack.c.h.b16 %v3002
        %v3277 = vunpack.c.l.b16 %v3003
        %v3278 = vunpack.c.h.b16 %v3003
        %v3279 = vunpack.c.l.b16 %v3004
        %v3280 = vunpack.c.h.b16 %v3004
        %v3281 = vunpack.c.l.b16 %v3005
        %v3282 = vunpack.c.h.b16 %v3005
        %v3283 = vunpack.c.l.b16 %v3006
        %v3284 = vunpack.c.h.b16 %v3006
        %v3285 = vunpack.c.l.b16 %v3007
        %v3286 = vunpack.c.h.b16 %v3007
        %v3287 = vunpack.c.l.b16 %v3008
        %v3288 = vunpack.c.h.b16 %v3008
        %v3289 = vunpack.c.l.b16 %v3009
        %v3290 = vunpack.c.h.b16 %v3009
        %v3291 = vunpack.c.l.b16 %v3010
        %v3292 = vunpack.c.h.b16 %v3010
        %v3293 = vunpack.c.l.b16 %v3011
        %v3294 = vunpack.c.h.b16 %v3011
        %v3295 = vunpack.c.l.b16 %v3012
        %v3296 = vunpack.c.h.b16 %v3012
        %v3297 = vunpack.c.l.b16 %v3013
        %v3298 = vunpack.c.h.b16 %v3013
        %v3299 = vunpack.c.l.b16 %v3014
        %v3300 = vunpack.c.h.b16 %v3014
        %v3301 = vunpack.c.l.b16 %v3015
        %v3302 = vunpack.c.h.b16 %v3015
        %v3303 = vunpack.c.l.b16 %v3016
        %v3304 = vunpack.c.h.b16 %v3016
        %v3305 = vunpack.c.l.b16 %v3017
        %v3306 = vunpack.c.h.b16 %v3017
        %v3307 = vunpack.c.l.b16 %v3018
        %v3308 = vunpack.c.h.b16 %v3018
        %v3309 = vunpack.c.l.b16 %v3019
        %v3310 = vunpack.c.h.b16 %v3019
        %v3311 = vunpack.c.l.b16 %v3020
        %v3312 = vunpack.c.h.b16 %v3020
        %v3313 = vunpack.c.l.b16 %v3021
        %v3314 = vunpack.c.h.b16 %v3021
        %v3315 = vunpack.c.l.b16 %v3022
        %v3316 = vunpack.c.h.b16 %v3022
        %v3317 = vpack.c.b16 %v3127, %v3125
        %v3318 = vpack.c.b16 %v3128, %v3126
        %v3319 = vpack.c.b16 %v3131, %v3129
        %v3320 = vpack.c.b16 %v3132, %v3130
        %v3321 = vpack.c.b16 %v3135, %v3133
        %v3322 = vpack.c.b16 %v3136, %v3134
        %v3323 = vpack.c.b16 %v3139, %v3137
        %v3324 = vpack.c.b16 %v3140, %v3138
        %v3325 = vpack.c.b16 %v3143, %v3141
        %v3326 = vpack.c.b16 %v3144, %v3142
        %v3327 = vpack.c.b16 %v3147, %v3145
        %v3328 = vpack.c.b16 %v3148, %v3146
        %v3329 = vpack.c.b16 %v3151, %v3149
        %v3330 = vpack.c.b16 %v3152, %v3150
        %v3331 = vpack.c.b16 %v3155, %v3153
        %v3332 = vpack.c.b16 %v3156, %v3154
        %v3333 = vpack.c.b16 %v3159, %v3157
        %v3334 = vpack.c.b16 %v3160, %v3158
        %v3335 = vpack.c.b16 %v3163, %v3161
        %v3336 = vpack.c.b16 %v3164, %v3162
        %v3337 = vpack.c.b16 %v3167, %v3165
        %v3338 = vpack.c.b16 %v3168, %v3166
        %v3339 = vpack.c.b16 %v3171, %v3169
        %v3340 = vpack.c.b16 %v3172, %v3170
        %v3341 = vpack.c.b16 %v3175, %v3173
        %v3342 = vpack.c.b16 %v3176, %v3174
        %v3343 = vpack.c.b16 %v3179, %v3177
        %v3344 = vpack.c.b16 %v3180, %v3178
        %v3345 = vpack.c.b16 %v3183, %v3181
        %v3346 = vpack.c.b16 %v3184, %v3182
        %v3347 = vpack.c.b16 %v3187, %v3185
        %v3348 = vpack.c.b16 %v3188, %v3186
        %v3349 = vpack.c.b16 %v3191, %v3189
        %v3350 = vpack.c.b16 %v3192, %v3190
        %v3351 = vpack.c.b16 %v3195, %v3193
        %v3352 = vpack.c.b16 %v3196, %v3194
        %v3353 = vpack.c.b16 %v3199, %v3197
        %v3354 = vpack.c.b16 %v3200, %v3198
        %v3355 = vpack.c.b16 %v3203, %v3201
        %v3356 = vpack.c.b16 %v3204, %v3202
        %v3357 = vpack.c.b16 %v3207, %v3205
        %v3358 = vpack.c.b16 %v3208, %v3206
        %v3359 = vpack.c.b16 %v3211, %v3209
        %v3360 = vpack.c.b16 %v3212, %v3210
        %v3361 = vpack.c.b16 %v3215, %v3213
        %v3362 = vpack.c.b16 %v3216, %v3214
        %v3363 = vpack.c.b16 %v3219, %v3217
        %v3364 = vpack.c.b16 %v3220, %v3218
        %v3365 = vpack.c.b16 %v3223, %v3221
        %v3366 = vpack.c.b16 %v3224, %v3222
        %v3367 = vpack.c.b16 %v3227, %v3225
        %v3368 = vpack.c.b16 %v3228, %v3226
        %v3369 = vpack.c.b16 %v3231, %v3229
        %v3370 = vpack.c.b16 %v3232, %v3230
        %v3371 = vpack.c.b16 %v3235, %v3233
        %v3372 = vpack.c.b16 %v3236, %v3234
        %v3373 = vpack.c.b16 %v3239, %v3237
        %v3374 = vpack.c.b16 %v3240, %v3238
        %v3375 = vpack.c.b16 %v3243, %v3241
        %v3376 = vpack.c.b16 %v3244, %v3242
        %v3377 = vpack.c.b16 %v3247, %v3245
        %v3378 = vpack.c.b16 %v3248, %v3246
        %v3379 = vpack.c.b16 %v3251, %v3249
        %v3380 = vpack.c.b16 %v3252, %v3250
        %v3381 = vpack.c.b16 %v3255, %v3253
        %v3382 = vpack.c.b16 %v3256, %v3254
        %v3383 = vpack.c.b16 %v3259, %v3257
        %v3384 = vpack.c.b16 %v3260, %v3258
        %v3385 = vpack.c.b16 %v3263, %v3261
        %v3386 = vpack.c.b16 %v3264, %v3262
        %v3387 = vpack.c.b16 %v3267, %v3265
        %v3388 = vpack.c.b16 %v3268, %v3266
        %v3389 = vpack.c.b16 %v3271, %v3269
        %v3390 = vpack.c.b16 %v3272, %v3270
        %v3391 = vpack.c.b16 %v3275, %v3273
        %v3392 = vpack.c.b16 %v3276, %v3274
        %v3393 = vpack.c.b16 %v3279, %v3277
        %v3394 = vpack.c.b16 %v3280, %v3278
        %v3395 = vpack.c.b16 %v3283, %v3281
        %v3396 = vpack.c.b16 %v3284, %v3282
        %v3397 = vpack.c.b16 %v3287, %v3285
        %v3398 = vpack.c.b16 %v3288, %v3286
        %v3399 = vpack.c.b16 %v3291, %v3289
        %v3400 = vpack.c.b16 %v3292, %v3290
        %v3401 = vpack.c.b16 %v3295, %v3293
        %v3402 = vpack.c.b16 %v3296, %v3294
        %v3403 = vpack.c.b16 %v3299, %v3297
        %v3404 = vpack.c.b16 %v3300, %v3298
        %v3405 = vpack.c.b16 %v3303, %v3301
        %v3406 = vpack.c.b16 %v3304, %v3302
        %v3407 = vpack.c.b16 %v3307, %v3305
        %v3408 = vpack.c.b16 %v3308, %v3306
        %v3409 = vpack.c.b16 %v3311, %v3309
        %v3410 = vpack.c.b16 %v3312, %v3310
        %v3411 = vpack.c.b16 %v3315, %v3313
        %v3412 = vpack.c.b16 %v3316, %v3314
        %3509 = vmatpush.bf16.msra.mxu0 %v3331
        %3510 = vmatpush.bf16.msra.mxu0 %v3329
        %3511 = vmatpush.bf16.msra.mxu0 %v3327
        %3512 = vmatpush.bf16.msra.mxu0 %v3325
        %3513 = vmatpush.bf16.msra.mxu0 %v3323
        %3514 = vmatpush.bf16.msra.mxu0 %v3321
        %3515 = vmatpush.bf16.msra.mxu0 %v3319
        %3516 = vmatpush.bf16.msra.mxu0 %v3317
        %3517 = vmatmul.bf16.gmra.mxu0 %v2915
        %v3518 = vpop.f32.mrf.mxu0
        %v3519 = vadd.f32 %v3025, %v3518
        %v3520 = vpop.f32.mrf.mxu0
        %v3521 = vadd.f32 %v3025, %v3520
        %3522 = vmatmul.bf16.gmra.mxu0 %v2921
        %v3523 = vpop.f32.mrf.mxu0
        %v3524 = vadd.f32 %v3025, %v3523
        %v3525 = vpop.f32.mrf.mxu0
        %v3526 = vadd.f32 %v3025, %v3525
        %3527 = vdwg.mxu0
        %3528 = vmatpush.bf16.msra.mxu0 %v3347
        %3529 = vmatpush.bf16.msra.mxu0 %v3345
        %3530 = vmatpush.bf16.msra.mxu0 %v3343
        %3531 = vmatpush.bf16.msra.mxu0 %v3341
        %3532 = vmatpush.bf16.msra.mxu0 %v3339
        %3533 = vmatpush.bf16.msra.mxu0 %v3337
        %3534 = vmatpush.bf16.msra.mxu0 %v3335
        %3535 = vmatpush.bf16.msra.mxu0 %v3333
        %3536 = vmatmul.bf16.gmra.mxu0 %v2916
        %v3537 = vpop.f32.mrf.mxu0
        %v3538 = vadd.f32 %v3519, %v3537
        %v3539 = vpop.f32.mrf.mxu0
        %v3540 = vadd.f32 %v3521, %v3539
        %3541 = vmatmul.bf16.gmra.mxu0 %v2922
        %v3542 = vpop.f32.mrf.mxu0
        %v3543 = vadd.f32 %v3524, %v3542
        %v3544 = vpop.f32.mrf.mxu0
        %v3545 = vadd.f32 %v3526, %v3544
        %3546 = vdwg.mxu0
        %3547 = vmatpush.bf16.msra.mxu0 %v3363
        %3548 = vmatpush.bf16.msra.mxu0 %v3361
        %3549 = vmatpush.bf16.msra.mxu0 %v3359
        %3550 = vmatpush.bf16.msra.mxu0 %v3357
        %3551 = vmatpush.bf16.msra.mxu0 %v3355
        %3552 = vmatpush.bf16.msra.mxu0 %v3353
        %3553 = vmatpush.bf16.msra.mxu0 %v3351
        %3554 = vmatpush.bf16.msra.mxu0 %v3349
        %3555 = vmatmul.bf16.gmra.mxu0 %v2917
        %v3556 = vpop.f32.mrf.mxu0
        %v3557 = vadd.f32 %v3538, %v3556
        %v3558 = vpop.f32.mrf.mxu0
        %v3559 = vadd.f32 %v3540, %v3558
        %3560 = vmatmul.bf16.gmra.mxu0 %v2923
        %v3561 = vpop.f32.mrf.mxu0
        %v3562 = vadd.f32 %v3543, %v3561
        %v3563 = vpop.f32.mrf.mxu0
        %v3564 = vadd.f32 %v3545, %v3563
        %3565 = vdwg.mxu0
        %3566 = vmatpush.bf16.msra.mxu0 %v3379
        %3567 = vmatpush.bf16.msra.mxu0 %v3377
        %3568 = vmatpush.bf16.msra.mxu0 %v3375
        %3569 = vmatpush.bf16.msra.mxu0 %v3373
        %3570 = vmatpush.bf16.msra.mxu0 %v3371
        %3571 = vmatpush.bf16.msra.mxu0 %v3369
        %3572 = vmatpush.bf16.msra.mxu0 %v3367
        %3573 = vmatpush.bf16.msra.mxu0 %v3365
        %3574 = vmatmul.bf16.gmra.mxu0 %v2918
        %v3575 = vpop.f32.mrf.mxu0
        %v3576 = vadd.f32 %v3557, %v3575
        %v3577 = vpop.f32.mrf.mxu0
        %v3578 = vadd.f32 %v3559, %v3577
        %3579 = vmatmul.bf16.gmra.mxu0 %v2924
        %v3580 = vpop.f32.mrf.mxu0
        %v3581 = vadd.f32 %v3562, %v3580
        %v3582 = vpop.f32.mrf.mxu0
        %v3583 = vadd.f32 %v3564, %v3582
        %3584 = vdwg.mxu0
        %3585 = vmatpush.bf16.msra.mxu0 %v3395
        %3586 = vmatpush.bf16.msra.mxu0 %v3393
        %3587 = vmatpush.bf16.msra.mxu0 %v3391
        %3588 = vmatpush.bf16.msra.mxu0 %v3389
        %3589 = vmatpush.bf16.msra.mxu0 %v3387
        %3590 = vmatpush.bf16.msra.mxu0 %v3385
        %3591 = vmatpush.bf16.msra.mxu0 %v3383
        %3592 = vmatpush.bf16.msra.mxu0 %v3381
        %3593 = vmatmul.bf16.gmra.mxu0 %v2919
        %v3594 = vpop.f32.mrf.mxu0
        %v3595 = vadd.f32 %v3576, %v3594
        %v3596 = vpop.f32.mrf.mxu0
        %v3597 = vadd.f32 %v3578, %v3596
        %3598 = vmatmul.bf16.gmra.mxu0 %v2925
        %v3599 = vpop.f32.mrf.mxu0
        %v3600 = vadd.f32 %v3581, %v3599
        %v3601 = vpop.f32.mrf.mxu0
        %v3602 = vadd.f32 %v3583, %v3601
        %3603 = vdwg.mxu0
        %3604 = vmatpush.bf16.msra.mxu0 %v3411
        %3605 = vmatpush.bf16.msra.mxu0 %v3409
        %3606 = vmatpush.bf16.msra.mxu0 %v3407
        %3607 = vmatpush.bf16.msra.mxu0 %v3405
        %3608 = vmatpush.bf16.msra.mxu0 %v3403
        %3609 = vmatpush.bf16.msra.mxu0 %v3401
        %3610 = vmatpush.bf16.msra.mxu0 %v3399
        %3611 = vmatpush.bf16.msra.mxu0 %v3397
        %3612 = vmatmul.bf16.gmra.mxu0 %v2920
        %v3613 = vpop.f32.mrf.mxu0
        %v3614 = vadd.f32 %v3595, %v3613
        %v3615 = vpop.f32.mrf.mxu0
        %v3616 = vadd.f32 %v3597, %v3615
        %3617 = vmatmul.bf16.gmra.mxu0 %v2926
        %v3618 = vpop.f32.mrf.mxu0
        %v3619 = vadd.f32 %v3600, %v3618
        %v3620 = vpop.f32.mrf.mxu0
        %v3621 = vadd.f32 %v3602, %v3620
        %3622 = vdwg.mxu0
        %3623 = vmatpush.bf16.msra.mxu0 %v3332
        %3624 = vmatpush.bf16.msra.mxu0 %v3330
        %3625 = vmatpush.bf16.msra.mxu0 %v3328
        %3626 = vmatpush.bf16.msra.mxu0 %v3326
        %3627 = vmatpush.bf16.msra.mxu0 %v3324
        %3628 = vmatpush.bf16.msra.mxu0 %v3322
        %3629 = vmatpush.bf16.msra.mxu0 %v3320
        %3630 = vmatpush.bf16.msra.mxu0 %v3318
        %3631 = vmatmul.bf16.gmra.mxu0 %v2915
        %v3632 = vpop.f32.mrf.mxu0
        %v3633 = vadd.f32 %v3026, %v3632
        %v3634 = vpop.f32.mrf.mxu0
        %v3635 = vadd.f32 %v3026, %v3634
        %3636 = vmatmul.bf16.gmra.mxu0 %v2921
        %v3637 = vpop.f32.mrf.mxu0
        %v3638 = vadd.f32 %v3026, %v3637
        %v3639 = vpop.f32.mrf.mxu0
        %v3640 = vadd.f32 %v3026, %v3639
        %3641 = vdwg.mxu0
        %3642 = vmatpush.bf16.msra.mxu0 %v3348
        %3643 = vmatpush.bf16.msra.mxu0 %v3346
        %3644 = vmatpush.bf16.msra.mxu0 %v3344
        %3645 = vmatpush.bf16.msra.mxu0 %v3342
        %3646 = vmatpush.bf16.msra.mxu0 %v3340
        %3647 = vmatpush.bf16.msra.mxu0 %v3338
        %3648 = vmatpush.bf16.msra.mxu0 %v3336
        %3649 = vmatpush.bf16.msra.mxu0 %v3334
        %3650 = vmatmul.bf16.gmra.mxu0 %v2916
        %v3651 = vpop.f32.mrf.mxu0
        %v3652 = vadd.f32 %v3633, %v3651
        %v3653 = vpop.f32.mrf.mxu0
        %v3654 = vadd.f32 %v3635, %v3653
        %3655 = vmatmul.bf16.gmra.mxu0 %v2922
        %v3656 = vpop.f32.mrf.mxu0
        %v3657 = vadd.f32 %v3638, %v3656
        %v3658 = vpop.f32.mrf.mxu0
        %v3659 = vadd.f32 %v3640, %v3658
        %3660 = vdwg.mxu0
        %3661 = vmatpush.bf16.msra.mxu0 %v3364
        %3662 = vmatpush.bf16.msra.mxu0 %v3362
        %3663 = vmatpush.bf16.msra.mxu0 %v3360
        %3664 = vmatpush.bf16.msra.mxu0 %v3358
        %3665 = vmatpush.bf16.msra.mxu0 %v3356
        %3666 = vmatpush.bf16.msra.mxu0 %v3354
        %3667 = vmatpush.bf16.msra.mxu0 %v3352
        %3668 = vmatpush.bf16.msra.mxu0 %v3350
        %3669 = vmatmul.bf16.gmra.mxu0 %v2917
        %v3670 = vpop.f32.mrf.mxu0
        %v3671 = vadd.f32 %v3652, %v3670
        %v3672 = vpop.f32.mrf.mxu0
        %v3673 = vadd.f32 %v3654, %v3672
        %3674 = vmatmul.bf16.gmra.mxu0 %v2923
        %v3675 = vpop.f32.mrf.mxu0
        %v3676 = vadd.f32 %v3657, %v3675
        %v3677 = vpop.f32.mrf.mxu0
        %v3678 = vadd.f32 %v3659, %v3677
        %3679 = vdwg.mxu0
        %3680 = vmatpush.bf16.msra.mxu0 %v3380
        %3681 = vmatpush.bf16.msra.mxu0 %v3378
        %3682 = vmatpush.bf16.msra.mxu0 %v3376
        %3683 = vmatpush.bf16.msra.mxu0 %v3374
        %3684 = vmatpush.bf16.msra.mxu0 %v3372
        %3685 = vmatpush.bf16.msra.mxu0 %v3370
        %3686 = vmatpush.bf16.msra.mxu0 %v3368
        %3687 = vmatpush.bf16.msra.mxu0 %v3366
        %3688 = vmatmul.bf16.gmra.mxu0 %v2918
        %v3689 = vpop.f32.mrf.mxu0
        %v3690 = vadd.f32 %v3671, %v3689
        %v3691 = vpop.f32.mrf.mxu0
        %v3692 = vadd.f32 %v3673, %v3691
        %3693 = vmatmul.bf16.gmra.mxu0 %v2924
        %v3694 = vpop.f32.mrf.mxu0
        %v3695 = vadd.f32 %v3676, %v3694
        %v3696 = vpop.f32.mrf.mxu0
        %v3697 = vadd.f32 %v3678, %v3696
        %3698 = vdwg.mxu0
        %3699 = vmatpush.bf16.msra.mxu0 %v3396
        %3700 = vmatpush.bf16.msra.mxu0 %v3394
        %3701 = vmatpush.bf16.msra.mxu0 %v3392
        %3702 = vmatpush.bf16.msra.mxu0 %v3390
        %3703 = vmatpush.bf16.msra.mxu0 %v3388
        %3704 = vmatpush.bf16.msra.mxu0 %v3386
        %3705 = vmatpush.bf16.msra.mxu0 %v3384
        %3706 = vmatpush.bf16.msra.mxu0 %v3382
        %3707 = vmatmul.bf16.gmra.mxu0 %v2919
        %v3708 = vpop.f32.mrf.mxu0
        %v3709 = vadd.f32 %v3690, %v3708
        %v3710 = vpop.f32.mrf.mxu0
        %v3711 = vadd.f32 %v3692, %v3710
        %3712 = vmatmul.bf16.gmra.mxu0 %v2925
        %v3713 = vpop.f32.mrf.mxu0
        %v3714 = vadd.f32 %v3695, %v3713
        %v3715 = vpop.f32.mrf.mxu0
        %v3716 = vadd.f32 %v3697, %v3715
        %3717 = vdwg.mxu0
        %3718 = vmatpush.bf16.msra.mxu0 %v3412
        %3719 = vmatpush.bf16.msra.mxu0 %v3410
        %3720 = vmatpush.bf16.msra.mxu0 %v3408
        %3721 = vmatpush.bf16.msra.mxu0 %v3406
        %3722 = vmatpush.bf16.msra.mxu0 %v3404
        %3723 = vmatpush.bf16.msra.mxu0 %v3402
        %3724 = vmatpush.bf16.msra.mxu0 %v3400
        %3725 = vmatpush.bf16.msra.mxu0 %v3398
        %3726 = vmatmul.bf16.gmra.mxu0 %v2920
        %v3727 = vpop.f32.mrf.mxu0
        %v3728 = vadd.f32 %v3709, %v3727
        %v3729 = vpop.f32.mrf.mxu0
        %v3730 = vadd.f32 %v3711, %v3729
        %3731 = vmatmul.bf16.gmra.mxu0 %v2926
        %v3732 = vpop.f32.mrf.mxu0
        %v3733 = vadd.f32 %v3714, %v3732
        %v3734 = vpop.f32.mrf.mxu0
        %v3735 = vadd.f32 %v3716, %v3734
        %3736 = vdwg.mxu0
        %v3737 = vadd.f32 %v3614, %v3728
        %3738 = vadd.xlane.f32.xlu0 %v3737
        %v3739 = vpop.xlane.xlu0 %3738
        %v3740 = vadd.f32 %v3616, %v3730
        %3741 = vadd.xlane.f32.xlu0 %v3740
        %v3742 = vpop.xlane.xlu0 %3741
        %v3743 = vadd.f32 %v3619, %v3733
        %3744 = vadd.xlane.f32.xlu0 %v3743
        %v3745 = vpop.xlane.xlu0 %3744
        %v3746 = vadd.f32 %v3621, %v3735
        %3747 = vadd.xlane.f32.xlu0 %v3746
        %v3748 = vpop.xlane.xlu0 %3747
        %v3749 = vrcp.pop 256.0
        %v3750 = vmul.f32 256.0, %v3749
        %v3751 = vsub.f32 1.0, %v3750
        %v3752 = vmul.f32 %v3749, %v3751
        %v3753 = vadd.f32 %v3749, %v3752
        %vm3754 = vweird.f32 %v3749
        %v3755 = vsel %vm3754, %v3749, %v3753
        %v3756 = vmul.f32 %v3739, %v3755
        %v3757 = vmul.f32 %v3742, %v3755
        %v3758 = vmul.f32 %v3745, %v3755
        %v3759 = vmul.f32 %v3748, %v3755
        %v3760 = vsub.f32 %v3614, %v3756
        %v3761 = vsub.f32 %v3728, %v3756
        %v3762 = vsub.f32 %v3616, %v3757
        %v3763 = vsub.f32 %v3730, %v3757
        %v3764 = vsub.f32 %v3619, %v3758
        %v3765 = vsub.f32 %v3733, %v3758
        %v3766 = vsub.f32 %v3621, %v3759
        %v3767 = vsub.f32 %v3735, %v3759
        %v3768 = vmul.f32 %v3760, %v3760
        %v3769 = vmul.f32 %v3761, %v3761
        %v3770 = vmul.f32 %v3762, %v3762
        %v3771 = vmul.f32 %v3763, %v3763
        %v3772 = vmul.f32 %v3764, %v3764
        %v3773 = vmul.f32 %v3765, %v3765
        %v3774 = vmul.f32 %v3766, %v3766
        %v3775 = vmul.f32 %v3767, %v3767
        %v3776 = vadd.f32 %v3768, %v3769
        %3777 = vadd.xlane.f32.xlu0 %v3776
        %v3778 = vpop.xlane.xlu0 %3777
        %v3779 = vadd.f32 %v3770, %v3771
        %3780 = vadd.xlane.f32.xlu0 %v3779
        %v3781 = vpop.xlane.xlu0 %3780
        %v3782 = vadd.f32 %v3772, %v3773
        %3783 = vadd.xlane.f32.xlu0 %v3782
        %v3784 = vpop.xlane.xlu0 %3783
        %v3785 = vadd.f32 %v3774, %v3775
        %3786 = vadd.xlane.f32.xlu0 %v3785
        %v3787 = vpop.xlane.xlu0 %3786
        %v3788 = vmul.f32 %v3778, %v3755
        %v3789 = vmul.f32 %v3781, %v3755
        %v3790 = vmul.f32 %v3784, %v3755
        %v3791 = vmul.f32 %v3787, %v3755
        %v3792 = vadd.f32 %v3788, 1e-05
        %v3793 = vadd.f32 %v3789, 1e-05
        %v3794 = vadd.f32 %v3790, 1e-05
        %v3795 = vadd.f32 %v3791, 1e-05
        %v3796 = vrsqrt.pop %v3792
        %v3797 = vmul.f32 %v3796, %v3792
        %v3798 = vmul.f32 %v3797, %v3796
        %v3799 = vmul.f32 0.5, %v3798
        %v3800 = vsub.f32 1.5, %v3799
        %v3801 = vmul.f32 %v3796, %v3800
        %vm3802 = vweird.f32 %v3792
        %vm3803 = vweird.f32 %v3796
        %vm3804 = vmor %vm3802, %vm3803
        %v3805 = vsel %vm3804, %v3796, %v3801
        %v3806 = vrsqrt.pop %v3793
        %v3807 = vmul.f32 %v3806, %v3793
        %v3808 = vmul.f32 %v3807, %v3806
        %v3809 = vmul.f32 0.5, %v3808
        %v3810 = vsub.f32 1.5, %v3809
        %v3811 = vmul.f32 %v3806, %v3810
        %vm3812 = vweird.f32 %v3793
        %vm3813 = vweird.f32 %v3806
        %vm3814 = vmor %vm3812, %vm3813
        %v3815 = vsel %vm3814, %v3806, %v3811
        %v3816 = vrsqrt.pop %v3794
        %v3817 = vmul.f32 %v3816, %v3794
        %v3818 = vmul.f32 %v3817, %v3816
        %v3819 = vmul.f32 0.5, %v3818
        %v3820 = vsub.f32 1.5, %v3819
        %v3821 = vmul.f32 %v3816, %v3820
        %vm3822 = vweird.f32 %v3794
        %vm3823 = vweird.f32 %v3816
        %vm3824 = vmor %vm3822, %vm3823
        %v3825 = vsel %vm3824, %v3816, %v3821
        %v3826 = vrsqrt.pop %v3795
        %v3827 = vmul.f32 %v3826, %v3795
        %v3828 = vmul.f32 %v3827, %v3826
        %v3829 = vmul.f32 0.5, %v3828
        %v3830 = vsub.f32 1.5, %v3829
        %v3831 = vmul.f32 %v3826, %v3830
        %vm3832 = vweird.f32 %v3795
        %vm3833 = vweird.f32 %v3826
        %vm3834 = vmor %vm3832, %vm3833
        %v3835 = vsel %vm3834, %v3826, %v3831
        %v3836 = vmul.f32 %v3760, %v3805
        %v3837 = vmul.f32 %v3761, %v3805
        %v3838 = vmul.f32 %v3762, %v3815
        %v3839 = vmul.f32 %v3763, %v3815
        %v3840 = vmul.f32 %v3764, %v3825
        %v3841 = vmul.f32 %v3765, %v3825
        %v3842 = vmul.f32 %v3766, %v3835
        %v3843 = vmul.f32 %v3767, %v3835
        %v3844 = vld [vmem:[#allocation11] sm:$0x3]
        %v3846 = vperm.slane %v3844, 0
        %v3847 = vperm.slane %v3844, 1
        %v3850 = vmul.f32 %v3836, %v3846
        %v3851 = vmul.f32 %v3837, %v3847
        %v3852 = vmul.f32 %v3838, %v3846
        %v3853 = vmul.f32 %v3839, %v3847
        %v3854 = vmul.f32 %v3840, %v3846
        %v3855 = vmul.f32 %v3841, %v3847
        %v3856 = vmul.f32 %v3842, %v3846
        %v3857 = vmul.f32 %v3843, %v3847
        %v3858 = vld [vmem:[#allocation13] sm:$0x3]
        %v3860 = vperm.slane %v3858, 0
        %v3861 = vperm.slane %v3858, 1
        %v3864 = vadd.f32 %v3850, %v3860
        %v3865 = vadd.f32 %v3851, %v3861
        %v3866 = vadd.f32 %v3852, %v3860
        %v3867 = vadd.f32 %v3853, %v3861
        %v3868 = vadd.f32 %v3854, %v3860
        %v3869 = vadd.f32 %v3855, %v3861
        %v3870 = vadd.f32 %v3856, %v3860
        %v3871 = vadd.f32 %v3857, %v3861
        %3872 = vst [vmem:[%s390] sm:$0xff] %v3864
        %3873 = vst [vmem:[%s390 + $0x8] sm:$0xff] %v3865
        %3874 = vst [vmem:[%s390 + $0x10] sm:$0xff] %v3866
        %3875 = vst [vmem:[%s390 + $0x18] sm:$0xff] %v3867
        %3876 = vst [vmem:[%s390 + $0x20] sm:$0xff] %v3868
        %3877 = vst [vmem:[%s390 + $0x28] sm:$0xff] %v3869
        %3878 = vst [vmem:[%s390 + $0x30] sm:$0xff] %v3870
        %3879 = vst [vmem:[%s390 + $0x38] sm:$0xff] %v3871
        %s3880 = sand.u32 %s187, 1
        %s3881 = scalar_lea.sflag [#allocation4], %s3880
        %s3882 = sand.u32 %s187, 1
        %s3883 = smul.addr %s3882, 64
        %s3884 = scalar_lea.vmem [#allocation14], %s3883
        // Predicated region
        $region77: #{tpu_custom_call.1} parent=47 // pred_check
          %p3885 = pneg %p197
        $region78: #{tpu_custom_call.1} parent=47 // pred_check_branch
          %3887 = sbr.rel (%p3885) target = $region80
        $region79: #{tpu_custom_call.1} parent=47 // pred_region
          %s3888 = smul.u32 4, %s27
          %3890 = vsyncadd %s3881, 0
          %s3891 = smul.addr %s3888, 2
          %s3892 = smul.addr %s3891, 8
          %s3893 = scalar_lea.hbm %s7, %s3892
          %s3894 = sshll.u32 %s3884, 4
          %s3895 = int_to_ptr.vmem [resolvable:$true] %s3894
          %s3896 = sshll.u32 %s3893, 4
          %s3897 = int_to_ptr.hbm [resolvable:$true] %s3896
          %3902 = dma.vmem_to_hbm [thread:$0]  %s3895, 1024, %s3897, %s3881, 256, 256, 16
        $region80: #{tpu_custom_call.1} parent=47 // pred_fallthru
          _
      $region48: #{tpu_custom_call.1} parent=5 // pred_fallthru
        _
      %p3903 = scmp.le.s32.totalorder 2, %s22
      // Predicated region
      $region81: #{tpu_custom_call.1} parent=5 // pred_check
        %p3904 = pneg %p3903
      $region82: #{tpu_custom_call.1} parent=5 // pred_check_branch
        %3906 = sbr.rel (%p3904) target = $region84
      $region83: #{tpu_custom_call.1} parent=5 // pred_region
        %s3907 = ssub.s32 %s22, 2
        // Predicated region
        $region85: #{tpu_custom_call.1} parent=83 // pred_check
          %p3908 = pneg %p203
        $region86: #{tpu_custom_call.1} parent=83 // pred_check_branch
          %3910 = sbr.rel (%p3908) target = $region88
        $region87: #{tpu_custom_call.1} parent=83 // pred_region
          %s3911 = sand.u32 %s188, 1
          %s3912 = scalar_lea.sflag [#allocation4], %s3911
          %s3913 = sand.u32 %s188, 1
          %s3914 = smul.addr %s3913, 64
          %s3915 = scalar_lea.vmem [#allocation14], %s3914
          %3917 = dma.done %s3912, 1024
        $region88: #{tpu_custom_call.1} parent=83 // pred_fallthru
          _
      $region84: #{tpu_custom_call.1} parent=5 // pred_fallthru
        _
    $region6: #{tpu_custom_call.1} parent=1 // loop_footer
      %s26 = sadd.s32 1, %s22
    $region7: #{tpu_custom_call.1} parent=1 // loop_footer_branch
      %21 = sbr.rel target = $region3
    $region8: #{tpu_custom_call.1} parent=1 // loop_exit
      _
    %3918 = vsyncpa [#allocation3], 1
    %s3919 = scalar_lea.sflag [#allocation3], 1
    %3920 = vsyncpa %s3919, 1
    %3921 = vsyncpa [#allocation6], 1
    %3922 = vsyncpa [#allocation9], 1
    %3923 = vsyncpa [#allocation12], 1
    %3924 = vsyncpa [#allocation4], 1
    %s3925 = scalar_lea.sflag [#allocation4], 1
    %3926 = vsyncpa %s3925, 1

</llo_original>
